<compile_context>
chip_gen: v7x
topology: tpu7x:2x2x1
jax: 0.10.0
libtpu: 0.0.40
codegen_flags: <defaults>
</compile_context>

<pallas_src>
import math

import jax
import jax.numpy as jnp
import numpy as np
from jax import lax
from jax.experimental import pallas as pl
from jax.experimental.pallas import tpu as pltpu

# hp_LM (small, deterministic, consistent with the module's __init__)
NUM_CLASSES = 16   # hp_LM.num_classes
HIDDEN      = 32   # hp_LM.num_hidden_LM
NUM_LAYERS  = 4    # nn.LSTM(num_layers=4)
BATCH       = 2
SEQ         = 8

BP  = ((BATCH + 7) // 8) * 8        # sublane-padded batch (8)
TBP = SEQ * BP                      # time-major padded rows (64)
GH  = NUM_LAYERS * HIDDEN           # packed hidden width, all layers (128)
NG  = 4 * GH                        # packed gate width, i|f|g|o groups (512)
CP  = 128                           # lane-padded class dim

MXU_DTYPE = jnp.float32             # set to jnp.bfloat16 on v6e/v7x (see TODO)


def _mdot(a, b):
    """MXU matmul with f32 accumulation (operand dtype switchable)."""
    return jnp.dot(a.astype(MXU_DTYPE), b.astype(MXU_DTYPE),
                   preferred_element_type=jnp.float32)


def lstm_wavefront_kernel(xemb_ref, wrec_ref, wih0_ref, bias_ref,
                          wout_ref, bout_ref, out_ref):
    # hoisted: bias broadcast and the per-lane layer-id used for masking
    bias = jnp.broadcast_to(bias_ref[...], (BP, NG))                # [BP, NG]
    col_id = lax.broadcasted_iota(jnp.int32, (BP, GH), 1)           # [BP, GH]

    h_pack = jnp.zeros((BP, GH), jnp.float32)   # [h0 | h1 | h2 | h3]
    c_pack = jnp.zeros((BP, GH), jnp.float32)
    outs = [None] * SEQ

    for w in range(NUM_LAYERS + SEQ - 1):       # 11 wavefront steps, unrolled
        # One MXU push: block-diag W_hh (recurrence, all layers) + block-
        # super-diag W_ih (layer l-1 output -> layer l input), gate columns
        # pre-permuted into lane-contiguous i|f|g|o groups.
        gates = bias + _mdot(h_pack, wrec_ref[...])                 # [BP, NG]
        if w < SEQ:                              # layer 0 consumes token t = w
            gates = gates + _mdot(xemb_ref[w * BP:(w + 1) * BP, :],
                                  wih0_ref[...])                    # off chain

        i_f = jax.nn.sigmoid(gates[:, :2 * GH])                     # i & f
        o_g = jax.nn.sigmoid(gates[:, 3 * GH:])                     # o
        g_g = jnp.tanh(gates[:, 2 * GH:3 * GH])                     # g only
        c_new = i_f[:, GH:] * c_pack + i_f[:, :GH] * g_g            # 128-lane
        h_new = o_g * jnp.tanh(c_new)

        # Only layers with a valid (layer, t = w - layer) cell may update.
        lo = max(0, w - SEQ + 1)
        hi = min(NUM_LAYERS - 1, w)
        m = None
        if lo > 0:
            m = col_id >= lo * HIDDEN
        if hi < NUM_LAYERS - 1:
            m2 = col_id < (hi + 1) * HIDDEN
            m = m2 if m is None else (m & m2)
        if m is None:                            # all 4 layers active
            c_pack, h_pack = c_new, h_new
        else:
            c_pack = jnp.where(m, c_new, c_pack)
            h_pack = jnp.where(m, h_new, h_pack)

        t_top = w - (NUM_LAYERS - 1)             # time index of the top layer
        if 0 <= t_top < SEQ:
            outs[t_top] = h_pack                 # wout_pad selects h3 columns

    # Final projection straight from register values, lane-dense output.
    h_all = jnp.concatenate(outs, axis=0)                           # [TBP, GH]
    out_ref[...] = _mdot(h_all, wout_ref[...]) + bout_ref[...]      # [TBP, CP]


@jax.jit
def model_lm_forward(tokens, kparams):
    """tokens [B, T] int32 -> logits [B, T, C] (batch_first, eval semantics)."""
    emb, wrec, wih0_p, bias_p, wout_p, bout_p = kparams
    B, T = tokens.shape

    # Tiny token prep + embedding gather (a few KiB), fused by XLA under jit.
    tok_tm = jnp.transpose(tokens).astype(jnp.int32)                # [T, B]
    tok_tm = jnp.pad(tok_tm, ((0, 0), (0, BP - B)))                 # [T, BP]
    x_emb = jnp.take(emb, tok_tm.reshape(TBP), axis=0)              # [TBP, H]

    vmem = pl.BlockSpec(memory_space=pltpu.MemorySpace.VMEM)
    out = pl.pallas_call(
        lstm_wavefront_kernel,
        out_shape=jax.ShapeDtypeStruct((TBP, CP), jnp.float32),
        in_specs=[vmem] * 6,
        out_specs=vmem,
    )(x_emb, wrec, wih0_p, bias_p, wout_p, bout_p)

    logits = out.reshape(T, BP, CP)[:, :B, :NUM_CLASSES]            # drop pad
    return jnp.transpose(logits, (1, 0, 2))                         # [B, T, C]


def ref_forward(tokens, params):
    """Pure-JAX reference mirroring torch.nn.LSTM (eval) semantics."""
    emb, wih_t, whh_t, b, wout, bout = params
    x = jnp.take(emb, tokens, axis=0)                               # [B, T, H]
    B, T, H = x.shape
    for layer in range(NUM_LAYERS):
        h = jnp.zeros((B, H), jnp.float32)
        c = jnp.zeros((B, H), jnp.float32)
        outs = []
        for t in range(T):
            gates = x[:, t, :] @ wih_t[layer] + h @ whh_t[layer] + b[layer]
            i = jax.nn.sigmoid(gates[:, :H])
            f = jax.nn.sigmoid(gates[:, H:2 * H])
            g = jnp.tanh(gates[:, 2 * H:3 * H])
            o = jax.nn.sigmoid(gates[:, 3 * H:])
            c = f * c + i * g
            h = o * jnp.tanh(c)
            outs.append(h)
        x = jnp.stack(outs, axis=1)
    return x @ wout + bout


def init_params(key):
    """Deterministic init matching the PyTorch module's parameter shapes."""
    H, C, L = HIDDEN, NUM_CLASSES, NUM_LAYERS
    ks = jax.random.split(key, 8)
    bound = 1.0 / math.sqrt(H)

    emb = jax.random.normal(ks[0], (C, H), jnp.float32)             # nn.Embedding
    # nn.LSTM weights stored pre-transposed as [L, in, 4H] so the kernel does
    # x @ W; gate order (i, f, g, o) matches PyTorch.
    wih_t = jax.random.uniform(ks[1], (L, H, 4 * H), jnp.float32, -bound, bound)
    whh_t = jax.random.uniform(ks[2], (L, H, 4 * H), jnp.float32, -bound, bound)
    b_ih = jax.random.uniform(ks[3], (L, 4 * H), jnp.float32, -bound, bound)
    b_hh = jax.random.uniform(ks[4], (L, 4 * H), jnp.float32, -bound, bound)
    b = b_ih + b_hh
    # nn.Linear(H, C): stored transposed [H, C].
    wout = jax.random.uniform(ks[5], (H, C), jnp.float32, -bound, bound)
    bout = jax.random.uniform(ks[6], (1, C), jnp.float32, -bound, bound)
    return emb, wih_t, whh_t, b, wout, bout


def prepare_kernel_params(params):
    """One-time offline layout prep for the wavefront kernel.

    Builds:
      wrec   [GH, NG]  block-diag W_hh + block-super-diag W_ih (layers 1..3),
                       gate columns permuted to lane-contiguous i|f|g|o groups
      wih0_p [H, NG]   layer-0 input->gate weights in the same packed layout
      bias_p [1, NG]   combined b_ih + b_hh per layer, packed layout
      wout_p [GH, CP]  output projection reading only the top layer's columns
      bout_p [1, CP]   lane-padded output bias
    """
    emb, wih_t, whh_t, b, wout, bout = params
    wih = np.asarray(wih_t); whh = np.asarray(whh_t)
    bnp = np.asarray(b); wo = np.asarray(wout); bo = np.asarray(bout)
    L, H = NUM_LAYERS, HIDDEN

    def gate_cols(layer):
        # destination column range of `layer` inside gate group q (i, f, g, o)
        return [(q * GH + layer * H, q * GH + (layer + 1) * H) for q in range(4)]

    wrec = np.zeros((GH, NG), np.float32)
    bias_p = np.zeros((1, NG), np.float32)
    for l in range(L):
        for q, (c0, c1) in enumerate(gate_cols(l)):
            wrec[l * H:(l + 1) * H, c0:c1] = whh[l][:, q * H:(q + 1) * H]
            if l >= 1:       # layer l-1 output feeds layer l input gates
                wrec[(l - 1) * H:l * H, c0:c1] = wih[l][:, q * H:(q + 1) * H]
            bias_p[0, c0:c1] = bnp[l][q * H:(q + 1) * H]

    wih0_p = np.zeros((H, NG), np.float32)
    for q, (c0, c1) in enumerate(gate_cols(0)):
        wih0_p[:, c0:c1] = wih[0][:, q * H:(q + 1) * H]

    wout_p = np.zeros((GH, CP), np.float32)
    wout_p[(L - 1) * H:L * H, :NUM_CLASSES] = wo
    bout_p = np.zeros((1, CP), np.float32)
    bout_p[0, :NUM_CLASSES] = bo[0]

    return (emb, jnp.asarray(wrec), jnp.asarray(wih0_p), jnp.asarray(bias_p),
            jnp.asarray(wout_p), jnp.asarray(bout_p))


if __name__ == "__main__":
    key = jax.random.PRNGKey(0)
    pkey, tkey = jax.random.split(key)
    params = init_params(pkey)
    kparams = prepare_kernel_params(params)
    tokens = jax.random.randint(tkey, (BATCH, SEQ), 0, NUM_CLASSES, jnp.int32)

    logits = jax.block_until_ready(model_lm_forward(tokens, kparams))
    assert logits.shape == (BATCH, SEQ, NUM_CLASSES), logits.shape

    ref = jax.block_until_ready(ref_forward(tokens, params))
    np.testing.assert_allclose(np.asarray(logits), np.asarray(ref),
                               rtol=1e-4, atol=1e-4)
    print("KERNEL_OK")
</pallas_src>

<mosaic_0001>
module attributes {stable_mosaic.version = 11 : i64} {
  func.func @lstm_wavefront_kernel(%arg0: memref<64x32xf32, #tpu.memory_space<vmem>>, %arg1: memref<128x512xf32, #tpu.memory_space<vmem>>, %arg2: memref<32x512xf32, #tpu.memory_space<vmem>>, %arg3: memref<1x512xf32, #tpu.memory_space<vmem>>, %arg4: memref<128x128xf32, #tpu.memory_space<vmem>>, %arg5: memref<1x128xf32, #tpu.memory_space<vmem>>, %arg6: memref<64x128xf32, #tpu.memory_space<vmem>>) attributes {dimension_semantics = [], scalar_prefetch = 0 : i64, scratch_operands = 0 : i64, tpu.core_type = #tpu.core_type<tc>} {
    %c0 = arith.constant 0 : index
    %c0_0 = arith.constant 0 : index
    %0 = vector.load %arg3[%c0, %c0_0] : memref<1x512xf32, #tpu.memory_space<vmem>>, vector<1x512xf32>
    %1 = vector.shape_cast %0 : vector<1x512xf32> to vector<1x512xf32>
    %2 = vector.broadcast %1 : vector<1x512xf32> to vector<8x512xf32>
    %3 = tpu.iota {dimensions = array<i32: 1>} : vector<8x128xi32>
    %cst = arith.constant 0.000000e+00 : f32
    %4 = vector.broadcast %cst : f32 to vector<8x128xf32>
    %cst_1 = arith.constant 0.000000e+00 : f32
    %5 = vector.broadcast %cst_1 : f32 to vector<8x128xf32>
    %c0_2 = arith.constant 0 : index
    %c0_3 = arith.constant 0 : index
    %6 = vector.load %arg1[%c0_2, %c0_3] : memref<128x512xf32, #tpu.memory_space<vmem>>, vector<128x512xf32>
    %cst_4 = arith.constant dense<0.000000e+00> : vector<8x512xf32>
    %7 = tpu.matmul %4, %6, %cst_4 {dimension_numbers = #tpu.dot_dimension_numbers<[1], [0], [0], [1], [0, 0, 1, 1], [], []>} : vector<8x128xf32>, vector<128x512xf32>, vector<8x512xf32> -> vector<8x512xf32>
    %8 = arith.addf %2, %7 : vector<8x512xf32>
    %c0_5 = arith.constant 0 : index
    %c0_6 = arith.constant 0 : index
    %9 = vector.load %arg0[%c0_5, %c0_6] : memref<64x32xf32, #tpu.memory_space<vmem>>, vector<8x32xf32>
    %c0_7 = arith.constant 0 : index
    %c0_8 = arith.constant 0 : index
    %10 = vector.load %arg2[%c0_7, %c0_8] : memref<32x512xf32, #tpu.memory_space<vmem>>, vector<32x512xf32>
    %cst_9 = arith.constant dense<0.000000e+00> : vector<8x512xf32>
    %11 = tpu.matmul %9, %10, %cst_9 {dimension_numbers = #tpu.dot_dimension_numbers<[1], [0], [0], [1], [0, 0, 1, 1], [], []>} : vector<8x32xf32>, vector<32x512xf32>, vector<8x512xf32> -> vector<8x512xf32>
    %12 = arith.addf %8, %11 : vector<8x512xf32>
    %13 = vector.extract_strided_slice %12 {offsets = [0, 0], sizes = [8, 256], strides = [1, 1]} : vector<8x512xf32> to vector<8x256xf32>
    %14 = arith.negf %13 : vector<8x256xf32>
    %15 = math.exp %14 : vector<8x256xf32>
    %cst_10 = arith.constant 1.000000e+00 : f32
    %16 = vector.broadcast %cst_10 : f32 to vector<8x256xf32>
    %17 = arith.addf %16, %15 : vector<8x256xf32>
    %18 = arith.divf %16, %17 : vector<8x256xf32>
    %19 = vector.extract_strided_slice %12 {offsets = [0, 384], sizes = [8, 128], strides = [1, 1]} : vector<8x512xf32> to vector<8x128xf32>
    %20 = arith.negf %19 : vector<8x128xf32>
    %21 = math.exp %20 : vector<8x128xf32>
    %cst_11 = arith.constant 1.000000e+00 : f32
    %22 = vector.broadcast %cst_11 : f32 to vector<8x128xf32>
    %23 = arith.addf %22, %21 : vector<8x128xf32>
    %24 = arith.divf %22, %23 : vector<8x128xf32>
    %25 = vector.extract_strided_slice %12 {offsets = [0, 256], sizes = [8, 128], strides = [1, 1]} : vector<8x512xf32> to vector<8x128xf32>
    %26 = math.tanh %25 : vector<8x128xf32>
    %27 = vector.extract_strided_slice %18 {offsets = [0, 128], sizes = [8, 128], strides = [1, 1]} : vector<8x256xf32> to vector<8x128xf32>
    %28 = arith.mulf %27, %5 : vector<8x128xf32>
    %29 = vector.extract_strided_slice %18 {offsets = [0, 0], sizes = [8, 128], strides = [1, 1]} : vector<8x256xf32> to vector<8x128xf32>
    %30 = arith.mulf %29, %26 : vector<8x128xf32>
    %31 = arith.addf %28, %30 : vector<8x128xf32>
    %32 = math.tanh %31 : vector<8x128xf32>
    %33 = arith.mulf %24, %32 : vector<8x128xf32>
    %c32_i32 = arith.constant 32 : i32
    %34 = vector.broadcast %c32_i32 : i32 to vector<8x128xi32>
    %35 = arith.cmpi slt, %3, %34 : vector<8x128xi32>
    %36 = arith.select %35, %31, %5 : vector<8x128xi1>, vector<8x128xf32>
    %37 = arith.select %35, %33, %4 : vector<8x128xi1>, vector<8x128xf32>
    %c0_12 = arith.constant 0 : index
    %c0_13 = arith.constant 0 : index
    %38 = vector.load %arg1[%c0_12, %c0_13] : memref<128x512xf32, #tpu.memory_space<vmem>>, vector<128x512xf32>
    %cst_14 = arith.constant dense<0.000000e+00> : vector<8x512xf32>
    %39 = tpu.matmul %37, %38, %cst_14 {dimension_numbers = #tpu.dot_dimension_numbers<[1], [0], [0], [1], [0, 0, 1, 1], [], []>} : vector<8x128xf32>, vector<128x512xf32>, vector<8x512xf32> -> vector<8x512xf32>
    %40 = arith.addf %2, %39 : vector<8x512xf32>
    %c8 = arith.constant 8 : index
    %c0_15 = arith.constant 0 : index
    %41 = vector.load %arg0[%c8, %c0_15] : memref<64x32xf32, #tpu.memory_space<vmem>>, vector<8x32xf32>
    %c0_16 = arith.constant 0 : index
    %c0_17 = arith.constant 0 : index
    %42 = vector.load %arg2[%c0_16, %c0_17] : memref<32x512xf32, #tpu.memory_space<vmem>>, vector<32x512xf32>
    %cst_18 = arith.constant dense<0.000000e+00> : vector<8x512xf32>
    %43 = tpu.matmul %41, %42, %cst_18 {dimension_numbers = #tpu.dot_dimension_numbers<[1], [0], [0], [1], [0, 0, 1, 1], [], []>} : vector<8x32xf32>, vector<32x512xf32>, vector<8x512xf32> -> vector<8x512xf32>
    %44 = arith.addf %40, %43 : vector<8x512xf32>
    %45 = vector.extract_strided_slice %44 {offsets = [0, 0], sizes = [8, 256], strides = [1, 1]} : vector<8x512xf32> to vector<8x256xf32>
    %46 = arith.negf %45 : vector<8x256xf32>
    %47 = math.exp %46 : vector<8x256xf32>
    %cst_19 = arith.constant 1.000000e+00 : f32
    %48 = vector.broadcast %cst_19 : f32 to vector<8x256xf32>
    %49 = arith.addf %48, %47 : vector<8x256xf32>
    %50 = arith.divf %48, %49 : vector<8x256xf32>
    %51 = vector.extract_strided_slice %44 {offsets = [0, 384], sizes = [8, 128], strides = [1, 1]} : vector<8x512xf32> to vector<8x128xf32>
    %52 = arith.negf %51 : vector<8x128xf32>
    %53 = math.exp %52 : vector<8x128xf32>
    %cst_20 = arith.constant 1.000000e+00 : f32
    %54 = vector.broadcast %cst_20 : f32 to vector<8x128xf32>
    %55 = arith.addf %54, %53 : vector<8x128xf32>
    %56 = arith.divf %54, %55 : vector<8x128xf32>
    %57 = vector.extract_strided_slice %44 {offsets = [0, 256], sizes = [8, 128], strides = [1, 1]} : vector<8x512xf32> to vector<8x128xf32>
    %58 = math.tanh %57 : vector<8x128xf32>
    %59 = vector.extract_strided_slice %50 {offsets = [0, 128], sizes = [8, 128], strides = [1, 1]} : vector<8x256xf32> to vector<8x128xf32>
    %60 = arith.mulf %59, %36 : vector<8x128xf32>
    %61 = vector.extract_strided_slice %50 {offsets = [0, 0], sizes = [8, 128], strides = [1, 1]} : vector<8x256xf32> to vector<8x128xf32>
    %62 = arith.mulf %61, %58 : vector<8x128xf32>
    %63 = arith.addf %60, %62 : vector<8x128xf32>
    %64 = math.tanh %63 : vector<8x128xf32>
    %65 = arith.mulf %56, %64 : vector<8x128xf32>
    %c64_i32 = arith.constant 64 : i32
    %66 = vector.broadcast %c64_i32 : i32 to vector<8x128xi32>
    %67 = arith.cmpi slt, %3, %66 : vector<8x128xi32>
    %68 = arith.select %67, %63, %36 : vector<8x128xi1>, vector<8x128xf32>
    %69 = arith.select %67, %65, %37 : vector<8x128xi1>, vector<8x128xf32>
    %c0_21 = arith.constant 0 : index
    %c0_22 = arith.constant 0 : index
    %70 = vector.load %arg1[%c0_21, %c0_22] : memref<128x512xf32, #tpu.memory_space<vmem>>, vector<128x512xf32>
    %cst_23 = arith.constant dense<0.000000e+00> : vector<8x512xf32>
    %71 = tpu.matmul %69, %70, %cst_23 {dimension_numbers = #tpu.dot_dimension_numbers<[1], [0], [0], [1], [0, 0, 1, 1], [], []>} : vector<8x128xf32>, vector<128x512xf32>, vector<8x512xf32> -> vector<8x512xf32>
    %72 = arith.addf %2, %71 : vector<8x512xf32>
    %c16 = arith.constant 16 : index
    %c0_24 = arith.constant 0 : index
    %73 = vector.load %arg0[%c16, %c0_24] : memref<64x32xf32, #tpu.memory_space<vmem>>, vector<8x32xf32>
    %c0_25 = arith.constant 0 : index
    %c0_26 = arith.constant 0 : index
    %74 = vector.load %arg2[%c0_25, %c0_26] : memref<32x512xf32, #tpu.memory_space<vmem>>, vector<32x512xf32>
    %cst_27 = arith.constant dense<0.000000e+00> : vector<8x512xf32>
    %75 = tpu.matmul %73, %74, %cst_27 {dimension_numbers = #tpu.dot_dimension_numbers<[1], [0], [0], [1], [0, 0, 1, 1], [], []>} : vector<8x32xf32>, vector<32x512xf32>, vector<8x512xf32> -> vector<8x512xf32>
    %76 = arith.addf %72, %75 : vector<8x512xf32>
    %77 = vector.extract_strided_slice %76 {offsets = [0, 0], sizes = [8, 256], strides = [1, 1]} : vector<8x512xf32> to vector<8x256xf32>
    %78 = arith.negf %77 : vector<8x256xf32>
    %79 = math.exp %78 : vector<8x256xf32>
    %cst_28 = arith.constant 1.000000e+00 : f32
    %80 = vector.broadcast %cst_28 : f32 to vector<8x256xf32>
    %81 = arith.addf %80, %79 : vector<8x256xf32>
    %82 = arith.divf %80, %81 : vector<8x256xf32>
    %83 = vector.extract_strided_slice %76 {offsets = [0, 384], sizes = [8, 128], strides = [1, 1]} : vector<8x512xf32> to vector<8x128xf32>
    %84 = arith.negf %83 : vector<8x128xf32>
    %85 = math.exp %84 : vector<8x128xf32>
    %cst_29 = arith.constant 1.000000e+00 : f32
    %86 = vector.broadcast %cst_29 : f32 to vector<8x128xf32>
    %87 = arith.addf %86, %85 : vector<8x128xf32>
    %88 = arith.divf %86, %87 : vector<8x128xf32>
    %89 = vector.extract_strided_slice %76 {offsets = [0, 256], sizes = [8, 128], strides = [1, 1]} : vector<8x512xf32> to vector<8x128xf32>
    %90 = math.tanh %89 : vector<8x128xf32>
    %91 = vector.extract_strided_slice %82 {offsets = [0, 128], sizes = [8, 128], strides = [1, 1]} : vector<8x256xf32> to vector<8x128xf32>
    %92 = arith.mulf %91, %68 : vector<8x128xf32>
    %93 = vector.extract_strided_slice %82 {offsets = [0, 0], sizes = [8, 128], strides = [1, 1]} : vector<8x256xf32> to vector<8x128xf32>
    %94 = arith.mulf %93, %90 : vector<8x128xf32>
    %95 = arith.addf %92, %94 : vector<8x128xf32>
    %96 = math.tanh %95 : vector<8x128xf32>
    %97 = arith.mulf %88, %96 : vector<8x128xf32>
    %c96_i32 = arith.constant 96 : i32
    %98 = vector.broadcast %c96_i32 : i32 to vector<8x128xi32>
    %99 = arith.cmpi slt, %3, %98 : vector<8x128xi32>
    %100 = arith.select %99, %95, %68 : vector<8x128xi1>, vector<8x128xf32>
    %101 = arith.select %99, %97, %69 : vector<8x128xi1>, vector<8x128xf32>
    %c0_30 = arith.constant 0 : index
    %c0_31 = arith.constant 0 : index
    %102 = vector.load %arg1[%c0_30, %c0_31] : memref<128x512xf32, #tpu.memory_space<vmem>>, vector<128x512xf32>
    %cst_32 = arith.constant dense<0.000000e+00> : vector<8x512xf32>
    %103 = tpu.matmul %101, %102, %cst_32 {dimension_numbers = #tpu.dot_dimension_numbers<[1], [0], [0], [1], [0, 0, 1, 1], [], []>} : vector<8x128xf32>, vector<128x512xf32>, vector<8x512xf32> -> vector<8x512xf32>
    %104 = arith.addf %2, %103 : vector<8x512xf32>
    %c24 = arith.constant 24 : index
    %c0_33 = arith.constant 0 : index
    %105 = vector.load %arg0[%c24, %c0_33] : memref<64x32xf32, #tpu.memory_space<vmem>>, vector<8x32xf32>
    %c0_34 = arith.constant 0 : index
    %c0_35 = arith.constant 0 : index
    %106 = vector.load %arg2[%c0_34, %c0_35] : memref<32x512xf32, #tpu.memory_space<vmem>>, vector<32x512xf32>
    %cst_36 = arith.constant dense<0.000000e+00> : vector<8x512xf32>
    %107 = tpu.matmul %105, %106, %cst_36 {dimension_numbers = #tpu.dot_dimension_numbers<[1], [0], [0], [1], [0, 0, 1, 1], [], []>} : vector<8x32xf32>, vector<32x512xf32>, vector<8x512xf32> -> vector<8x512xf32>
    %108 = arith.addf %104, %107 : vector<8x512xf32>
    %109 = vector.extract_strided_slice %108 {offsets = [0, 0], sizes = [8, 256], strides = [1, 1]} : vector<8x512xf32> to vector<8x256xf32>
    %110 = arith.negf %109 : vector<8x256xf32>
    %111 = math.exp %110 : vector<8x256xf32>
    %cst_37 = arith.constant 1.000000e+00 : f32
    %112 = vector.broadcast %cst_37 : f32 to vector<8x256xf32>
    %113 = arith.addf %112, %111 : vector<8x256xf32>
    %114 = arith.divf %112, %113 : vector<8x256xf32>
    %115 = vector.extract_strided_slice %108 {offsets = [0, 384], sizes = [8, 128], strides = [1, 1]} : vector<8x512xf32> to vector<8x128xf32>
    %116 = arith.negf %115 : vector<8x128xf32>
    %117 = math.exp %116 : vector<8x128xf32>
    %cst_38 = arith.constant 1.000000e+00 : f32
    %118 = vector.broadcast %cst_38 : f32 to vector<8x128xf32>
    %119 = arith.addf %118, %117 : vector<8x128xf32>
    %120 = arith.divf %118, %119 : vector<8x128xf32>
    %121 = vector.extract_strided_slice %108 {offsets = [0, 256], sizes = [8, 128], strides = [1, 1]} : vector<8x512xf32> to vector<8x128xf32>
    %122 = math.tanh %121 : vector<8x128xf32>
    %123 = vector.extract_strided_slice %114 {offsets = [0, 128], sizes = [8, 128], strides = [1, 1]} : vector<8x256xf32> to vector<8x128xf32>
    %124 = arith.mulf %123, %100 : vector<8x128xf32>
    %125 = vector.extract_strided_slice %114 {offsets = [0, 0], sizes = [8, 128], strides = [1, 1]} : vector<8x256xf32> to vector<8x128xf32>
    %126 = arith.mulf %125, %122 : vector<8x128xf32>
    %127 = arith.addf %124, %126 : vector<8x128xf32>
    %128 = math.tanh %127 : vector<8x128xf32>
    %129 = arith.mulf %120, %128 : vector<8x128xf32>
    %c0_39 = arith.constant 0 : index
    %c0_40 = arith.constant 0 : index
    %130 = vector.load %arg1[%c0_39, %c0_40] : memref<128x512xf32, #tpu.memory_space<vmem>>, vector<128x512xf32>
    %cst_41 = arith.constant dense<0.000000e+00> : vector<8x512xf32>
    %131 = tpu.matmul %129, %130, %cst_41 {dimension_numbers = #tpu.dot_dimension_numbers<[1], [0], [0], [1], [0, 0, 1, 1], [], []>} : vector<8x128xf32>, vector<128x512xf32>, vector<8x512xf32> -> vector<8x512xf32>
    %132 = arith.addf %2, %131 : vector<8x512xf32>
    %c32 = arith.constant 32 : index
    %c0_42 = arith.constant 0 : index
    %133 = vector.load %arg0[%c32, %c0_42] : memref<64x32xf32, #tpu.memory_space<vmem>>, vector<8x32xf32>
    %c0_43 = arith.constant 0 : index
    %c0_44 = arith.constant 0 : index
    %134 = vector.load %arg2[%c0_43, %c0_44] : memref<32x512xf32, #tpu.memory_space<vmem>>, vector<32x512xf32>
    %cst_45 = arith.constant dense<0.000000e+00> : vector<8x512xf32>
    %135 = tpu.matmul %133, %134, %cst_45 {dimension_numbers = #tpu.dot_dimension_numbers<[1], [0], [0], [1], [0, 0, 1, 1], [], []>} : vector<8x32xf32>, vector<32x512xf32>, vector<8x512xf32> -> vector<8x512xf32>
    %136 = arith.addf %132, %135 : vector<8x512xf32>
    %137 = vector.extract_strided_slice %136 {offsets = [0, 0], sizes = [8, 256], strides = [1, 1]} : vector<8x512xf32> to vector<8x256xf32>
    %138 = arith.negf %137 : vector<8x256xf32>
    %139 = math.exp %138 : vector<8x256xf32>
    %cst_46 = arith.constant 1.000000e+00 : f32
    %140 = vector.broadcast %cst_46 : f32 to vector<8x256xf32>
    %141 = arith.addf %140, %139 : vector<8x256xf32>
    %142 = arith.divf %140, %141 : vector<8x256xf32>
    %143 = vector.extract_strided_slice %136 {offsets = [0, 384], sizes = [8, 128], strides = [1, 1]} : vector<8x512xf32> to vector<8x128xf32>
    %144 = arith.negf %143 : vector<8x128xf32>
    %145 = math.exp %144 : vector<8x128xf32>
    %cst_47 = arith.constant 1.000000e+00 : f32
    %146 = vector.broadcast %cst_47 : f32 to vector<8x128xf32>
    %147 = arith.addf %146, %145 : vector<8x128xf32>
    %148 = arith.divf %146, %147 : vector<8x128xf32>
    %149 = vector.extract_strided_slice %136 {offsets = [0, 256], sizes = [8, 128], strides = [1, 1]} : vector<8x512xf32> to vector<8x128xf32>
    %150 = math.tanh %149 : vector<8x128xf32>
    %151 = vector.extract_strided_slice %142 {offsets = [0, 128], sizes = [8, 128], strides = [1, 1]} : vector<8x256xf32> to vector<8x128xf32>
    %152 = arith.mulf %151, %127 : vector<8x128xf32>
    %153 = vector.extract_strided_slice %142 {offsets = [0, 0], sizes = [8, 128], strides = [1, 1]} : vector<8x256xf32> to vector<8x128xf32>
    %154 = arith.mulf %153, %150 : vector<8x128xf32>
    %155 = arith.addf %152, %154 : vector<8x128xf32>
    %156 = math.tanh %155 : vector<8x128xf32>
    %157 = arith.mulf %148, %156 : vector<8x128xf32>
    %c0_48 = arith.constant 0 : index
    %c0_49 = arith.constant 0 : index
    %158 = vector.load %arg1[%c0_48, %c0_49] : memref<128x512xf32, #tpu.memory_space<vmem>>, vector<128x512xf32>
    %cst_50 = arith.constant dense<0.000000e+00> : vector<8x512xf32>
    %159 = tpu.matmul %157, %158, %cst_50 {dimension_numbers = #tpu.dot_dimension_numbers<[1], [0], [0], [1], [0, 0, 1, 1], [], []>} : vector<8x128xf32>, vector<128x512xf32>, vector<8x512xf32> -> vector<8x512xf32>
    %160 = arith.addf %2, %159 : vector<8x512xf32>
    %c40 = arith.constant 40 : index
    %c0_51 = arith.constant 0 : index
    %161 = vector.load %arg0[%c40, %c0_51] : memref<64x32xf32, #tpu.memory_space<vmem>>, vector<8x32xf32>
    %c0_52 = arith.constant 0 : index
    %c0_53 = arith.constant 0 : index
    %162 = vector.load %arg2[%c0_52, %c0_53] : memref<32x512xf32, #tpu.memory_space<vmem>>, vector<32x512xf32>
    %cst_54 = arith.constant dense<0.000000e+00> : vector<8x512xf32>
    %163 = tpu.matmul %161, %162, %cst_54 {dimension_numbers = #tpu.dot_dimension_numbers<[1], [0], [0], [1], [0, 0, 1, 1], [], []>} : vector<8x32xf32>, vector<32x512xf32>, vector<8x512xf32> -> vector<8x512xf32>
    %164 = arith.addf %160, %163 : vector<8x512xf32>
    %165 = vector.extract_strided_slice %164 {offsets = [0, 0], sizes = [8, 256], strides = [1, 1]} : vector<8x512xf32> to vector<8x256xf32>
    %166 = arith.negf %165 : vector<8x256xf32>
    %167 = math.exp %166 : vector<8x256xf32>
    %cst_55 = arith.constant 1.000000e+00 : f32
    %168 = vector.broadcast %cst_55 : f32 to vector<8x256xf32>
    %169 = arith.addf %168, %167 : vector<8x256xf32>
    %170 = arith.divf %168, %169 : vector<8x256xf32>
    %171 = vector.extract_strided_slice %164 {offsets = [0, 384], sizes = [8, 128], strides = [1, 1]} : vector<8x512xf32> to vector<8x128xf32>
    %172 = arith.negf %171 : vector<8x128xf32>
    %173 = math.exp %172 : vector<8x128xf32>
    %cst_56 = arith.constant 1.000000e+00 : f32
    %174 = vector.broadcast %cst_56 : f32 to vector<8x128xf32>
    %175 = arith.addf %174, %173 : vector<8x128xf32>
    %176 = arith.divf %174, %175 : vector<8x128xf32>
    %177 = vector.extract_strided_slice %164 {offsets = [0, 256], sizes = [8, 128], strides = [1, 1]} : vector<8x512xf32> to vector<8x128xf32>
    %178 = math.tanh %177 : vector<8x128xf32>
    %179 = vector.extract_strided_slice %170 {offsets = [0, 128], sizes = [8, 128], strides = [1, 1]} : vector<8x256xf32> to vector<8x128xf32>
    %180 = arith.mulf %179, %155 : vector<8x128xf32>
    %181 = vector.extract_strided_slice %170 {offsets = [0, 0], sizes = [8, 128], strides = [1, 1]} : vector<8x256xf32> to vector<8x128xf32>
    %182 = arith.mulf %181, %178 : vector<8x128xf32>
    %183 = arith.addf %180, %182 : vector<8x128xf32>
    %184 = math.tanh %183 : vector<8x128xf32>
    %185 = arith.mulf %176, %184 : vector<8x128xf32>
    %c0_57 = arith.constant 0 : index
    %c0_58 = arith.constant 0 : index
    %186 = vector.load %arg1[%c0_57, %c0_58] : memref<128x512xf32, #tpu.memory_space<vmem>>, vector<128x512xf32>
    %cst_59 = arith.constant dense<0.000000e+00> : vector<8x512xf32>
    %187 = tpu.matmul %185, %186, %cst_59 {dimension_numbers = #tpu.dot_dimension_numbers<[1], [0], [0], [1], [0, 0, 1, 1], [], []>} : vector<8x128xf32>, vector<128x512xf32>, vector<8x512xf32> -> vector<8x512xf32>
    %188 = arith.addf %2, %187 : vector<8x512xf32>
    %c48 = arith.constant 48 : index
    %c0_60 = arith.constant 0 : index
    %189 = vector.load %arg0[%c48, %c0_60] : memref<64x32xf32, #tpu.memory_space<vmem>>, vector<8x32xf32>
    %c0_61 = arith.constant 0 : index
    %c0_62 = arith.constant 0 : index
    %190 = vector.load %arg2[%c0_61, %c0_62] : memref<32x512xf32, #tpu.memory_space<vmem>>, vector<32x512xf32>
    %cst_63 = arith.constant dense<0.000000e+00> : vector<8x512xf32>
    %191 = tpu.matmul %189, %190, %cst_63 {dimension_numbers = #tpu.dot_dimension_numbers<[1], [0], [0], [1], [0, 0, 1, 1], [], []>} : vector<8x32xf32>, vector<32x512xf32>, vector<8x512xf32> -> vector<8x512xf32>
    %192 = arith.addf %188, %191 : vector<8x512xf32>
    %193 = vector.extract_strided_slice %192 {offsets = [0, 0], sizes = [8, 256], strides = [1, 1]} : vector<8x512xf32> to vector<8x256xf32>
    %194 = arith.negf %193 : vector<8x256xf32>
    %195 = math.exp %194 : vector<8x256xf32>
    %cst_64 = arith.constant 1.000000e+00 : f32
    %196 = vector.broadcast %cst_64 : f32 to vector<8x256xf32>
    %197 = arith.addf %196, %195 : vector<8x256xf32>
    %198 = arith.divf %196, %197 : vector<8x256xf32>
    %199 = vector.extract_strided_slice %192 {offsets = [0, 384], sizes = [8, 128], strides = [1, 1]} : vector<8x512xf32> to vector<8x128xf32>
    %200 = arith.negf %199 : vector<8x128xf32>
    %201 = math.exp %200 : vector<8x128xf32>
    %cst_65 = arith.constant 1.000000e+00 : f32
    %202 = vector.broadcast %cst_65 : f32 to vector<8x128xf32>
    %203 = arith.addf %202, %201 : vector<8x128xf32>
    %204 = arith.divf %202, %203 : vector<8x128xf32>
    %205 = vector.extract_strided_slice %192 {offsets = [0, 256], sizes = [8, 128], strides = [1, 1]} : vector<8x512xf32> to vector<8x128xf32>
    %206 = math.tanh %205 : vector<8x128xf32>
    %207 = vector.extract_strided_slice %198 {offsets = [0, 128], sizes = [8, 128], strides = [1, 1]} : vector<8x256xf32> to vector<8x128xf32>
    %208 = arith.mulf %207, %183 : vector<8x128xf32>
    %209 = vector.extract_strided_slice %198 {offsets = [0, 0], sizes = [8, 128], strides = [1, 1]} : vector<8x256xf32> to vector<8x128xf32>
    %210 = arith.mulf %209, %206 : vector<8x128xf32>
    %211 = arith.addf %208, %210 : vector<8x128xf32>
    %212 = math.tanh %211 : vector<8x128xf32>
    %213 = arith.mulf %204, %212 : vector<8x128xf32>
    %c0_66 = arith.constant 0 : index
    %c0_67 = arith.constant 0 : index
    %214 = vector.load %arg1[%c0_66, %c0_67] : memref<128x512xf32, #tpu.memory_space<vmem>>, vector<128x512xf32>
    %cst_68 = arith.constant dense<0.000000e+00> : vector<8x512xf32>
    %215 = tpu.matmul %213, %214, %cst_68 {dimension_numbers = #tpu.dot_dimension_numbers<[1], [0], [0], [1], [0, 0, 1, 1], [], []>} : vector<8x128xf32>, vector<128x512xf32>, vector<8x512xf32> -> vector<8x512xf32>
    %216 = arith.addf %2, %215 : vector<8x512xf32>
    %c56 = arith.constant 56 : index
    %c0_69 = arith.constant 0 : index
    %217 = vector.load %arg0[%c56, %c0_69] : memref<64x32xf32, #tpu.memory_space<vmem>>, vector<8x32xf32>
    %c0_70 = arith.constant 0 : index
    %c0_71 = arith.constant 0 : index
    %218 = vector.load %arg2[%c0_70, %c0_71] : memref<32x512xf32, #tpu.memory_space<vmem>>, vector<32x512xf32>
    %cst_72 = arith.constant dense<0.000000e+00> : vector<8x512xf32>
    %219 = tpu.matmul %217, %218, %cst_72 {dimension_numbers = #tpu.dot_dimension_numbers<[1], [0], [0], [1], [0, 0, 1, 1], [], []>} : vector<8x32xf32>, vector<32x512xf32>, vector<8x512xf32> -> vector<8x512xf32>
    %220 = arith.addf %216, %219 : vector<8x512xf32>
    %221 = vector.extract_strided_slice %220 {offsets = [0, 0], sizes = [8, 256], strides = [1, 1]} : vector<8x512xf32> to vector<8x256xf32>
    %222 = arith.negf %221 : vector<8x256xf32>
    %223 = math.exp %222 : vector<8x256xf32>
    %cst_73 = arith.constant 1.000000e+00 : f32
    %224 = vector.broadcast %cst_73 : f32 to vector<8x256xf32>
    %225 = arith.addf %224, %223 : vector<8x256xf32>
    %226 = arith.divf %224, %225 : vector<8x256xf32>
    %227 = vector.extract_strided_slice %220 {offsets = [0, 384], sizes = [8, 128], strides = [1, 1]} : vector<8x512xf32> to vector<8x128xf32>
    %228 = arith.negf %227 : vector<8x128xf32>
    %229 = math.exp %228 : vector<8x128xf32>
    %cst_74 = arith.constant 1.000000e+00 : f32
    %230 = vector.broadcast %cst_74 : f32 to vector<8x128xf32>
    %231 = arith.addf %230, %229 : vector<8x128xf32>
    %232 = arith.divf %230, %231 : vector<8x128xf32>
    %233 = vector.extract_strided_slice %220 {offsets = [0, 256], sizes = [8, 128], strides = [1, 1]} : vector<8x512xf32> to vector<8x128xf32>
    %234 = math.tanh %233 : vector<8x128xf32>
    %235 = vector.extract_strided_slice %226 {offsets = [0, 128], sizes = [8, 128], strides = [1, 1]} : vector<8x256xf32> to vector<8x128xf32>
    %236 = arith.mulf %235, %211 : vector<8x128xf32>
    %237 = vector.extract_strided_slice %226 {offsets = [0, 0], sizes = [8, 128], strides = [1, 1]} : vector<8x256xf32> to vector<8x128xf32>
    %238 = arith.mulf %237, %234 : vector<8x128xf32>
    %239 = arith.addf %236, %238 : vector<8x128xf32>
    %240 = math.tanh %239 : vector<8x128xf32>
    %241 = arith.mulf %232, %240 : vector<8x128xf32>
    %c0_75 = arith.constant 0 : index
    %c0_76 = arith.constant 0 : index
    %242 = vector.load %arg1[%c0_75, %c0_76] : memref<128x512xf32, #tpu.memory_space<vmem>>, vector<128x512xf32>
    %cst_77 = arith.constant dense<0.000000e+00> : vector<8x512xf32>
    %243 = tpu.matmul %241, %242, %cst_77 {dimension_numbers = #tpu.dot_dimension_numbers<[1], [0], [0], [1], [0, 0, 1, 1], [], []>} : vector<8x128xf32>, vector<128x512xf32>, vector<8x512xf32> -> vector<8x512xf32>
    %244 = arith.addf %2, %243 : vector<8x512xf32>
    %245 = vector.extract_strided_slice %244 {offsets = [0, 0], sizes = [8, 256], strides = [1, 1]} : vector<8x512xf32> to vector<8x256xf32>
    %246 = arith.negf %245 : vector<8x256xf32>
    %247 = math.exp %246 : vector<8x256xf32>
    %cst_78 = arith.constant 1.000000e+00 : f32
    %248 = vector.broadcast %cst_78 : f32 to vector<8x256xf32>
    %249 = arith.addf %248, %247 : vector<8x256xf32>
    %250 = arith.divf %248, %249 : vector<8x256xf32>
    %251 = vector.extract_strided_slice %244 {offsets = [0, 384], sizes = [8, 128], strides = [1, 1]} : vector<8x512xf32> to vector<8x128xf32>
    %252 = arith.negf %251 : vector<8x128xf32>
    %253 = math.exp %252 : vector<8x128xf32>
    %cst_79 = arith.constant 1.000000e+00 : f32
    %254 = vector.broadcast %cst_79 : f32 to vector<8x128xf32>
    %255 = arith.addf %254, %253 : vector<8x128xf32>
    %256 = arith.divf %254, %255 : vector<8x128xf32>
    %257 = vector.extract_strided_slice %244 {offsets = [0, 256], sizes = [8, 128], strides = [1, 1]} : vector<8x512xf32> to vector<8x128xf32>
    %258 = math.tanh %257 : vector<8x128xf32>
    %259 = vector.extract_strided_slice %250 {offsets = [0, 128], sizes = [8, 128], strides = [1, 1]} : vector<8x256xf32> to vector<8x128xf32>
    %260 = arith.mulf %259, %239 : vector<8x128xf32>
    %261 = vector.extract_strided_slice %250 {offsets = [0, 0], sizes = [8, 128], strides = [1, 1]} : vector<8x256xf32> to vector<8x128xf32>
    %262 = arith.mulf %261, %258 : vector<8x128xf32>
    %263 = arith.addf %260, %262 : vector<8x128xf32>
    %264 = math.tanh %263 : vector<8x128xf32>
    %265 = arith.mulf %256, %264 : vector<8x128xf32>
    %c32_i32_80 = arith.constant 32 : i32
    %266 = vector.broadcast %c32_i32_80 : i32 to vector<8x128xi32>
    %267 = arith.cmpi sge, %3, %266 : vector<8x128xi32>
    %268 = arith.select %267, %263, %239 : vector<8x128xi1>, vector<8x128xf32>
    %269 = arith.select %267, %265, %241 : vector<8x128xi1>, vector<8x128xf32>
    %c0_81 = arith.constant 0 : index
    %c0_82 = arith.constant 0 : index
    %270 = vector.load %arg1[%c0_81, %c0_82] : memref<128x512xf32, #tpu.memory_space<vmem>>, vector<128x512xf32>
    %cst_83 = arith.constant dense<0.000000e+00> : vector<8x512xf32>
    %271 = tpu.matmul %269, %270, %cst_83 {dimension_numbers = #tpu.dot_dimension_numbers<[1], [0], [0], [1], [0, 0, 1, 1], [], []>} : vector<8x128xf32>, vector<128x512xf32>, vector<8x512xf32> -> vector<8x512xf32>
    %272 = arith.addf %2, %271 : vector<8x512xf32>
    %273 = vector.extract_strided_slice %272 {offsets = [0, 0], sizes = [8, 256], strides = [1, 1]} : vector<8x512xf32> to vector<8x256xf32>
    %274 = arith.negf %273 : vector<8x256xf32>
    %275 = math.exp %274 : vector<8x256xf32>
    %cst_84 = arith.constant 1.000000e+00 : f32
    %276 = vector.broadcast %cst_84 : f32 to vector<8x256xf32>
    %277 = arith.addf %276, %275 : vector<8x256xf32>
    %278 = arith.divf %276, %277 : vector<8x256xf32>
    %279 = vector.extract_strided_slice %272 {offsets = [0, 384], sizes = [8, 128], strides = [1, 1]} : vector<8x512xf32> to vector<8x128xf32>
    %280 = arith.negf %279 : vector<8x128xf32>
    %281 = math.exp %280 : vector<8x128xf32>
    %cst_85 = arith.constant 1.000000e+00 : f32
    %282 = vector.broadcast %cst_85 : f32 to vector<8x128xf32>
    %283 = arith.addf %282, %281 : vector<8x128xf32>
    %284 = arith.divf %282, %283 : vector<8x128xf32>
    %285 = vector.extract_strided_slice %272 {offsets = [0, 256], sizes = [8, 128], strides = [1, 1]} : vector<8x512xf32> to vector<8x128xf32>
    %286 = math.tanh %285 : vector<8x128xf32>
    %287 = vector.extract_strided_slice %278 {offsets = [0, 128], sizes = [8, 128], strides = [1, 1]} : vector<8x256xf32> to vector<8x128xf32>
    %288 = arith.mulf %287, %268 : vector<8x128xf32>
    %289 = vector.extract_strided_slice %278 {offsets = [0, 0], sizes = [8, 128], strides = [1, 1]} : vector<8x256xf32> to vector<8x128xf32>
    %290 = arith.mulf %289, %286 : vector<8x128xf32>
    %291 = arith.addf %288, %290 : vector<8x128xf32>
    %292 = math.tanh %291 : vector<8x128xf32>
    %293 = arith.mulf %284, %292 : vector<8x128xf32>
    %c64_i32_86 = arith.constant 64 : i32
    %294 = vector.broadcast %c64_i32_86 : i32 to vector<8x128xi32>
    %295 = arith.cmpi sge, %3, %294 : vector<8x128xi32>
    %296 = arith.select %295, %291, %268 : vector<8x128xi1>, vector<8x128xf32>
    %297 = arith.select %295, %293, %269 : vector<8x128xi1>, vector<8x128xf32>
    %c0_87 = arith.constant 0 : index
    %c0_88 = arith.constant 0 : index
    %298 = vector.load %arg1[%c0_87, %c0_88] : memref<128x512xf32, #tpu.memory_space<vmem>>, vector<128x512xf32>
    %cst_89 = arith.constant dense<0.000000e+00> : vector<8x512xf32>
    %299 = tpu.matmul %297, %298, %cst_89 {dimension_numbers = #tpu.dot_dimension_numbers<[1], [0], [0], [1], [0, 0, 1, 1], [], []>} : vector<8x128xf32>, vector<128x512xf32>, vector<8x512xf32> -> vector<8x512xf32>
    %300 = arith.addf %2, %299 : vector<8x512xf32>
    %301 = vector.extract_strided_slice %300 {offsets = [0, 0], sizes = [8, 256], strides = [1, 1]} : vector<8x512xf32> to vector<8x256xf32>
    %302 = arith.negf %301 : vector<8x256xf32>
    %303 = math.exp %302 : vector<8x256xf32>
    %cst_90 = arith.constant 1.000000e+00 : f32
    %304 = vector.broadcast %cst_90 : f32 to vector<8x256xf32>
    %305 = arith.addf %304, %303 : vector<8x256xf32>
    %306 = arith.divf %304, %305 : vector<8x256xf32>
    %307 = vector.extract_strided_slice %300 {offsets = [0, 384], sizes = [8, 128], strides = [1, 1]} : vector<8x512xf32> to vector<8x128xf32>
    %308 = arith.negf %307 : vector<8x128xf32>
    %309 = math.exp %308 : vector<8x128xf32>
    %cst_91 = arith.constant 1.000000e+00 : f32
    %310 = vector.broadcast %cst_91 : f32 to vector<8x128xf32>
    %311 = arith.addf %310, %309 : vector<8x128xf32>
    %312 = arith.divf %310, %311 : vector<8x128xf32>
    %313 = vector.extract_strided_slice %300 {offsets = [0, 256], sizes = [8, 128], strides = [1, 1]} : vector<8x512xf32> to vector<8x128xf32>
    %314 = math.tanh %313 : vector<8x128xf32>
    %315 = vector.extract_strided_slice %306 {offsets = [0, 128], sizes = [8, 128], strides = [1, 1]} : vector<8x256xf32> to vector<8x128xf32>
    %316 = arith.mulf %315, %296 : vector<8x128xf32>
    %317 = vector.extract_strided_slice %306 {offsets = [0, 0], sizes = [8, 128], strides = [1, 1]} : vector<8x256xf32> to vector<8x128xf32>
    %318 = arith.mulf %317, %314 : vector<8x128xf32>
    %319 = arith.addf %316, %318 : vector<8x128xf32>
    %320 = math.tanh %319 : vector<8x128xf32>
    %321 = arith.mulf %312, %320 : vector<8x128xf32>
    %c96_i32_92 = arith.constant 96 : i32
    %322 = vector.broadcast %c96_i32_92 : i32 to vector<8x128xi32>
    %323 = arith.cmpi sge, %3, %322 : vector<8x128xi32>
    %324 = arith.select %323, %321, %297 : vector<8x128xi1>, vector<8x128xf32>
    %325 = tpu.concatenate %129, %157, %185, %213, %241, %269, %297, %324 in 0 : vector<8x128xf32>, vector<8x128xf32>, vector<8x128xf32>, vector<8x128xf32>, vector<8x128xf32>, vector<8x128xf32>, vector<8x128xf32>, vector<8x128xf32> -> vector<64x128xf32>
    %c0_93 = arith.constant 0 : index
    %c0_94 = arith.constant 0 : index
    %326 = vector.load %arg4[%c0_93, %c0_94] : memref<128x128xf32, #tpu.memory_space<vmem>>, vector<128x128xf32>
    %cst_95 = arith.constant dense<0.000000e+00> : vector<64x128xf32>
    %327 = tpu.matmul %325, %326, %cst_95 {dimension_numbers = #tpu.dot_dimension_numbers<[1], [0], [0], [1], [0, 0, 1, 1], [], []>} : vector<64x128xf32>, vector<128x128xf32>, vector<64x128xf32> -> vector<64x128xf32>
    %c0_96 = arith.constant 0 : index
    %c0_97 = arith.constant 0 : index
    %328 = vector.load %arg5[%c0_96, %c0_97] : memref<1x128xf32, #tpu.memory_space<vmem>>, vector<1x128xf32>
    %329 = vector.broadcast %328 : vector<1x128xf32> to vector<64x128xf32>
    %330 = arith.addf %327, %329 : vector<64x128xf32>
    %c0_98 = arith.constant 0 : index
    %c0_99 = arith.constant 0 : index
    %331 = vector.load %arg6[%c0_98, %c0_99] : memref<64x128xf32, #tpu.memory_space<vmem>>, vector<64x128xf32>
    tpu.vector_store %arg6[%c0_98, %c0_99], %330 {strides = array<i32>} : memref<64x128xf32, #tpu.memory_space<vmem>>, vector<64x128xf32>,
    return
  }
}

</mosaic_0001>

<llo_original>
// kernel: model_lm_forward.1
$region0: #{model_lm_forward.1}
  #allocation0 [shape = 'u32[]', space=smem, size = 0x4, offset = 0x4, fixed_abs, tag = 'smem constant byte address 0x4 - core index']
  #allocation1 [shape = 'u32[144,128]{1,0:T(1,128)}', space=vmem, size = 0x12000, scoped, tag = 'internal scratch']
  %s0 = inlined_call_operand.vmem [shape: f32[64,32], index: 0, kind: input, shape index: {}]
  %s1 = inlined_call_operand.vmem [shape: f32[128,512], index: 1, kind: input, shape index: {}]
  %s2 = inlined_call_operand.vmem [shape: f32[32,512], index: 2, kind: input, shape index: {}]
  %s3 = inlined_call_operand.vmem [shape: f32[1,512], index: 3, kind: input, shape index: {}]
  %s4 = inlined_call_operand.vmem [shape: f32[128,128], index: 4, kind: input, shape index: {}]
  %s5 = inlined_call_operand.vmem [shape: f32[1,128], index: 5, kind: input, shape index: {}]
  %s6 = inlined_call_operand.vmem [shape: f32[64,128], index: 6, kind: output, shape index: {}]
  %s7 = sld [smem:[#allocation0]]
  $region34: #{model_lm_forward.1} parent=0
    _
  %s9 = ssub.s32 1, %s7
  %s10 = scalar_select 0, %s9, %s7
  // Predicated region
  $region2: #{model_lm_forward.1} parent=0 // pred_check
    _
  $region3: #{model_lm_forward.1} parent=0 // pred_check_branch
    %12 = sbr.rel (0) target = $region5
  $region4: #{model_lm_forward.1} parent=0 // pred_region
    _
  $region5: #{model_lm_forward.1} parent=0 // pred_fallthru
    _
  // Predicated region
  $region6: #{model_lm_forward.1} parent=0 // pred_check
    _
  $region7: #{model_lm_forward.1} parent=0 // pred_check_branch
    %14 = sbr.rel (0) target = $region9
  $region8: #{model_lm_forward.1} parent=0 // pred_region
    _
  $region9: #{model_lm_forward.1} parent=0 // pred_fallthru
    _
  // Predicated region
  $region10: #{model_lm_forward.1} parent=0 // pred_check
    _
  $region11: #{model_lm_forward.1} parent=0 // pred_check_branch
    %16 = sbr.rel (0) target = $region13
  $region12: #{model_lm_forward.1} parent=0 // pred_region
    _
  $region13: #{model_lm_forward.1} parent=0 // pred_fallthru
    _
  // Predicated region
  $region14: #{model_lm_forward.1} parent=0 // pred_check
    _
  $region15: #{model_lm_forward.1} parent=0 // pred_check_branch
    %18 = sbr.rel (0) target = $region17
  $region16: #{model_lm_forward.1} parent=0 // pred_region
    _
  $region17: #{model_lm_forward.1} parent=0 // pred_fallthru
    _
  // Predicated region
  $region18: #{model_lm_forward.1} parent=0 // pred_check
    _
  $region19: #{model_lm_forward.1} parent=0 // pred_check_branch
    %20 = sbr.rel (0) target = $region21
  $region20: #{model_lm_forward.1} parent=0 // pred_region
    _
  $region21: #{model_lm_forward.1} parent=0 // pred_fallthru
    _
  // Predicated region
  $region22: #{model_lm_forward.1} parent=0 // pred_check
    _
  $region23: #{model_lm_forward.1} parent=0 // pred_check_branch
    %22 = sbr.rel (0) target = $region25
  $region24: #{model_lm_forward.1} parent=0 // pred_region
    _
  $region25: #{model_lm_forward.1} parent=0 // pred_fallthru
    _
  %v23 = vld [vmem:[%s3] sm:$0xf]
  %v25 = vlaneseq
  %v26 = vshrl.u32 %v25, 7
  %v27 = vsub.s32 0, %v26
  %v28 = vrot.slane %v23, %v27
  %v29 = vlaneseq
  %v30 = vshrl.u32 %v29, 7
  %v31 = vsub.s32 1, %v30
  %v32 = vrot.slane %v23, %v31
  %v33 = vlaneseq
  %v34 = vshrl.u32 %v33, 7
  %v35 = vsub.s32 2, %v34
  %v36 = vrot.slane %v23, %v35
  %v37 = vlaneseq
  %v38 = vshrl.u32 %v37, 7
  %v39 = vsub.s32 3, %v38
  %v40 = vrot.slane %v23, %v39
  %v45 = vlaneseq
  %v46 = vand.u32 %v45, 127
  %v47 = vld [vmem:[%s1] sm:$0xff]
  %v48 = vld [vmem:[%s1 + $0x8] sm:$0xff]
  %v49 = vld [vmem:[%s1 + $0x10] sm:$0xff]
  %v50 = vld [vmem:[%s1 + $0x18] sm:$0xff]
  %v51 = vld [vmem:[%s1 + $0x20] sm:$0xff]
  %v52 = vld [vmem:[%s1 + $0x28] sm:$0xff]
  %v53 = vld [vmem:[%s1 + $0x30] sm:$0xff]
  %v54 = vld [vmem:[%s1 + $0x38] sm:$0xff]
  %v55 = vld [vmem:[%s1 + $0x40] sm:$0xff]
  %v56 = vld [vmem:[%s1 + $0x48] sm:$0xff]
  %v57 = vld [vmem:[%s1 + $0x50] sm:$0xff]
  %v58 = vld [vmem:[%s1 + $0x58] sm:$0xff]
  %v59 = vld [vmem:[%s1 + $0x60] sm:$0xff]
  %v60 = vld [vmem:[%s1 + $0x68] sm:$0xff]
  %v61 = vld [vmem:[%s1 + $0x70] sm:$0xff]
  %v62 = vld [vmem:[%s1 + $0x78] sm:$0xff]
  %v63 = vld [vmem:[%s1 + $0x80] sm:$0xff]
  %v64 = vld [vmem:[%s1 + $0x88] sm:$0xff]
  %v65 = vld [vmem:[%s1 + $0x90] sm:$0xff]
  %v66 = vld [vmem:[%s1 + $0x98] sm:$0xff]
  %v67 = vld [vmem:[%s1 + $0xa0] sm:$0xff]
  %v68 = vld [vmem:[%s1 + $0xa8] sm:$0xff]
  %v69 = vld [vmem:[%s1 + $0xb0] sm:$0xff]
  %v70 = vld [vmem:[%s1 + $0xb8] sm:$0xff]
  %v71 = vld [vmem:[%s1 + $0xc0] sm:$0xff]
  %v72 = vld [vmem:[%s1 + $0xc8] sm:$0xff]
  %v73 = vld [vmem:[%s1 + $0xd0] sm:$0xff]
  %v74 = vld [vmem:[%s1 + $0xd8] sm:$0xff]
  %v75 = vld [vmem:[%s1 + $0xe0] sm:$0xff]
  %v76 = vld [vmem:[%s1 + $0xe8] sm:$0xff]
  %v77 = vld [vmem:[%s1 + $0xf0] sm:$0xff]
  %v78 = vld [vmem:[%s1 + $0xf8] sm:$0xff]
  %v79 = vld [vmem:[%s1 + $0x100] sm:$0xff]
  %v80 = vld [vmem:[%s1 + $0x108] sm:$0xff]
  %v81 = vld [vmem:[%s1 + $0x110] sm:$0xff]
  %v82 = vld [vmem:[%s1 + $0x118] sm:$0xff]
  %v83 = vld [vmem:[%s1 + $0x120] sm:$0xff]
  %v84 = vld [vmem:[%s1 + $0x128] sm:$0xff]
  %v85 = vld [vmem:[%s1 + $0x130] sm:$0xff]
  %v86 = vld [vmem:[%s1 + $0x138] sm:$0xff]
  %v87 = vld [vmem:[%s1 + $0x140] sm:$0xff]
  %v88 = vld [vmem:[%s1 + $0x148] sm:$0xff]
  %v89 = vld [vmem:[%s1 + $0x150] sm:$0xff]
  %v90 = vld [vmem:[%s1 + $0x158] sm:$0xff]
  %v91 = vld [vmem:[%s1 + $0x160] sm:$0xff]
  %v92 = vld [vmem:[%s1 + $0x168] sm:$0xff]
  %v93 = vld [vmem:[%s1 + $0x170] sm:$0xff]
  %v94 = vld [vmem:[%s1 + $0x178] sm:$0xff]
  %v95 = vld [vmem:[%s1 + $0x180] sm:$0xff]
  %v96 = vld [vmem:[%s1 + $0x188] sm:$0xff]
  %v97 = vld [vmem:[%s1 + $0x190] sm:$0xff]
  %v98 = vld [vmem:[%s1 + $0x198] sm:$0xff]
  %v99 = vld [vmem:[%s1 + $0x1a0] sm:$0xff]
  %v100 = vld [vmem:[%s1 + $0x1a8] sm:$0xff]
  %v101 = vld [vmem:[%s1 + $0x1b0] sm:$0xff]
  %v102 = vld [vmem:[%s1 + $0x1b8] sm:$0xff]
  %v103 = vld [vmem:[%s1 + $0x1c0] sm:$0xff]
  %v104 = vld [vmem:[%s1 + $0x1c8] sm:$0xff]
  %v105 = vld [vmem:[%s1 + $0x1d0] sm:$0xff]
  %v106 = vld [vmem:[%s1 + $0x1d8] sm:$0xff]
  %v107 = vld [vmem:[%s1 + $0x1e0] sm:$0xff]
  %v108 = vld [vmem:[%s1 + $0x1e8] sm:$0xff]
  %v109 = vld [vmem:[%s1 + $0x1f0] sm:$0xff]
  %v110 = vld [vmem:[%s1 + $0x1f8] sm:$0xff]
  %111 = vmatprep.subr.mxu0 %v48
  %112 = vmatpush1.msra.mxu0 %v47
  %113 = vmatprep.subr.mxu0 %v52
  %114 = vmatpush1.msra.mxu0 %v51
  %115 = vmatprep.subr.mxu0 %v56
  %116 = vmatpush1.msra.mxu0 %v55
  %117 = vmatprep.subr.mxu0 %v60
  %118 = vmatpush1.msra.mxu0 %v59
  %119 = vmatprep.subr.mxu0 %v64
  %120 = vmatpush1.msra.mxu0 %v63
  %121 = vmatprep.subr.mxu0 %v68
  %122 = vmatpush1.msra.mxu0 %v67
  %123 = vmatprep.subr.mxu0 %v72
  %124 = vmatpush1.msra.mxu0 %v71
  %125 = vmatprep.subr.mxu0 %v76
  %126 = vmatpush1.msra.mxu0 %v75
  %127 = vmatprep.subr.mxu0 %v80
  %128 = vmatpush1.msra.mxu0 %v79
  %129 = vmatprep.subr.mxu0 %v84
  %130 = vmatpush1.msra.mxu0 %v83
  %131 = vmatprep.subr.mxu0 %v88
  %132 = vmatpush1.msra.mxu0 %v87
  %133 = vmatprep.subr.mxu0 %v92
  %134 = vmatpush1.msra.mxu0 %v91
  %135 = vmatprep.subr.mxu0 %v96
  %136 = vmatpush1.msra.mxu0 %v95
  %137 = vmatprep.subr.mxu0 %v100
  %138 = vmatpush1.msra.mxu0 %v99
  %139 = vmatprep.subr.mxu0 %v104
  %140 = vmatpush1.msra.mxu0 %v103
  %141 = vmatprep.subr.mxu0 %v108
  %142 = vmatpush1.msra.mxu0 %v107
  %143 = vmatprep.subr.mxu0 0.0
  %144 = vmatpush1.msra.mxu0 0.0
  %145 = vmatprep.subr.mxu0 0.0
  %146 = vmatpush1.msra.mxu0 0.0
  %147 = vmatprep.subr.mxu0 0.0
  %148 = vmatpush1.msra.mxu0 0.0
  %149 = vmatprep.subr.mxu0 0.0
  %150 = vmatpush1.msra.mxu0 0.0
  %151 = vmatprep.subr.mxu0 0.0
  %152 = vmatpush1.msra.mxu0 0.0
  %153 = vmatprep.subr.mxu0 0.0
  %154 = vmatpush1.msra.mxu0 0.0
  %155 = vmatprep.subr.mxu0 0.0
  %156 = vmatpush1.msra.mxu0 0.0
  %157 = vmatprep.subr.mxu0 0.0
  %158 = vmatpush1.msra.mxu0 0.0
  %159 = vmatprep.subr.mxu0 0.0
  %160 = vmatpush1.msra.mxu0 0.0
  %161 = vmatprep.subr.mxu0 0.0
  %162 = vmatpush1.msra.mxu0 0.0
  %163 = vmatprep.subr.mxu0 0.0
  %164 = vmatpush1.msra.mxu0 0.0
  %165 = vmatprep.subr.mxu0 0.0
  %166 = vmatpush1.msra.mxu0 0.0
  %167 = vmatprep.subr.mxu0 0.0
  %168 = vmatpush1.msra.mxu0 0.0
  %169 = vmatprep.subr.mxu0 0.0
  %170 = vmatpush1.msra.mxu0 0.0
  %171 = vmatprep.subr.mxu0 0.0
  %172 = vmatpush1.msra.mxu0 0.0
  %173 = vmatprep.subr.mxu0 0.0
  %174 = vmatpush1.msra.mxu0 0.0
  %175 = vmatprep.mubr.f32.mxu0 0.0
  %176 = vmatmul.mubr.f32.gmra.mrb[0].mxu0 0.0
  %v177 = vpop.f32.mrb[0].mxu0
  %v178 = vadd.f32 0.0, %v177
  %v179 = vpop.f32.mrb[0].mxu0
  %v180 = vadd.f32 0.0, %v179
  %181 = vdwg.mxu0
  %182 = vmatprep.subr.mxu0 %v50
  %183 = vmatpush1.msra.mxu0 %v49
  %184 = vmatprep.subr.mxu0 %v54
  %185 = vmatpush1.msra.mxu0 %v53
  %186 = vmatprep.subr.mxu0 %v58
  %187 = vmatpush1.msra.mxu0 %v57
  %188 = vmatprep.subr.mxu0 %v62
  %189 = vmatpush1.msra.mxu0 %v61
  %190 = vmatprep.subr.mxu0 %v66
  %191 = vmatpush1.msra.mxu0 %v65
  %192 = vmatprep.subr.mxu0 %v70
  %193 = vmatpush1.msra.mxu0 %v69
  %194 = vmatprep.subr.mxu0 %v74
  %195 = vmatpush1.msra.mxu0 %v73
  %196 = vmatprep.subr.mxu0 %v78
  %197 = vmatpush1.msra.mxu0 %v77
  %198 = vmatprep.subr.mxu0 %v82
  %199 = vmatpush1.msra.mxu0 %v81
  %200 = vmatprep.subr.mxu0 %v86
  %201 = vmatpush1.msra.mxu0 %v85
  %202 = vmatprep.subr.mxu0 %v90
  %203 = vmatpush1.msra.mxu0 %v89
  %204 = vmatprep.subr.mxu0 %v94
  %205 = vmatpush1.msra.mxu0 %v93
  %206 = vmatprep.subr.mxu0 %v98
  %207 = vmatpush1.msra.mxu0 %v97
  %208 = vmatprep.subr.mxu0 %v102
  %209 = vmatpush1.msra.mxu0 %v101
  %210 = vmatprep.subr.mxu0 %v106
  %211 = vmatpush1.msra.mxu0 %v105
  %212 = vmatprep.subr.mxu0 %v110
  %213 = vmatpush1.msra.mxu0 %v109
  %214 = vmatprep.subr.mxu0 0.0
  %215 = vmatpush1.msra.mxu0 0.0
  %216 = vmatprep.subr.mxu0 0.0
  %217 = vmatpush1.msra.mxu0 0.0
  %218 = vmatprep.subr.mxu0 0.0
  %219 = vmatpush1.msra.mxu0 0.0
  %220 = vmatprep.subr.mxu0 0.0
  %221 = vmatpush1.msra.mxu0 0.0
  %222 = vmatprep.subr.mxu0 0.0
  %223 = vmatpush1.msra.mxu0 0.0
  %224 = vmatprep.subr.mxu0 0.0
  %225 = vmatpush1.msra.mxu0 0.0
  %226 = vmatprep.subr.mxu0 0.0
  %227 = vmatpush1.msra.mxu0 0.0
  %228 = vmatprep.subr.mxu0 0.0
  %229 = vmatpush1.msra.mxu0 0.0
  %230 = vmatprep.subr.mxu0 0.0
  %231 = vmatpush1.msra.mxu0 0.0
  %232 = vmatprep.subr.mxu0 0.0
  %233 = vmatpush1.msra.mxu0 0.0
  %234 = vmatprep.subr.mxu0 0.0
  %235 = vmatpush1.msra.mxu0 0.0
  %236 = vmatprep.subr.mxu0 0.0
  %237 = vmatpush1.msra.mxu0 0.0
  %238 = vmatprep.subr.mxu0 0.0
  %239 = vmatpush1.msra.mxu0 0.0
  %240 = vmatprep.subr.mxu0 0.0
  %241 = vmatpush1.msra.mxu0 0.0
  %242 = vmatprep.subr.mxu0 0.0
  %243 = vmatpush1.msra.mxu0 0.0
  %244 = vmatprep.subr.mxu0 0.0
  %245 = vmatpush1.msra.mxu0 0.0
  %246 = vmatprep.mubr.f32.mxu0 0.0
  %247 = vmatmul.mubr.f32.gmra.mrb[0].mxu0 0.0
  %v248 = vpop.f32.mrb[0].mxu0
  %v249 = vadd.f32 0.0, %v248
  %v250 = vpop.f32.mrb[0].mxu0
  %v251 = vadd.f32 0.0, %v250
  %252 = vdwg.mxu0
  %v253 = vadd.f32 %v28, %v178
  %v254 = vadd.f32 %v32, %v180
  %v255 = vadd.f32 %v36, %v249
  %v256 = vadd.f32 %v40, %v251
  %v257 = vld [vmem:[%s0] sm:$0xff]
  %v258 = vld [vmem:[%s2] sm:$0xff]
  %v259 = vld [vmem:[%s2 + $0x8] sm:$0xff]
  %v260 = vld [vmem:[%s2 + $0x10] sm:$0xff]
  %v261 = vld [vmem:[%s2 + $0x18] sm:$0xff]
  %v262 = vld [vmem:[%s2 + $0x20] sm:$0xff]
  %v263 = vld [vmem:[%s2 + $0x28] sm:$0xff]
  %v264 = vld [vmem:[%s2 + $0x30] sm:$0xff]
  %v265 = vld [vmem:[%s2 + $0x38] sm:$0xff]
  %v266 = vld [vmem:[%s2 + $0x40] sm:$0xff]
  %v267 = vld [vmem:[%s2 + $0x48] sm:$0xff]
  %v268 = vld [vmem:[%s2 + $0x50] sm:$0xff]
  %v269 = vld [vmem:[%s2 + $0x58] sm:$0xff]
  %v270 = vld [vmem:[%s2 + $0x60] sm:$0xff]
  %v271 = vld [vmem:[%s2 + $0x68] sm:$0xff]
  %v272 = vld [vmem:[%s2 + $0x70] sm:$0xff]
  %v273 = vld [vmem:[%s2 + $0x78] sm:$0xff]
  %vm274 = vcmask 261120
  %v276 = vsel %vm274, %v257, 0
  %278 = vmatprep.subr.mxu0 %v259
  %279 = vmatpush1.msra.mxu0 %v258
  %280 = vmatprep.subr.mxu0 %v263
  %281 = vmatpush1.msra.mxu0 %v262
  %282 = vmatprep.subr.mxu0 %v267
  %283 = vmatpush1.msra.mxu0 %v266
  %284 = vmatprep.subr.mxu0 %v271
  %285 = vmatpush1.msra.mxu0 %v270
  %286 = vmatprep.subr.mxu0 0.0
  %287 = vmatpush1.msra.mxu0 0.0
  %288 = vmatprep.subr.mxu0 0.0
  %289 = vmatpush1.msra.mxu0 0.0
  %290 = vmatprep.subr.mxu0 0.0
  %291 = vmatpush1.msra.mxu0 0.0
  %292 = vmatprep.subr.mxu0 0.0
  %293 = vmatpush1.msra.mxu0 0.0
  %294 = vmatprep.subr.mxu0 0.0
  %295 = vmatpush1.msra.mxu0 0.0
  %296 = vmatprep.subr.mxu0 0.0
  %297 = vmatpush1.msra.mxu0 0.0
  %298 = vmatprep.subr.mxu0 0.0
  %299 = vmatpush1.msra.mxu0 0.0
  %300 = vmatprep.subr.mxu0 0.0
  %301 = vmatpush1.msra.mxu0 0.0
  %302 = vmatprep.subr.mxu0 0.0
  %303 = vmatpush1.msra.mxu0 0.0
  %304 = vmatprep.subr.mxu0 0.0
  %305 = vmatpush1.msra.mxu0 0.0
  %306 = vmatprep.subr.mxu0 0.0
  %307 = vmatpush1.msra.mxu0 0.0
  %308 = vmatprep.subr.mxu0 0.0
  %309 = vmatpush1.msra.mxu0 0.0
  %310 = vmatprep.subr.mxu0 0.0
  %311 = vmatpush1.msra.mxu0 0.0
  %312 = vmatprep.subr.mxu0 0.0
  %313 = vmatpush1.msra.mxu0 0.0
  %314 = vmatprep.subr.mxu0 0.0
  %315 = vmatpush1.msra.mxu0 0.0
  %316 = vmatprep.subr.mxu0 0.0
  %317 = vmatpush1.msra.mxu0 0.0
  %318 = vmatprep.subr.mxu0 0.0
  %319 = vmatpush1.msra.mxu0 0.0
  %320 = vmatprep.subr.mxu0 0.0
  %321 = vmatpush1.msra.mxu0 0.0
  %322 = vmatprep.subr.mxu0 0.0
  %323 = vmatpush1.msra.mxu0 0.0
  %324 = vmatprep.subr.mxu0 0.0
  %325 = vmatpush1.msra.mxu0 0.0
  %326 = vmatprep.subr.mxu0 0.0
  %327 = vmatpush1.msra.mxu0 0.0
  %328 = vmatprep.subr.mxu0 0.0
  %329 = vmatpush1.msra.mxu0 0.0
  %330 = vmatprep.subr.mxu0 0.0
  %331 = vmatpush1.msra.mxu0 0.0
  %332 = vmatprep.subr.mxu0 0.0
  %333 = vmatpush1.msra.mxu0 0.0
  %334 = vmatprep.subr.mxu0 0.0
  %335 = vmatpush1.msra.mxu0 0.0
  %336 = vmatprep.subr.mxu0 0.0
  %337 = vmatpush1.msra.mxu0 0.0
  %338 = vmatprep.subr.mxu0 0.0
  %339 = vmatpush1.msra.mxu0 0.0
  %340 = vmatprep.subr.mxu0 0.0
  %341 = vmatpush1.msra.mxu0 0.0
  %342 = vmatprep.mubr.f32.mxu0 0.0
  %343 = vmatmul.mubr.f32.gmra.mrb[0].mxu0 %v276
  %v344 = vpop.f32.mrb[0].mxu0
  %v345 = vadd.f32 0.0, %v344
  %v346 = vpop.f32.mrb[0].mxu0
  %v347 = vadd.f32 0.0, %v346
  %348 = vdwg.mxu0
  %349 = vmatprep.subr.mxu0 %v261
  %350 = vmatpush1.msra.mxu0 %v260
  %351 = vmatprep.subr.mxu0 %v265
  %352 = vmatpush1.msra.mxu0 %v264
  %353 = vmatprep.subr.mxu0 %v269
  %354 = vmatpush1.msra.mxu0 %v268
  %355 = vmatprep.subr.mxu0 %v273
  %356 = vmatpush1.msra.mxu0 %v272
  %357 = vmatprep.subr.mxu0 0.0
  %358 = vmatpush1.msra.mxu0 0.0
  %359 = vmatprep.subr.mxu0 0.0
  %360 = vmatpush1.msra.mxu0 0.0
  %361 = vmatprep.subr.mxu0 0.0
  %362 = vmatpush1.msra.mxu0 0.0
  %363 = vmatprep.subr.mxu0 0.0
  %364 = vmatpush1.msra.mxu0 0.0
  %365 = vmatprep.subr.mxu0 0.0
  %366 = vmatpush1.msra.mxu0 0.0
  %367 = vmatprep.subr.mxu0 0.0
  %368 = vmatpush1.msra.mxu0 0.0
  %369 = vmatprep.subr.mxu0 0.0
  %370 = vmatpush1.msra.mxu0 0.0
  %371 = vmatprep.subr.mxu0 0.0
  %372 = vmatpush1.msra.mxu0 0.0
  %373 = vmatprep.subr.mxu0 0.0
  %374 = vmatpush1.msra.mxu0 0.0
  %375 = vmatprep.subr.mxu0 0.0
  %376 = vmatpush1.msra.mxu0 0.0
  %377 = vmatprep.subr.mxu0 0.0
  %378 = vmatpush1.msra.mxu0 0.0
  %379 = vmatprep.subr.mxu0 0.0
  %380 = vmatpush1.msra.mxu0 0.0
  %381 = vmatprep.subr.mxu0 0.0
  %382 = vmatpush1.msra.mxu0 0.0
  %383 = vmatprep.subr.mxu0 0.0
  %384 = vmatpush1.msra.mxu0 0.0
  %385 = vmatprep.subr.mxu0 0.0
  %386 = vmatpush1.msra.mxu0 0.0
  %387 = vmatprep.subr.mxu0 0.0
  %388 = vmatpush1.msra.mxu0 0.0
  %389 = vmatprep.subr.mxu0 0.0
  %390 = vmatpush1.msra.mxu0 0.0
  %391 = vmatprep.subr.mxu0 0.0
  %392 = vmatpush1.msra.mxu0 0.0
  %393 = vmatprep.subr.mxu0 0.0
  %394 = vmatpush1.msra.mxu0 0.0
  %395 = vmatprep.subr.mxu0 0.0
  %396 = vmatpush1.msra.mxu0 0.0
  %397 = vmatprep.subr.mxu0 0.0
  %398 = vmatpush1.msra.mxu0 0.0
  %399 = vmatprep.subr.mxu0 0.0
  %400 = vmatpush1.msra.mxu0 0.0
  %401 = vmatprep.subr.mxu0 0.0
  %402 = vmatpush1.msra.mxu0 0.0
  %403 = vmatprep.subr.mxu0 0.0
  %404 = vmatpush1.msra.mxu0 0.0
  %405 = vmatprep.subr.mxu0 0.0
  %406 = vmatpush1.msra.mxu0 0.0
  %407 = vmatprep.subr.mxu0 0.0
  %408 = vmatpush1.msra.mxu0 0.0
  %409 = vmatprep.subr.mxu0 0.0
  %410 = vmatpush1.msra.mxu0 0.0
  %411 = vmatprep.subr.mxu0 0.0
  %412 = vmatpush1.msra.mxu0 0.0
  %413 = vmatprep.mubr.f32.mxu0 0.0
  %414 = vmatmul.mubr.f32.gmra.mrb[0].mxu0 %v276
  %v415 = vpop.f32.mrb[0].mxu0
  %v416 = vadd.f32 0.0, %v415
  %v417 = vpop.f32.mrb[0].mxu0
  %v418 = vadd.f32 0.0, %v417
  %419 = vdwg.mxu0
  %v420 = vadd.f32 %v253, %v345
  %v421 = vadd.f32 %v254, %v347
  %v422 = vadd.f32 %v255, %v416
  %v423 = vadd.f32 %v256, %v418
  %v424 = vxor.u32 %v420, 2147483648
  %v425 = vxor.u32 %v421, 2147483648
  %v426 = vmul.f32 %v424, 1.442695
  %v427 = vpow.pop %v426
  %v428 = vmul.f32 %v425, 1.442695
  %v429 = vpow.pop %v428
  %v430 = vadd.f32 %v427, 1.0
  %v431 = vadd.f32 %v429, 1.0
  %v432 = vrcp.pop %v430
  %v433 = vmul.f32 1.0, %v432
  %v434 = vrcp.pop %v431
  %v435 = vmul.f32 1.0, %v434
  %v436 = vxor.u32 %v423, 2147483648
  %v437 = vmul.f32 %v436, 1.442695
  %v438 = vpow.pop %v437
  %v439 = vadd.f32 %v438, 1.0
  %v440 = vrcp.pop %v439
  %v441 = vmul.f32 1.0, %v440
  %v442 = vtanh.pop %v422
  %v443 = vmul.f32 %v435, 0.0
  %v444 = vmul.f32 %v433, %v442
  %v445 = vadd.f32 %v443, %v444
  %v446 = vtanh.pop %v445
  %v447 = vmul.f32 %v441, %v446
  %vm448 = vcmp.lt.s32.totalorder %v46, 32
  %v449 = vsel %vm448, %v445, 0.0
  %v450 = vsel %vm448, %v447, 0.0
  %451 = vmatprep.subr.mxu0 %v48
  %452 = vmatpush1.msra.mxu0 %v47
  %453 = vmatprep.subr.mxu0 %v52
  %454 = vmatpush1.msra.mxu0 %v51
  %455 = vmatprep.subr.mxu0 %v56
  %456 = vmatpush1.msra.mxu0 %v55
  %457 = vmatprep.subr.mxu0 %v60
  %458 = vmatpush1.msra.mxu0 %v59
  %459 = vmatprep.subr.mxu0 %v64
  %460 = vmatpush1.msra.mxu0 %v63
  %461 = vmatprep.subr.mxu0 %v68
  %462 = vmatpush1.msra.mxu0 %v67
  %463 = vmatprep.subr.mxu0 %v72
  %464 = vmatpush1.msra.mxu0 %v71
  %465 = vmatprep.subr.mxu0 %v76
  %466 = vmatpush1.msra.mxu0 %v75
  %467 = vmatprep.subr.mxu0 %v80
  %468 = vmatpush1.msra.mxu0 %v79
  %469 = vmatprep.subr.mxu0 %v84
  %470 = vmatpush1.msra.mxu0 %v83
  %471 = vmatprep.subr.mxu0 %v88
  %472 = vmatpush1.msra.mxu0 %v87
  %473 = vmatprep.subr.mxu0 %v92
  %474 = vmatpush1.msra.mxu0 %v91
  %475 = vmatprep.subr.mxu0 %v96
  %476 = vmatpush1.msra.mxu0 %v95
  %477 = vmatprep.subr.mxu0 %v100
  %478 = vmatpush1.msra.mxu0 %v99
  %479 = vmatprep.subr.mxu0 %v104
  %480 = vmatpush1.msra.mxu0 %v103
  %481 = vmatprep.subr.mxu0 %v108
  %482 = vmatpush1.msra.mxu0 %v107
  %483 = vmatprep.subr.mxu0 0.0
  %484 = vmatpush1.msra.mxu0 0.0
  %485 = vmatprep.subr.mxu0 0.0
  %486 = vmatpush1.msra.mxu0 0.0
  %487 = vmatprep.subr.mxu0 0.0
  %488 = vmatpush1.msra.mxu0 0.0
  %489 = vmatprep.subr.mxu0 0.0
  %490 = vmatpush1.msra.mxu0 0.0
  %491 = vmatprep.subr.mxu0 0.0
  %492 = vmatpush1.msra.mxu0 0.0
  %493 = vmatprep.subr.mxu0 0.0
  %494 = vmatpush1.msra.mxu0 0.0
  %495 = vmatprep.subr.mxu0 0.0
  %496 = vmatpush1.msra.mxu0 0.0
  %497 = vmatprep.subr.mxu0 0.0
  %498 = vmatpush1.msra.mxu0 0.0
  %499 = vmatprep.subr.mxu0 0.0
  %500 = vmatpush1.msra.mxu0 0.0
  %501 = vmatprep.subr.mxu0 0.0
  %502 = vmatpush1.msra.mxu0 0.0
  %503 = vmatprep.subr.mxu0 0.0
  %504 = vmatpush1.msra.mxu0 0.0
  %505 = vmatprep.subr.mxu0 0.0
  %506 = vmatpush1.msra.mxu0 0.0
  %507 = vmatprep.subr.mxu0 0.0
  %508 = vmatpush1.msra.mxu0 0.0
  %509 = vmatprep.subr.mxu0 0.0
  %510 = vmatpush1.msra.mxu0 0.0
  %511 = vmatprep.subr.mxu0 0.0
  %512 = vmatpush1.msra.mxu0 0.0
  %513 = vmatprep.subr.mxu0 0.0
  %514 = vmatpush1.msra.mxu0 0.0
  %515 = vmatprep.mubr.f32.mxu0 0.0
  %516 = vmatmul.mubr.f32.gmra.mrb[0].mxu0 %v450
  %v517 = vpop.f32.mrb[0].mxu0
  %v518 = vadd.f32 0.0, %v517
  %v519 = vpop.f32.mrb[0].mxu0
  %v520 = vadd.f32 0.0, %v519
  %521 = vdwg.mxu0
  %522 = vmatprep.subr.mxu0 %v50
  %523 = vmatpush1.msra.mxu0 %v49
  %524 = vmatprep.subr.mxu0 %v54
  %525 = vmatpush1.msra.mxu0 %v53
  %526 = vmatprep.subr.mxu0 %v58
  %527 = vmatpush1.msra.mxu0 %v57
  %528 = vmatprep.subr.mxu0 %v62
  %529 = vmatpush1.msra.mxu0 %v61
  %530 = vmatprep.subr.mxu0 %v66
  %531 = vmatpush1.msra.mxu0 %v65
  %532 = vmatprep.subr.mxu0 %v70
  %533 = vmatpush1.msra.mxu0 %v69
  %534 = vmatprep.subr.mxu0 %v74
  %535 = vmatpush1.msra.mxu0 %v73
  %536 = vmatprep.subr.mxu0 %v78
  %537 = vmatpush1.msra.mxu0 %v77
  %538 = vmatprep.subr.mxu0 %v82
  %539 = vmatpush1.msra.mxu0 %v81
  %540 = vmatprep.subr.mxu0 %v86
  %541 = vmatpush1.msra.mxu0 %v85
  %542 = vmatprep.subr.mxu0 %v90
  %543 = vmatpush1.msra.mxu0 %v89
  %544 = vmatprep.subr.mxu0 %v94
  %545 = vmatpush1.msra.mxu0 %v93
  %546 = vmatprep.subr.mxu0 %v98
  %547 = vmatpush1.msra.mxu0 %v97
  %548 = vmatprep.subr.mxu0 %v102
  %549 = vmatpush1.msra.mxu0 %v101
  %550 = vmatprep.subr.mxu0 %v106
  %551 = vmatpush1.msra.mxu0 %v105
  %552 = vmatprep.subr.mxu0 %v110
  %553 = vmatpush1.msra.mxu0 %v109
  %554 = vmatprep.subr.mxu0 0.0
  %555 = vmatpush1.msra.mxu0 0.0
  %556 = vmatprep.subr.mxu0 0.0
  %557 = vmatpush1.msra.mxu0 0.0
  %558 = vmatprep.subr.mxu0 0.0
  %559 = vmatpush1.msra.mxu0 0.0
  %560 = vmatprep.subr.mxu0 0.0
  %561 = vmatpush1.msra.mxu0 0.0
  %562 = vmatprep.subr.mxu0 0.0
  %563 = vmatpush1.msra.mxu0 0.0
  %564 = vmatprep.subr.mxu0 0.0
  %565 = vmatpush1.msra.mxu0 0.0
  %566 = vmatprep.subr.mxu0 0.0
  %567 = vmatpush1.msra.mxu0 0.0
  %568 = vmatprep.subr.mxu0 0.0
  %569 = vmatpush1.msra.mxu0 0.0
  %570 = vmatprep.subr.mxu0 0.0
  %571 = vmatpush1.msra.mxu0 0.0
  %572 = vmatprep.subr.mxu0 0.0
  %573 = vmatpush1.msra.mxu0 0.0
  %574 = vmatprep.subr.mxu0 0.0
  %575 = vmatpush1.msra.mxu0 0.0
  %576 = vmatprep.subr.mxu0 0.0
  %577 = vmatpush1.msra.mxu0 0.0
  %578 = vmatprep.subr.mxu0 0.0
  %579 = vmatpush1.msra.mxu0 0.0
  %580 = vmatprep.subr.mxu0 0.0
  %581 = vmatpush1.msra.mxu0 0.0
  %582 = vmatprep.subr.mxu0 0.0
  %583 = vmatpush1.msra.mxu0 0.0
  %584 = vmatprep.subr.mxu0 0.0
  %585 = vmatpush1.msra.mxu0 0.0
  %586 = vmatprep.mubr.f32.mxu0 0.0
  %587 = vmatmul.mubr.f32.gmra.mrb[0].mxu0 %v450
  %v588 = vpop.f32.mrb[0].mxu0
  %v589 = vadd.f32 0.0, %v588
  %v590 = vpop.f32.mrb[0].mxu0
  %v591 = vadd.f32 0.0, %v590
  %592 = vdwg.mxu0
  %v593 = vadd.f32 %v28, %v518
  %v594 = vadd.f32 %v32, %v520
  %v595 = vadd.f32 %v36, %v589
  %v596 = vadd.f32 %v40, %v591
  %v597 = vld [vmem:[%s0 + $0x8] sm:$0xff]
  %v599 = vsel %vm274, %v597, 0
  %601 = vmatprep.subr.mxu0 %v259
  %602 = vmatpush1.msra.mxu0 %v258
  %603 = vmatprep.subr.mxu0 %v263
  %604 = vmatpush1.msra.mxu0 %v262
  %605 = vmatprep.subr.mxu0 %v267
  %606 = vmatpush1.msra.mxu0 %v266
  %607 = vmatprep.subr.mxu0 %v271
  %608 = vmatpush1.msra.mxu0 %v270
  %609 = vmatprep.subr.mxu0 0.0
  %610 = vmatpush1.msra.mxu0 0.0
  %611 = vmatprep.subr.mxu0 0.0
  %612 = vmatpush1.msra.mxu0 0.0
  %613 = vmatprep.subr.mxu0 0.0
  %614 = vmatpush1.msra.mxu0 0.0
  %615 = vmatprep.subr.mxu0 0.0
  %616 = vmatpush1.msra.mxu0 0.0
  %617 = vmatprep.subr.mxu0 0.0
  %618 = vmatpush1.msra.mxu0 0.0
  %619 = vmatprep.subr.mxu0 0.0
  %620 = vmatpush1.msra.mxu0 0.0
  %621 = vmatprep.subr.mxu0 0.0
  %622 = vmatpush1.msra.mxu0 0.0
  %623 = vmatprep.subr.mxu0 0.0
  %624 = vmatpush1.msra.mxu0 0.0
  %625 = vmatprep.subr.mxu0 0.0
  %626 = vmatpush1.msra.mxu0 0.0
  %627 = vmatprep.subr.mxu0 0.0
  %628 = vmatpush1.msra.mxu0 0.0
  %629 = vmatprep.subr.mxu0 0.0
  %630 = vmatpush1.msra.mxu0 0.0
  %631 = vmatprep.subr.mxu0 0.0
  %632 = vmatpush1.msra.mxu0 0.0
  %633 = vmatprep.subr.mxu0 0.0
  %634 = vmatpush1.msra.mxu0 0.0
  %635 = vmatprep.subr.mxu0 0.0
  %636 = vmatpush1.msra.mxu0 0.0
  %637 = vmatprep.subr.mxu0 0.0
  %638 = vmatpush1.msra.mxu0 0.0
  %639 = vmatprep.subr.mxu0 0.0
  %640 = vmatpush1.msra.mxu0 0.0
  %641 = vmatprep.subr.mxu0 0.0
  %642 = vmatpush1.msra.mxu0 0.0
  %643 = vmatprep.subr.mxu0 0.0
  %644 = vmatpush1.msra.mxu0 0.0
  %645 = vmatprep.subr.mxu0 0.0
  %646 = vmatpush1.msra.mxu0 0.0
  %647 = vmatprep.subr.mxu0 0.0
  %648 = vmatpush1.msra.mxu0 0.0
  %649 = vmatprep.subr.mxu0 0.0
  %650 = vmatpush1.msra.mxu0 0.0
  %651 = vmatprep.subr.mxu0 0.0
  %652 = vmatpush1.msra.mxu0 0.0
  %653 = vmatprep.subr.mxu0 0.0
  %654 = vmatpush1.msra.mxu0 0.0
  %655 = vmatprep.subr.mxu0 0.0
  %656 = vmatpush1.msra.mxu0 0.0
  %657 = vmatprep.subr.mxu0 0.0
  %658 = vmatpush1.msra.mxu0 0.0
  %659 = vmatprep.subr.mxu0 0.0
  %660 = vmatpush1.msra.mxu0 0.0
  %661 = vmatprep.subr.mxu0 0.0
  %662 = vmatpush1.msra.mxu0 0.0
  %663 = vmatprep.subr.mxu0 0.0
  %664 = vmatpush1.msra.mxu0 0.0
  %665 = vmatprep.mubr.f32.mxu0 0.0
  %666 = vmatmul.mubr.f32.gmra.mrb[0].mxu0 %v599
  %v667 = vpop.f32.mrb[0].mxu0
  %v668 = vadd.f32 0.0, %v667
  %v669 = vpop.f32.mrb[0].mxu0
  %v670 = vadd.f32 0.0, %v669
  %671 = vdwg.mxu0
  %672 = vmatprep.subr.mxu0 %v261
  %673 = vmatpush1.msra.mxu0 %v260
  %674 = vmatprep.subr.mxu0 %v265
  %675 = vmatpush1.msra.mxu0 %v264
  %676 = vmatprep.subr.mxu0 %v269
  %677 = vmatpush1.msra.mxu0 %v268
  %678 = vmatprep.subr.mxu0 %v273
  %679 = vmatpush1.msra.mxu0 %v272
  %680 = vmatprep.subr.mxu0 0.0
  %681 = vmatpush1.msra.mxu0 0.0
  %682 = vmatprep.subr.mxu0 0.0
  %683 = vmatpush1.msra.mxu0 0.0
  %684 = vmatprep.subr.mxu0 0.0
  %685 = vmatpush1.msra.mxu0 0.0
  %686 = vmatprep.subr.mxu0 0.0
  %687 = vmatpush1.msra.mxu0 0.0
  %688 = vmatprep.subr.mxu0 0.0
  %689 = vmatpush1.msra.mxu0 0.0
  %690 = vmatprep.subr.mxu0 0.0
  %691 = vmatpush1.msra.mxu0 0.0
  %692 = vmatprep.subr.mxu0 0.0
  %693 = vmatpush1.msra.mxu0 0.0
  %694 = vmatprep.subr.mxu0 0.0
  %695 = vmatpush1.msra.mxu0 0.0
  %696 = vmatprep.subr.mxu0 0.0
  %697 = vmatpush1.msra.mxu0 0.0
  %698 = vmatprep.subr.mxu0 0.0
  %699 = vmatpush1.msra.mxu0 0.0
  %700 = vmatprep.subr.mxu0 0.0
  %701 = vmatpush1.msra.mxu0 0.0
  %702 = vmatprep.subr.mxu0 0.0
  %703 = vmatpush1.msra.mxu0 0.0
  %704 = vmatprep.subr.mxu0 0.0
  %705 = vmatpush1.msra.mxu0 0.0
  %706 = vmatprep.subr.mxu0 0.0
  %707 = vmatpush1.msra.mxu0 0.0
  %708 = vmatprep.subr.mxu0 0.0
  %709 = vmatpush1.msra.mxu0 0.0
  %710 = vmatprep.subr.mxu0 0.0
  %711 = vmatpush1.msra.mxu0 0.0
  %712 = vmatprep.subr.mxu0 0.0
  %713 = vmatpush1.msra.mxu0 0.0
  %714 = vmatprep.subr.mxu0 0.0
  %715 = vmatpush1.msra.mxu0 0.0
  %716 = vmatprep.subr.mxu0 0.0
  %717 = vmatpush1.msra.mxu0 0.0
  %718 = vmatprep.subr.mxu0 0.0
  %719 = vmatpush1.msra.mxu0 0.0
  %720 = vmatprep.subr.mxu0 0.0
  %721 = vmatpush1.msra.mxu0 0.0
  %722 = vmatprep.subr.mxu0 0.0
  %723 = vmatpush1.msra.mxu0 0.0
  %724 = vmatprep.subr.mxu0 0.0
  %725 = vmatpush1.msra.mxu0 0.0
  %726 = vmatprep.subr.mxu0 0.0
  %727 = vmatpush1.msra.mxu0 0.0
  %728 = vmatprep.subr.mxu0 0.0
  %729 = vmatpush1.msra.mxu0 0.0
  %730 = vmatprep.subr.mxu0 0.0
  %731 = vmatpush1.msra.mxu0 0.0
  %732 = vmatprep.subr.mxu0 0.0
  %733 = vmatpush1.msra.mxu0 0.0
  %734 = vmatprep.subr.mxu0 0.0
  %735 = vmatpush1.msra.mxu0 0.0
  %736 = vmatprep.mubr.f32.mxu0 0.0
  %737 = vmatmul.mubr.f32.gmra.mrb[0].mxu0 %v599
  %v738 = vpop.f32.mrb[0].mxu0
  %v739 = vadd.f32 0.0, %v738
  %v740 = vpop.f32.mrb[0].mxu0
  %v741 = vadd.f32 0.0, %v740
  %742 = vdwg.mxu0
  %v743 = vadd.f32 %v593, %v668
  %v744 = vadd.f32 %v594, %v670
  %v745 = vadd.f32 %v595, %v739
  %v746 = vadd.f32 %v596, %v741
  %v747 = vxor.u32 %v743, 2147483648
  %v748 = vxor.u32 %v744, 2147483648
  %v749 = vmul.f32 %v747, 1.442695
  %v750 = vpow.pop %v749
  %v751 = vmul.f32 %v748, 1.442695
  %v752 = vpow.pop %v751
  %v753 = vadd.f32 %v750, 1.0
  %v754 = vadd.f32 %v752, 1.0
  %v755 = vrcp.pop %v753
  %v756 = vmul.f32 1.0, %v755
  %v757 = vrcp.pop %v754
  %v758 = vmul.f32 1.0, %v757
  %v759 = vxor.u32 %v746, 2147483648
  %v760 = vmul.f32 %v759, 1.442695
  %v761 = vpow.pop %v760
  %v762 = vadd.f32 %v761, 1.0
  %v763 = vrcp.pop %v762
  %v764 = vmul.f32 1.0, %v763
  %v765 = vtanh.pop %v745
  %v766 = vmul.f32 %v758, %v449
  %v767 = vmul.f32 %v756, %v765
  %v768 = vadd.f32 %v766, %v767
  %v769 = vtanh.pop %v768
  %v770 = vmul.f32 %v764, %v769
  %vm771 = vcmp.lt.s32.totalorder %v46, 64
  %v772 = vsel %vm771, %v768, %v449
  %v773 = vsel %vm771, %v770, %v450
  %774 = vmatprep.subr.mxu0 %v48
  %775 = vmatpush1.msra.mxu0 %v47
  %776 = vmatprep.subr.mxu0 %v52
  %777 = vmatpush1.msra.mxu0 %v51
  %778 = vmatprep.subr.mxu0 %v56
  %779 = vmatpush1.msra.mxu0 %v55
  %780 = vmatprep.subr.mxu0 %v60
  %781 = vmatpush1.msra.mxu0 %v59
  %782 = vmatprep.subr.mxu0 %v64
  %783 = vmatpush1.msra.mxu0 %v63
  %784 = vmatprep.subr.mxu0 %v68
  %785 = vmatpush1.msra.mxu0 %v67
  %786 = vmatprep.subr.mxu0 %v72
  %787 = vmatpush1.msra.mxu0 %v71
  %788 = vmatprep.subr.mxu0 %v76
  %789 = vmatpush1.msra.mxu0 %v75
  %790 = vmatprep.subr.mxu0 %v80
  %791 = vmatpush1.msra.mxu0 %v79
  %792 = vmatprep.subr.mxu0 %v84
  %793 = vmatpush1.msra.mxu0 %v83
  %794 = vmatprep.subr.mxu0 %v88
  %795 = vmatpush1.msra.mxu0 %v87
  %796 = vmatprep.subr.mxu0 %v92
  %797 = vmatpush1.msra.mxu0 %v91
  %798 = vmatprep.subr.mxu0 %v96
  %799 = vmatpush1.msra.mxu0 %v95
  %800 = vmatprep.subr.mxu0 %v100
  %801 = vmatpush1.msra.mxu0 %v99
  %802 = vmatprep.subr.mxu0 %v104
  %803 = vmatpush1.msra.mxu0 %v103
  %804 = vmatprep.subr.mxu0 %v108
  %805 = vmatpush1.msra.mxu0 %v107
  %806 = vmatprep.subr.mxu0 0.0
  %807 = vmatpush1.msra.mxu0 0.0
  %808 = vmatprep.subr.mxu0 0.0
  %809 = vmatpush1.msra.mxu0 0.0
  %810 = vmatprep.subr.mxu0 0.0
  %811 = vmatpush1.msra.mxu0 0.0
  %812 = vmatprep.subr.mxu0 0.0
  %813 = vmatpush1.msra.mxu0 0.0
  %814 = vmatprep.subr.mxu0 0.0
  %815 = vmatpush1.msra.mxu0 0.0
  %816 = vmatprep.subr.mxu0 0.0
  %817 = vmatpush1.msra.mxu0 0.0
  %818 = vmatprep.subr.mxu0 0.0
  %819 = vmatpush1.msra.mxu0 0.0
  %820 = vmatprep.subr.mxu0 0.0
  %821 = vmatpush1.msra.mxu0 0.0
  %822 = vmatprep.subr.mxu0 0.0
  %823 = vmatpush1.msra.mxu0 0.0
  %824 = vmatprep.subr.mxu0 0.0
  %825 = vmatpush1.msra.mxu0 0.0
  %826 = vmatprep.subr.mxu0 0.0
  %827 = vmatpush1.msra.mxu0 0.0
  %828 = vmatprep.subr.mxu0 0.0
  %829 = vmatpush1.msra.mxu0 0.0
  %830 = vmatprep.subr.mxu0 0.0
  %831 = vmatpush1.msra.mxu0 0.0
  %832 = vmatprep.subr.mxu0 0.0
  %833 = vmatpush1.msra.mxu0 0.0
  %834 = vmatprep.subr.mxu0 0.0
  %835 = vmatpush1.msra.mxu0 0.0
  %836 = vmatprep.subr.mxu0 0.0
  %837 = vmatpush1.msra.mxu0 0.0
  %838 = vmatprep.mubr.f32.mxu0 0.0
  %839 = vmatmul.mubr.f32.gmra.mrb[0].mxu0 %v773
  %v840 = vpop.f32.mrb[0].mxu0
  %v841 = vadd.f32 0.0, %v840
  %v842 = vpop.f32.mrb[0].mxu0
  %v843 = vadd.f32 0.0, %v842
  %844 = vdwg.mxu0
  %845 = vmatprep.subr.mxu0 %v50
  %846 = vmatpush1.msra.mxu0 %v49
  %847 = vmatprep.subr.mxu0 %v54
  %848 = vmatpush1.msra.mxu0 %v53
  %849 = vmatprep.subr.mxu0 %v58
  %850 = vmatpush1.msra.mxu0 %v57
  %851 = vmatprep.subr.mxu0 %v62
  %852 = vmatpush1.msra.mxu0 %v61
  %853 = vmatprep.subr.mxu0 %v66
  %854 = vmatpush1.msra.mxu0 %v65
  %855 = vmatprep.subr.mxu0 %v70
  %856 = vmatpush1.msra.mxu0 %v69
  %857 = vmatprep.subr.mxu0 %v74
  %858 = vmatpush1.msra.mxu0 %v73
  %859 = vmatprep.subr.mxu0 %v78
  %860 = vmatpush1.msra.mxu0 %v77
  %861 = vmatprep.subr.mxu0 %v82
  %862 = vmatpush1.msra.mxu0 %v81
  %863 = vmatprep.subr.mxu0 %v86
  %864 = vmatpush1.msra.mxu0 %v85
  %865 = vmatprep.subr.mxu0 %v90
  %866 = vmatpush1.msra.mxu0 %v89
  %867 = vmatprep.subr.mxu0 %v94
  %868 = vmatpush1.msra.mxu0 %v93
  %869 = vmatprep.subr.mxu0 %v98
  %870 = vmatpush1.msra.mxu0 %v97
  %871 = vmatprep.subr.mxu0 %v102
  %872 = vmatpush1.msra.mxu0 %v101
  %873 = vmatprep.subr.mxu0 %v106
  %874 = vmatpush1.msra.mxu0 %v105
  %875 = vmatprep.subr.mxu0 %v110
  %876 = vmatpush1.msra.mxu0 %v109
  %877 = vmatprep.subr.mxu0 0.0
  %878 = vmatpush1.msra.mxu0 0.0
  %879 = vmatprep.subr.mxu0 0.0
  %880 = vmatpush1.msra.mxu0 0.0
  %881 = vmatprep.subr.mxu0 0.0
  %882 = vmatpush1.msra.mxu0 0.0
  %883 = vmatprep.subr.mxu0 0.0
  %884 = vmatpush1.msra.mxu0 0.0
  %885 = vmatprep.subr.mxu0 0.0
  %886 = vmatpush1.msra.mxu0 0.0
  %887 = vmatprep.subr.mxu0 0.0
  %888 = vmatpush1.msra.mxu0 0.0
  %889 = vmatprep.subr.mxu0 0.0
  %890 = vmatpush1.msra.mxu0 0.0
  %891 = vmatprep.subr.mxu0 0.0
  %892 = vmatpush1.msra.mxu0 0.0
  %893 = vmatprep.subr.mxu0 0.0
  %894 = vmatpush1.msra.mxu0 0.0
  %895 = vmatprep.subr.mxu0 0.0
  %896 = vmatpush1.msra.mxu0 0.0
  %897 = vmatprep.subr.mxu0 0.0
  %898 = vmatpush1.msra.mxu0 0.0
  %899 = vmatprep.subr.mxu0 0.0
  %900 = vmatpush1.msra.mxu0 0.0
  %901 = vmatprep.subr.mxu0 0.0
  %902 = vmatpush1.msra.mxu0 0.0
  %903 = vmatprep.subr.mxu0 0.0
  %904 = vmatpush1.msra.mxu0 0.0
  %905 = vmatprep.subr.mxu0 0.0
  %906 = vmatpush1.msra.mxu0 0.0
  %907 = vmatprep.subr.mxu0 0.0
  %908 = vmatpush1.msra.mxu0 0.0
  %909 = vmatprep.mubr.f32.mxu0 0.0
  %910 = vmatmul.mubr.f32.gmra.mrb[0].mxu0 %v773
  %v911 = vpop.f32.mrb[0].mxu0
  %v912 = vadd.f32 0.0, %v911
  %v913 = vpop.f32.mrb[0].mxu0
  %v914 = vadd.f32 0.0, %v913
  %915 = vdwg.mxu0
  %v916 = vadd.f32 %v28, %v841
  %v917 = vadd.f32 %v32, %v843
  %v918 = vadd.f32 %v36, %v912
  %v919 = vadd.f32 %v40, %v914
  %v920 = vld [vmem:[%s0 + $0x10] sm:$0xff]
  %v922 = vsel %vm274, %v920, 0
  %924 = vmatprep.subr.mxu0 %v259
  %925 = vmatpush1.msra.mxu0 %v258
  %926 = vmatprep.subr.mxu0 %v263
  %927 = vmatpush1.msra.mxu0 %v262
  %928 = vmatprep.subr.mxu0 %v267
  %929 = vmatpush1.msra.mxu0 %v266
  %930 = vmatprep.subr.mxu0 %v271
  %931 = vmatpush1.msra.mxu0 %v270
  %932 = vmatprep.subr.mxu0 0.0
  %933 = vmatpush1.msra.mxu0 0.0
  %934 = vmatprep.subr.mxu0 0.0
  %935 = vmatpush1.msra.mxu0 0.0
  %936 = vmatprep.subr.mxu0 0.0
  %937 = vmatpush1.msra.mxu0 0.0
  %938 = vmatprep.subr.mxu0 0.0
  %939 = vmatpush1.msra.mxu0 0.0
  %940 = vmatprep.subr.mxu0 0.0
  %941 = vmatpush1.msra.mxu0 0.0
  %942 = vmatprep.subr.mxu0 0.0
  %943 = vmatpush1.msra.mxu0 0.0
  %944 = vmatprep.subr.mxu0 0.0
  %945 = vmatpush1.msra.mxu0 0.0
  %946 = vmatprep.subr.mxu0 0.0
  %947 = vmatpush1.msra.mxu0 0.0
  %948 = vmatprep.subr.mxu0 0.0
  %949 = vmatpush1.msra.mxu0 0.0
  %950 = vmatprep.subr.mxu0 0.0
  %951 = vmatpush1.msra.mxu0 0.0
  %952 = vmatprep.subr.mxu0 0.0
  %953 = vmatpush1.msra.mxu0 0.0
  %954 = vmatprep.subr.mxu0 0.0
  %955 = vmatpush1.msra.mxu0 0.0
  %956 = vmatprep.subr.mxu0 0.0
  %957 = vmatpush1.msra.mxu0 0.0
  %958 = vmatprep.subr.mxu0 0.0
  %959 = vmatpush1.msra.mxu0 0.0
  %960 = vmatprep.subr.mxu0 0.0
  %961 = vmatpush1.msra.mxu0 0.0
  %962 = vmatprep.subr.mxu0 0.0
  %963 = vmatpush1.msra.mxu0 0.0
  %964 = vmatprep.subr.mxu0 0.0
  %965 = vmatpush1.msra.mxu0 0.0
  %966 = vmatprep.subr.mxu0 0.0
  %967 = vmatpush1.msra.mxu0 0.0
  %968 = vmatprep.subr.mxu0 0.0
  %969 = vmatpush1.msra.mxu0 0.0
  %970 = vmatprep.subr.mxu0 0.0
  %971 = vmatpush1.msra.mxu0 0.0
  %972 = vmatprep.subr.mxu0 0.0
  %973 = vmatpush1.msra.mxu0 0.0
  %974 = vmatprep.subr.mxu0 0.0
  %975 = vmatpush1.msra.mxu0 0.0
  %976 = vmatprep.subr.mxu0 0.0
  %977 = vmatpush1.msra.mxu0 0.0
  %978 = vmatprep.subr.mxu0 0.0
  %979 = vmatpush1.msra.mxu0 0.0
  %980 = vmatprep.subr.mxu0 0.0
  %981 = vmatpush1.msra.mxu0 0.0
  %982 = vmatprep.subr.mxu0 0.0
  %983 = vmatpush1.msra.mxu0 0.0
  %984 = vmatprep.subr.mxu0 0.0
  %985 = vmatpush1.msra.mxu0 0.0
  %986 = vmatprep.subr.mxu0 0.0
  %987 = vmatpush1.msra.mxu0 0.0
  %988 = vmatprep.mubr.f32.mxu0 0.0
  %989 = vmatmul.mubr.f32.gmra.mrb[0].mxu0 %v922
  %v990 = vpop.f32.mrb[0].mxu0
  %v991 = vadd.f32 0.0, %v990
  %v992 = vpop.f32.mrb[0].mxu0
  %v993 = vadd.f32 0.0, %v992
  %994 = vdwg.mxu0
  %995 = vmatprep.subr.mxu0 %v261
  %996 = vmatpush1.msra.mxu0 %v260
  %997 = vmatprep.subr.mxu0 %v265
  %998 = vmatpush1.msra.mxu0 %v264
  %999 = vmatprep.subr.mxu0 %v269
  %1000 = vmatpush1.msra.mxu0 %v268
  %1001 = vmatprep.subr.mxu0 %v273
  %1002 = vmatpush1.msra.mxu0 %v272
  %1003 = vmatprep.subr.mxu0 0.0
  %1004 = vmatpush1.msra.mxu0 0.0
  %1005 = vmatprep.subr.mxu0 0.0
  %1006 = vmatpush1.msra.mxu0 0.0
  %1007 = vmatprep.subr.mxu0 0.0
  %1008 = vmatpush1.msra.mxu0 0.0
  %1009 = vmatprep.subr.mxu0 0.0
  %1010 = vmatpush1.msra.mxu0 0.0
  %1011 = vmatprep.subr.mxu0 0.0
  %1012 = vmatpush1.msra.mxu0 0.0
  %1013 = vmatprep.subr.mxu0 0.0
  %1014 = vmatpush1.msra.mxu0 0.0
  %1015 = vmatprep.subr.mxu0 0.0
  %1016 = vmatpush1.msra.mxu0 0.0
  %1017 = vmatprep.subr.mxu0 0.0
  %1018 = vmatpush1.msra.mxu0 0.0
  %1019 = vmatprep.subr.mxu0 0.0
  %1020 = vmatpush1.msra.mxu0 0.0
  %1021 = vmatprep.subr.mxu0 0.0
  %1022 = vmatpush1.msra.mxu0 0.0
  %1023 = vmatprep.subr.mxu0 0.0
  %1024 = vmatpush1.msra.mxu0 0.0
  %1025 = vmatprep.subr.mxu0 0.0
  %1026 = vmatpush1.msra.mxu0 0.0
  %1027 = vmatprep.subr.mxu0 0.0
  %1028 = vmatpush1.msra.mxu0 0.0
  %1029 = vmatprep.subr.mxu0 0.0
  %1030 = vmatpush1.msra.mxu0 0.0
  %1031 = vmatprep.subr.mxu0 0.0
  %1032 = vmatpush1.msra.mxu0 0.0
  %1033 = vmatprep.subr.mxu0 0.0
  %1034 = vmatpush1.msra.mxu0 0.0
  %1035 = vmatprep.subr.mxu0 0.0
  %1036 = vmatpush1.msra.mxu0 0.0
  %1037 = vmatprep.subr.mxu0 0.0
  %1038 = vmatpush1.msra.mxu0 0.0
  %1039 = vmatprep.subr.mxu0 0.0
  %1040 = vmatpush1.msra.mxu0 0.0
  %1041 = vmatprep.subr.mxu0 0.0
  %1042 = vmatpush1.msra.mxu0 0.0
  %1043 = vmatprep.subr.mxu0 0.0
  %1044 = vmatpush1.msra.mxu0 0.0
  %1045 = vmatprep.subr.mxu0 0.0
  %1046 = vmatpush1.msra.mxu0 0.0
  %1047 = vmatprep.subr.mxu0 0.0
  %1048 = vmatpush1.msra.mxu0 0.0
  %1049 = vmatprep.subr.mxu0 0.0
  %1050 = vmatpush1.msra.mxu0 0.0
  %1051 = vmatprep.subr.mxu0 0.0
  %1052 = vmatpush1.msra.mxu0 0.0
  %1053 = vmatprep.subr.mxu0 0.0
  %1054 = vmatpush1.msra.mxu0 0.0
  %1055 = vmatprep.subr.mxu0 0.0
  %1056 = vmatpush1.msra.mxu0 0.0
  %1057 = vmatprep.subr.mxu0 0.0
  %1058 = vmatpush1.msra.mxu0 0.0
  %1059 = vmatprep.mubr.f32.mxu0 0.0
  %1060 = vmatmul.mubr.f32.gmra.mrb[0].mxu0 %v922
  %v1061 = vpop.f32.mrb[0].mxu0
  %v1062 = vadd.f32 0.0, %v1061
  %v1063 = vpop.f32.mrb[0].mxu0
  %v1064 = vadd.f32 0.0, %v1063
  %1065 = vdwg.mxu0
  %v1066 = vadd.f32 %v916, %v991
  %v1067 = vadd.f32 %v917, %v993
  %v1068 = vadd.f32 %v918, %v1062
  %v1069 = vadd.f32 %v919, %v1064
  %v1070 = vxor.u32 %v1066, 2147483648
  %v1071 = vxor.u32 %v1067, 2147483648
  %v1072 = vmul.f32 %v1070, 1.442695
  %v1073 = vpow.pop %v1072
  %v1074 = vmul.f32 %v1071, 1.442695
  %v1075 = vpow.pop %v1074
  %v1076 = vadd.f32 %v1073, 1.0
  %v1077 = vadd.f32 %v1075, 1.0
  %v1078 = vrcp.pop %v1076
  %v1079 = vmul.f32 1.0, %v1078
  %v1080 = vrcp.pop %v1077
  %v1081 = vmul.f32 1.0, %v1080
  %v1082 = vxor.u32 %v1069, 2147483648
  %v1083 = vmul.f32 %v1082, 1.442695
  %v1084 = vpow.pop %v1083
  %v1085 = vadd.f32 %v1084, 1.0
  %v1086 = vrcp.pop %v1085
  %v1087 = vmul.f32 1.0, %v1086
  %v1088 = vtanh.pop %v1068
  %v1089 = vmul.f32 %v1081, %v772
  %v1090 = vmul.f32 %v1079, %v1088
  %v1091 = vadd.f32 %v1089, %v1090
  %v1092 = vtanh.pop %v1091
  %v1093 = vmul.f32 %v1087, %v1092
  %vm1094 = vcmp.lt.s32.totalorder %v46, 96
  %v1095 = vsel %vm1094, %v1091, %v772
  %v1096 = vsel %vm1094, %v1093, %v773
  %1097 = vmatprep.subr.mxu0 %v48
  %1098 = vmatpush1.msra.mxu0 %v47
  %1099 = vmatprep.subr.mxu0 %v52
  %1100 = vmatpush1.msra.mxu0 %v51
  %1101 = vmatprep.subr.mxu0 %v56
  %1102 = vmatpush1.msra.mxu0 %v55
  %1103 = vmatprep.subr.mxu0 %v60
  %1104 = vmatpush1.msra.mxu0 %v59
  %1105 = vmatprep.subr.mxu0 %v64
  %1106 = vmatpush1.msra.mxu0 %v63
  %1107 = vmatprep.subr.mxu0 %v68
  %1108 = vmatpush1.msra.mxu0 %v67
  %1109 = vmatprep.subr.mxu0 %v72
  %1110 = vmatpush1.msra.mxu0 %v71
  %1111 = vmatprep.subr.mxu0 %v76
  %1112 = vmatpush1.msra.mxu0 %v75
  %1113 = vmatprep.subr.mxu0 %v80
  %1114 = vmatpush1.msra.mxu0 %v79
  %1115 = vmatprep.subr.mxu0 %v84
  %1116 = vmatpush1.msra.mxu0 %v83
  %1117 = vmatprep.subr.mxu0 %v88
  %1118 = vmatpush1.msra.mxu0 %v87
  %1119 = vmatprep.subr.mxu0 %v92
  %1120 = vmatpush1.msra.mxu0 %v91
  %1121 = vmatprep.subr.mxu0 %v96
  %1122 = vmatpush1.msra.mxu0 %v95
  %1123 = vmatprep.subr.mxu0 %v100
  %1124 = vmatpush1.msra.mxu0 %v99
  %1125 = vmatprep.subr.mxu0 %v104
  %1126 = vmatpush1.msra.mxu0 %v103
  %1127 = vmatprep.subr.mxu0 %v108
  %1128 = vmatpush1.msra.mxu0 %v107
  %1129 = vmatprep.subr.mxu0 0.0
  %1130 = vmatpush1.msra.mxu0 0.0
  %1131 = vmatprep.subr.mxu0 0.0
  %1132 = vmatpush1.msra.mxu0 0.0
  %1133 = vmatprep.subr.mxu0 0.0
  %1134 = vmatpush1.msra.mxu0 0.0
  %1135 = vmatprep.subr.mxu0 0.0
  %1136 = vmatpush1.msra.mxu0 0.0
  %1137 = vmatprep.subr.mxu0 0.0
  %1138 = vmatpush1.msra.mxu0 0.0
  %1139 = vmatprep.subr.mxu0 0.0
  %1140 = vmatpush1.msra.mxu0 0.0
  %1141 = vmatprep.subr.mxu0 0.0
  %1142 = vmatpush1.msra.mxu0 0.0
  %1143 = vmatprep.subr.mxu0 0.0
  %1144 = vmatpush1.msra.mxu0 0.0
  %1145 = vmatprep.subr.mxu0 0.0
  %1146 = vmatpush1.msra.mxu0 0.0
  %1147 = vmatprep.subr.mxu0 0.0
  %1148 = vmatpush1.msra.mxu0 0.0
  %1149 = vmatprep.subr.mxu0 0.0
  %1150 = vmatpush1.msra.mxu0 0.0
  %1151 = vmatprep.subr.mxu0 0.0
  %1152 = vmatpush1.msra.mxu0 0.0
  %1153 = vmatprep.subr.mxu0 0.0
  %1154 = vmatpush1.msra.mxu0 0.0
  %1155 = vmatprep.subr.mxu0 0.0
  %1156 = vmatpush1.msra.mxu0 0.0
  %1157 = vmatprep.subr.mxu0 0.0
  %1158 = vmatpush1.msra.mxu0 0.0
  %1159 = vmatprep.subr.mxu0 0.0
  %1160 = vmatpush1.msra.mxu0 0.0
  %1161 = vmatprep.mubr.f32.mxu0 0.0
  %1162 = vmatmul.mubr.f32.gmra.mrb[0].mxu0 %v1096
  %v1163 = vpop.f32.mrb[0].mxu0
  %v1164 = vadd.f32 0.0, %v1163
  %v1165 = vpop.f32.mrb[0].mxu0
  %v1166 = vadd.f32 0.0, %v1165
  %1167 = vdwg.mxu0
  %1168 = vmatprep.subr.mxu0 %v50
  %1169 = vmatpush1.msra.mxu0 %v49
  %1170 = vmatprep.subr.mxu0 %v54
  %1171 = vmatpush1.msra.mxu0 %v53
  %1172 = vmatprep.subr.mxu0 %v58
  %1173 = vmatpush1.msra.mxu0 %v57
  %1174 = vmatprep.subr.mxu0 %v62
  %1175 = vmatpush1.msra.mxu0 %v61
  %1176 = vmatprep.subr.mxu0 %v66
  %1177 = vmatpush1.msra.mxu0 %v65
  %1178 = vmatprep.subr.mxu0 %v70
  %1179 = vmatpush1.msra.mxu0 %v69
  %1180 = vmatprep.subr.mxu0 %v74
  %1181 = vmatpush1.msra.mxu0 %v73
  %1182 = vmatprep.subr.mxu0 %v78
  %1183 = vmatpush1.msra.mxu0 %v77
  %1184 = vmatprep.subr.mxu0 %v82
  %1185 = vmatpush1.msra.mxu0 %v81
  %1186 = vmatprep.subr.mxu0 %v86
  %1187 = vmatpush1.msra.mxu0 %v85
  %1188 = vmatprep.subr.mxu0 %v90
  %1189 = vmatpush1.msra.mxu0 %v89
  %1190 = vmatprep.subr.mxu0 %v94
  %1191 = vmatpush1.msra.mxu0 %v93
  %1192 = vmatprep.subr.mxu0 %v98
  %1193 = vmatpush1.msra.mxu0 %v97
  %1194 = vmatprep.subr.mxu0 %v102
  %1195 = vmatpush1.msra.mxu0 %v101
  %1196 = vmatprep.subr.mxu0 %v106
  %1197 = vmatpush1.msra.mxu0 %v105
  %1198 = vmatprep.subr.mxu0 %v110
  %1199 = vmatpush1.msra.mxu0 %v109
  %1200 = vmatprep.subr.mxu0 0.0
  %1201 = vmatpush1.msra.mxu0 0.0
  %1202 = vmatprep.subr.mxu0 0.0
  %1203 = vmatpush1.msra.mxu0 0.0
  %1204 = vmatprep.subr.mxu0 0.0
  %1205 = vmatpush1.msra.mxu0 0.0
  %1206 = vmatprep.subr.mxu0 0.0
  %1207 = vmatpush1.msra.mxu0 0.0
  %1208 = vmatprep.subr.mxu0 0.0
  %1209 = vmatpush1.msra.mxu0 0.0
  %1210 = vmatprep.subr.mxu0 0.0
  %1211 = vmatpush1.msra.mxu0 0.0
  %1212 = vmatprep.subr.mxu0 0.0
  %1213 = vmatpush1.msra.mxu0 0.0
  %1214 = vmatprep.subr.mxu0 0.0
  %1215 = vmatpush1.msra.mxu0 0.0
  %1216 = vmatprep.subr.mxu0 0.0
  %1217 = vmatpush1.msra.mxu0 0.0
  %1218 = vmatprep.subr.mxu0 0.0
  %1219 = vmatpush1.msra.mxu0 0.0
  %1220 = vmatprep.subr.mxu0 0.0
  %1221 = vmatpush1.msra.mxu0 0.0
  %1222 = vmatprep.subr.mxu0 0.0
  %1223 = vmatpush1.msra.mxu0 0.0
  %1224 = vmatprep.subr.mxu0 0.0
  %1225 = vmatpush1.msra.mxu0 0.0
  %1226 = vmatprep.subr.mxu0 0.0
  %1227 = vmatpush1.msra.mxu0 0.0
  %1228 = vmatprep.subr.mxu0 0.0
  %1229 = vmatpush1.msra.mxu0 0.0
  %1230 = vmatprep.subr.mxu0 0.0
  %1231 = vmatpush1.msra.mxu0 0.0
  %1232 = vmatprep.mubr.f32.mxu0 0.0
  %1233 = vmatmul.mubr.f32.gmra.mrb[0].mxu0 %v1096
  %v1234 = vpop.f32.mrb[0].mxu0
  %v1235 = vadd.f32 0.0, %v1234
  %v1236 = vpop.f32.mrb[0].mxu0
  %v1237 = vadd.f32 0.0, %v1236
  %1238 = vdwg.mxu0
  %v1239 = vadd.f32 %v28, %v1164
  %v1240 = vadd.f32 %v32, %v1166
  %v1241 = vadd.f32 %v36, %v1235
  %v1242 = vadd.f32 %v40, %v1237
  %v1243 = vld [vmem:[%s0 + $0x18] sm:$0xff]
  %v1245 = vsel %vm274, %v1243, 0
  %1247 = vmatprep.subr.mxu0 %v259
  %1248 = vmatpush1.msra.mxu0 %v258
  %1249 = vmatprep.subr.mxu0 %v263
  %1250 = vmatpush1.msra.mxu0 %v262
  %1251 = vmatprep.subr.mxu0 %v267
  %1252 = vmatpush1.msra.mxu0 %v266
  %1253 = vmatprep.subr.mxu0 %v271
  %1254 = vmatpush1.msra.mxu0 %v270
  %1255 = vmatprep.subr.mxu0 0.0
  %1256 = vmatpush1.msra.mxu0 0.0
  %1257 = vmatprep.subr.mxu0 0.0
  %1258 = vmatpush1.msra.mxu0 0.0
  %1259 = vmatprep.subr.mxu0 0.0
  %1260 = vmatpush1.msra.mxu0 0.0
  %1261 = vmatprep.subr.mxu0 0.0
  %1262 = vmatpush1.msra.mxu0 0.0
  %1263 = vmatprep.subr.mxu0 0.0
  %1264 = vmatpush1.msra.mxu0 0.0
  %1265 = vmatprep.subr.mxu0 0.0
  %1266 = vmatpush1.msra.mxu0 0.0
  %1267 = vmatprep.subr.mxu0 0.0
  %1268 = vmatpush1.msra.mxu0 0.0
  %1269 = vmatprep.subr.mxu0 0.0
  %1270 = vmatpush1.msra.mxu0 0.0
  %1271 = vmatprep.subr.mxu0 0.0
  %1272 = vmatpush1.msra.mxu0 0.0
  %1273 = vmatprep.subr.mxu0 0.0
  %1274 = vmatpush1.msra.mxu0 0.0
  %1275 = vmatprep.subr.mxu0 0.0
  %1276 = vmatpush1.msra.mxu0 0.0
  %1277 = vmatprep.subr.mxu0 0.0
  %1278 = vmatpush1.msra.mxu0 0.0
  %1279 = vmatprep.subr.mxu0 0.0
  %1280 = vmatpush1.msra.mxu0 0.0
  %1281 = vmatprep.subr.mxu0 0.0
  %1282 = vmatpush1.msra.mxu0 0.0
  %1283 = vmatprep.subr.mxu0 0.0
  %1284 = vmatpush1.msra.mxu0 0.0
  %1285 = vmatprep.subr.mxu0 0.0
  %1286 = vmatpush1.msra.mxu0 0.0
  %1287 = vmatprep.subr.mxu0 0.0
  %1288 = vmatpush1.msra.mxu0 0.0
  %1289 = vmatprep.subr.mxu0 0.0
  %1290 = vmatpush1.msra.mxu0 0.0
  %1291 = vmatprep.subr.mxu0 0.0
  %1292 = vmatpush1.msra.mxu0 0.0
  %1293 = vmatprep.subr.mxu0 0.0
  %1294 = vmatpush1.msra.mxu0 0.0
  %1295 = vmatprep.subr.mxu0 0.0
  %1296 = vmatpush1.msra.mxu0 0.0
  %1297 = vmatprep.subr.mxu0 0.0
  %1298 = vmatpush1.msra.mxu0 0.0
  %1299 = vmatprep.subr.mxu0 0.0
  %1300 = vmatpush1.msra.mxu0 0.0
  %1301 = vmatprep.subr.mxu0 0.0
  %1302 = vmatpush1.msra.mxu0 0.0
  %1303 = vmatprep.subr.mxu0 0.0
  %1304 = vmatpush1.msra.mxu0 0.0
  %1305 = vmatprep.subr.mxu0 0.0
  %1306 = vmatpush1.msra.mxu0 0.0
  %1307 = vmatprep.subr.mxu0 0.0
  %1308 = vmatpush1.msra.mxu0 0.0
  %1309 = vmatprep.subr.mxu0 0.0
  %1310 = vmatpush1.msra.mxu0 0.0
  %1311 = vmatprep.mubr.f32.mxu0 0.0
  %1312 = vmatmul.mubr.f32.gmra.mrb[0].mxu0 %v1245
  %v1313 = vpop.f32.mrb[0].mxu0
  %v1314 = vadd.f32 0.0, %v1313
  %v1315 = vpop.f32.mrb[0].mxu0
  %v1316 = vadd.f32 0.0, %v1315
  %1317 = vdwg.mxu0
  %1318 = vmatprep.subr.mxu0 %v261
  %1319 = vmatpush1.msra.mxu0 %v260
  %1320 = vmatprep.subr.mxu0 %v265
  %1321 = vmatpush1.msra.mxu0 %v264
  %1322 = vmatprep.subr.mxu0 %v269
  %1323 = vmatpush1.msra.mxu0 %v268
  %1324 = vmatprep.subr.mxu0 %v273
  %1325 = vmatpush1.msra.mxu0 %v272
  %1326 = vmatprep.subr.mxu0 0.0
  %1327 = vmatpush1.msra.mxu0 0.0
  %1328 = vmatprep.subr.mxu0 0.0
  %1329 = vmatpush1.msra.mxu0 0.0
  %1330 = vmatprep.subr.mxu0 0.0
  %1331 = vmatpush1.msra.mxu0 0.0
  %1332 = vmatprep.subr.mxu0 0.0
  %1333 = vmatpush1.msra.mxu0 0.0
  %1334 = vmatprep.subr.mxu0 0.0
  %1335 = vmatpush1.msra.mxu0 0.0
  %1336 = vmatprep.subr.mxu0 0.0
  %1337 = vmatpush1.msra.mxu0 0.0
  %1338 = vmatprep.subr.mxu0 0.0
  %1339 = vmatpush1.msra.mxu0 0.0
  %1340 = vmatprep.subr.mxu0 0.0
  %1341 = vmatpush1.msra.mxu0 0.0
  %1342 = vmatprep.subr.mxu0 0.0
  %1343 = vmatpush1.msra.mxu0 0.0
  %1344 = vmatprep.subr.mxu0 0.0
  %1345 = vmatpush1.msra.mxu0 0.0
  %1346 = vmatprep.subr.mxu0 0.0
  %1347 = vmatpush1.msra.mxu0 0.0
  %1348 = vmatprep.subr.mxu0 0.0
  %1349 = vmatpush1.msra.mxu0 0.0
  %1350 = vmatprep.subr.mxu0 0.0
  %1351 = vmatpush1.msra.mxu0 0.0
  %1352 = vmatprep.subr.mxu0 0.0
  %1353 = vmatpush1.msra.mxu0 0.0
  %1354 = vmatprep.subr.mxu0 0.0
  %1355 = vmatpush1.msra.mxu0 0.0
  %1356 = vmatprep.subr.mxu0 0.0
  %1357 = vmatpush1.msra.mxu0 0.0
  %1358 = vmatprep.subr.mxu0 0.0
  %1359 = vmatpush1.msra.mxu0 0.0
  %1360 = vmatprep.subr.mxu0 0.0
  %1361 = vmatpush1.msra.mxu0 0.0
  %1362 = vmatprep.subr.mxu0 0.0
  %1363 = vmatpush1.msra.mxu0 0.0
  %1364 = vmatprep.subr.mxu0 0.0
  %1365 = vmatpush1.msra.mxu0 0.0
  %1366 = vmatprep.subr.mxu0 0.0
  %1367 = vmatpush1.msra.mxu0 0.0
  %1368 = vmatprep.subr.mxu0 0.0
  %1369 = vmatpush1.msra.mxu0 0.0
  %1370 = vmatprep.subr.mxu0 0.0
  %1371 = vmatpush1.msra.mxu0 0.0
  %1372 = vmatprep.subr.mxu0 0.0
  %1373 = vmatpush1.msra.mxu0 0.0
  %1374 = vmatprep.subr.mxu0 0.0
  %1375 = vmatpush1.msra.mxu0 0.0
  %1376 = vmatprep.subr.mxu0 0.0
  %1377 = vmatpush1.msra.mxu0 0.0
  %1378 = vmatprep.subr.mxu0 0.0
  %1379 = vmatpush1.msra.mxu0 0.0
  %1380 = vmatprep.subr.mxu0 0.0
  %1381 = vmatpush1.msra.mxu0 0.0
  %1382 = vmatprep.mubr.f32.mxu0 0.0
  %1383 = vmatmul.mubr.f32.gmra.mrb[0].mxu0 %v1245
  %v1384 = vpop.f32.mrb[0].mxu0
  %v1385 = vadd.f32 0.0, %v1384
  %v1386 = vpop.f32.mrb[0].mxu0
  %v1387 = vadd.f32 0.0, %v1386
  %1388 = vdwg.mxu0
  %v1389 = vadd.f32 %v1239, %v1314
  %v1390 = vadd.f32 %v1240, %v1316
  %v1391 = vadd.f32 %v1241, %v1385
  %v1392 = vadd.f32 %v1242, %v1387
  %v1393 = vxor.u32 %v1389, 2147483648
  %v1394 = vxor.u32 %v1390, 2147483648
  %v1395 = vmul.f32 %v1393, 1.442695
  %v1396 = vpow.pop %v1395
  %v1397 = vmul.f32 %v1394, 1.442695
  %v1398 = vpow.pop %v1397
  %v1399 = vadd.f32 %v1396, 1.0
  %v1400 = vadd.f32 %v1398, 1.0
  %v1401 = vrcp.pop %v1399
  %v1402 = vmul.f32 1.0, %v1401
  %v1403 = vrcp.pop %v1400
  %v1404 = vmul.f32 1.0, %v1403
  %v1405 = vxor.u32 %v1392, 2147483648
  %v1406 = vmul.f32 %v1405, 1.442695
  %v1407 = vpow.pop %v1406
  %v1408 = vadd.f32 %v1407, 1.0
  %v1409 = vrcp.pop %v1408
  %v1410 = vmul.f32 1.0, %v1409
  %v1411 = vtanh.pop %v1391
  %v1412 = vmul.f32 %v1404, %v1095
  %v1413 = vmul.f32 %v1402, %v1411
  %v1414 = vadd.f32 %v1412, %v1413
  %v1415 = vtanh.pop %v1414
  %v1416 = vmul.f32 %v1410, %v1415
  %1417 = vmatprep.subr.mxu0 %v48
  %1418 = vmatpush1.msra.mxu0 %v47
  %1419 = vmatprep.subr.mxu0 %v52
  %1420 = vmatpush1.msra.mxu0 %v51
  %1421 = vmatprep.subr.mxu0 %v56
  %1422 = vmatpush1.msra.mxu0 %v55
  %1423 = vmatprep.subr.mxu0 %v60
  %1424 = vmatpush1.msra.mxu0 %v59
  %1425 = vmatprep.subr.mxu0 %v64
  %1426 = vmatpush1.msra.mxu0 %v63
  %1427 = vmatprep.subr.mxu0 %v68
  %1428 = vmatpush1.msra.mxu0 %v67
  %1429 = vmatprep.subr.mxu0 %v72
  %1430 = vmatpush1.msra.mxu0 %v71
  %1431 = vmatprep.subr.mxu0 %v76
  %1432 = vmatpush1.msra.mxu0 %v75
  %1433 = vmatprep.subr.mxu0 %v80
  %1434 = vmatpush1.msra.mxu0 %v79
  %1435 = vmatprep.subr.mxu0 %v84
  %1436 = vmatpush1.msra.mxu0 %v83
  %1437 = vmatprep.subr.mxu0 %v88
  %1438 = vmatpush1.msra.mxu0 %v87
  %1439 = vmatprep.subr.mxu0 %v92
  %1440 = vmatpush1.msra.mxu0 %v91
  %1441 = vmatprep.subr.mxu0 %v96
  %1442 = vmatpush1.msra.mxu0 %v95
  %1443 = vmatprep.subr.mxu0 %v100
  %1444 = vmatpush1.msra.mxu0 %v99
  %1445 = vmatprep.subr.mxu0 %v104
  %1446 = vmatpush1.msra.mxu0 %v103
  %1447 = vmatprep.subr.mxu0 %v108
  %1448 = vmatpush1.msra.mxu0 %v107
  %1449 = vmatprep.subr.mxu0 0.0
  %1450 = vmatpush1.msra.mxu0 0.0
  %1451 = vmatprep.subr.mxu0 0.0
  %1452 = vmatpush1.msra.mxu0 0.0
  %1453 = vmatprep.subr.mxu0 0.0
  %1454 = vmatpush1.msra.mxu0 0.0
  %1455 = vmatprep.subr.mxu0 0.0
  %1456 = vmatpush1.msra.mxu0 0.0
  %1457 = vmatprep.subr.mxu0 0.0
  %1458 = vmatpush1.msra.mxu0 0.0
  %1459 = vmatprep.subr.mxu0 0.0
  %1460 = vmatpush1.msra.mxu0 0.0
  %1461 = vmatprep.subr.mxu0 0.0
  %1462 = vmatpush1.msra.mxu0 0.0
  %1463 = vmatprep.subr.mxu0 0.0
  %1464 = vmatpush1.msra.mxu0 0.0
  %1465 = vmatprep.subr.mxu0 0.0
  %1466 = vmatpush1.msra.mxu0 0.0
  %1467 = vmatprep.subr.mxu0 0.0
  %1468 = vmatpush1.msra.mxu0 0.0
  %1469 = vmatprep.subr.mxu0 0.0
  %1470 = vmatpush1.msra.mxu0 0.0
  %1471 = vmatprep.subr.mxu0 0.0
  %1472 = vmatpush1.msra.mxu0 0.0
  %1473 = vmatprep.subr.mxu0 0.0
  %1474 = vmatpush1.msra.mxu0 0.0
  %1475 = vmatprep.subr.mxu0 0.0
  %1476 = vmatpush1.msra.mxu0 0.0
  %1477 = vmatprep.subr.mxu0 0.0
  %1478 = vmatpush1.msra.mxu0 0.0
  %1479 = vmatprep.subr.mxu0 0.0
  %1480 = vmatpush1.msra.mxu0 0.0
  %1481 = vmatprep.mubr.f32.mxu0 0.0
  %1482 = vmatmul.mubr.f32.gmra.mrb[0].mxu0 %v1416
  %v1483 = vpop.f32.mrb[0].mxu0
  %v1484 = vadd.f32 0.0, %v1483
  %v1485 = vpop.f32.mrb[0].mxu0
  %v1486 = vadd.f32 0.0, %v1485
  %1487 = vdwg.mxu0
  %1488 = vmatprep.subr.mxu0 %v50
  %1489 = vmatpush1.msra.mxu0 %v49
  %1490 = vmatprep.subr.mxu0 %v54
  %1491 = vmatpush1.msra.mxu0 %v53
  %1492 = vmatprep.subr.mxu0 %v58
  %1493 = vmatpush1.msra.mxu0 %v57
  %1494 = vmatprep.subr.mxu0 %v62
  %1495 = vmatpush1.msra.mxu0 %v61
  %1496 = vmatprep.subr.mxu0 %v66
  %1497 = vmatpush1.msra.mxu0 %v65
  %1498 = vmatprep.subr.mxu0 %v70
  %1499 = vmatpush1.msra.mxu0 %v69
  %1500 = vmatprep.subr.mxu0 %v74
  %1501 = vmatpush1.msra.mxu0 %v73
  %1502 = vmatprep.subr.mxu0 %v78
  %1503 = vmatpush1.msra.mxu0 %v77
  %1504 = vmatprep.subr.mxu0 %v82
  %1505 = vmatpush1.msra.mxu0 %v81
  %1506 = vmatprep.subr.mxu0 %v86
  %1507 = vmatpush1.msra.mxu0 %v85
  %1508 = vmatprep.subr.mxu0 %v90
  %1509 = vmatpush1.msra.mxu0 %v89
  %1510 = vmatprep.subr.mxu0 %v94
  %1511 = vmatpush1.msra.mxu0 %v93
  %1512 = vmatprep.subr.mxu0 %v98
  %1513 = vmatpush1.msra.mxu0 %v97
  %1514 = vmatprep.subr.mxu0 %v102
  %1515 = vmatpush1.msra.mxu0 %v101
  %1516 = vmatprep.subr.mxu0 %v106
  %1517 = vmatpush1.msra.mxu0 %v105
  %1518 = vmatprep.subr.mxu0 %v110
  %1519 = vmatpush1.msra.mxu0 %v109
  %1520 = vmatprep.subr.mxu0 0.0
  %1521 = vmatpush1.msra.mxu0 0.0
  %1522 = vmatprep.subr.mxu0 0.0
  %1523 = vmatpush1.msra.mxu0 0.0
  %1524 = vmatprep.subr.mxu0 0.0
  %1525 = vmatpush1.msra.mxu0 0.0
  %1526 = vmatprep.subr.mxu0 0.0
  %1527 = vmatpush1.msra.mxu0 0.0
  %1528 = vmatprep.subr.mxu0 0.0
  %1529 = vmatpush1.msra.mxu0 0.0
  %1530 = vmatprep.subr.mxu0 0.0
  %1531 = vmatpush1.msra.mxu0 0.0
  %1532 = vmatprep.subr.mxu0 0.0
  %1533 = vmatpush1.msra.mxu0 0.0
  %1534 = vmatprep.subr.mxu0 0.0
  %1535 = vmatpush1.msra.mxu0 0.0
  %1536 = vmatprep.subr.mxu0 0.0
  %1537 = vmatpush1.msra.mxu0 0.0
  %1538 = vmatprep.subr.mxu0 0.0
  %1539 = vmatpush1.msra.mxu0 0.0
  %1540 = vmatprep.subr.mxu0 0.0
  %1541 = vmatpush1.msra.mxu0 0.0
  %1542 = vmatprep.subr.mxu0 0.0
  %1543 = vmatpush1.msra.mxu0 0.0
  %1544 = vmatprep.subr.mxu0 0.0
  %1545 = vmatpush1.msra.mxu0 0.0
  %1546 = vmatprep.subr.mxu0 0.0
  %1547 = vmatpush1.msra.mxu0 0.0
  %1548 = vmatprep.subr.mxu0 0.0
  %1549 = vmatpush1.msra.mxu0 0.0
  %1550 = vmatprep.subr.mxu0 0.0
  %1551 = vmatpush1.msra.mxu0 0.0
  %1552 = vmatprep.mubr.f32.mxu0 0.0
  %1553 = vmatmul.mubr.f32.gmra.mrb[0].mxu0 %v1416
  %v1554 = vpop.f32.mrb[0].mxu0
  %v1555 = vadd.f32 0.0, %v1554
  %v1556 = vpop.f32.mrb[0].mxu0
  %v1557 = vadd.f32 0.0, %v1556
  %1558 = vdwg.mxu0
  %v1559 = vadd.f32 %v28, %v1484
  %v1560 = vadd.f32 %v32, %v1486
  %v1561 = vadd.f32 %v36, %v1555
  %v1562 = vadd.f32 %v40, %v1557
  %v1563 = vld [vmem:[%s0 + $0x20] sm:$0xff]
  %v1565 = vsel %vm274, %v1563, 0
  %1567 = vmatprep.subr.mxu0 %v259
  %1568 = vmatpush1.msra.mxu0 %v258
  %1569 = vmatprep.subr.mxu0 %v263
  %1570 = vmatpush1.msra.mxu0 %v262
  %1571 = vmatprep.subr.mxu0 %v267
  %1572 = vmatpush1.msra.mxu0 %v266
  %1573 = vmatprep.subr.mxu0 %v271
  %1574 = vmatpush1.msra.mxu0 %v270
  %1575 = vmatprep.subr.mxu0 0.0
  %1576 = vmatpush1.msra.mxu0 0.0
  %1577 = vmatprep.subr.mxu0 0.0
  %1578 = vmatpush1.msra.mxu0 0.0
  %1579 = vmatprep.subr.mxu0 0.0
  %1580 = vmatpush1.msra.mxu0 0.0
  %1581 = vmatprep.subr.mxu0 0.0
  %1582 = vmatpush1.msra.mxu0 0.0
  %1583 = vmatprep.subr.mxu0 0.0
  %1584 = vmatpush1.msra.mxu0 0.0
  %1585 = vmatprep.subr.mxu0 0.0
  %1586 = vmatpush1.msra.mxu0 0.0
  %1587 = vmatprep.subr.mxu0 0.0
  %1588 = vmatpush1.msra.mxu0 0.0
  %1589 = vmatprep.subr.mxu0 0.0
  %1590 = vmatpush1.msra.mxu0 0.0
  %1591 = vmatprep.subr.mxu0 0.0
  %1592 = vmatpush1.msra.mxu0 0.0
  %1593 = vmatprep.subr.mxu0 0.0
  %1594 = vmatpush1.msra.mxu0 0.0
  %1595 = vmatprep.subr.mxu0 0.0
  %1596 = vmatpush1.msra.mxu0 0.0
  %1597 = vmatprep.subr.mxu0 0.0
  %1598 = vmatpush1.msra.mxu0 0.0
  %1599 = vmatprep.subr.mxu0 0.0
  %1600 = vmatpush1.msra.mxu0 0.0
  %1601 = vmatprep.subr.mxu0 0.0
  %1602 = vmatpush1.msra.mxu0 0.0
  %1603 = vmatprep.subr.mxu0 0.0
  %1604 = vmatpush1.msra.mxu0 0.0
  %1605 = vmatprep.subr.mxu0 0.0
  %1606 = vmatpush1.msra.mxu0 0.0
  %1607 = vmatprep.subr.mxu0 0.0
  %1608 = vmatpush1.msra.mxu0 0.0
  %1609 = vmatprep.subr.mxu0 0.0
  %1610 = vmatpush1.msra.mxu0 0.0
  %1611 = vmatprep.subr.mxu0 0.0
  %1612 = vmatpush1.msra.mxu0 0.0
  %1613 = vmatprep.subr.mxu0 0.0
  %1614 = vmatpush1.msra.mxu0 0.0
  %1615 = vmatprep.subr.mxu0 0.0
  %1616 = vmatpush1.msra.mxu0 0.0
  %1617 = vmatprep.subr.mxu0 0.0
  %1618 = vmatpush1.msra.mxu0 0.0
  %1619 = vmatprep.subr.mxu0 0.0
  %1620 = vmatpush1.msra.mxu0 0.0
  %1621 = vmatprep.subr.mxu0 0.0
  %1622 = vmatpush1.msra.mxu0 0.0
  %1623 = vmatprep.subr.mxu0 0.0
  %1624 = vmatpush1.msra.mxu0 0.0
  %1625 = vmatprep.subr.mxu0 0.0
  %1626 = vmatpush1.msra.mxu0 0.0
  %1627 = vmatprep.subr.mxu0 0.0
  %1628 = vmatpush1.msra.mxu0 0.0
  %1629 = vmatprep.subr.mxu0 0.0
  %1630 = vmatpush1.msra.mxu0 0.0
  %1631 = vmatprep.mubr.f32.mxu0 0.0
  %1632 = vmatmul.mubr.f32.gmra.mrb[0].mxu0 %v1565
  %v1633 = vpop.f32.mrb[0].mxu0
  %v1634 = vadd.f32 0.0, %v1633
  %v1635 = vpop.f32.mrb[0].mxu0
  %v1636 = vadd.f32 0.0, %v1635
  %1637 = vdwg.mxu0
  %1638 = vmatprep.subr.mxu0 %v261
  %1639 = vmatpush1.msra.mxu0 %v260
  %1640 = vmatprep.subr.mxu0 %v265
  %1641 = vmatpush1.msra.mxu0 %v264
  %1642 = vmatprep.subr.mxu0 %v269
  %1643 = vmatpush1.msra.mxu0 %v268
  %1644 = vmatprep.subr.mxu0 %v273
  %1645 = vmatpush1.msra.mxu0 %v272
  %1646 = vmatprep.subr.mxu0 0.0
  %1647 = vmatpush1.msra.mxu0 0.0
  %1648 = vmatprep.subr.mxu0 0.0
  %1649 = vmatpush1.msra.mxu0 0.0
  %1650 = vmatprep.subr.mxu0 0.0
  %1651 = vmatpush1.msra.mxu0 0.0
  %1652 = vmatprep.subr.mxu0 0.0
  %1653 = vmatpush1.msra.mxu0 0.0
  %1654 = vmatprep.subr.mxu0 0.0
  %1655 = vmatpush1.msra.mxu0 0.0
  %1656 = vmatprep.subr.mxu0 0.0
  %1657 = vmatpush1.msra.mxu0 0.0
  %1658 = vmatprep.subr.mxu0 0.0
  %1659 = vmatpush1.msra.mxu0 0.0
  %1660 = vmatprep.subr.mxu0 0.0
  %1661 = vmatpush1.msra.mxu0 0.0
  %1662 = vmatprep.subr.mxu0 0.0
  %1663 = vmatpush1.msra.mxu0 0.0
  %1664 = vmatprep.subr.mxu0 0.0
  %1665 = vmatpush1.msra.mxu0 0.0
  %1666 = vmatprep.subr.mxu0 0.0
  %1667 = vmatpush1.msra.mxu0 0.0
  %1668 = vmatprep.subr.mxu0 0.0
  %1669 = vmatpush1.msra.mxu0 0.0
  %1670 = vmatprep.subr.mxu0 0.0
  %1671 = vmatpush1.msra.mxu0 0.0
  %1672 = vmatprep.subr.mxu0 0.0
  %1673 = vmatpush1.msra.mxu0 0.0
  %1674 = vmatprep.subr.mxu0 0.0
  %1675 = vmatpush1.msra.mxu0 0.0
  %1676 = vmatprep.subr.mxu0 0.0
  %1677 = vmatpush1.msra.mxu0 0.0
  %1678 = vmatprep.subr.mxu0 0.0
  %1679 = vmatpush1.msra.mxu0 0.0
  %1680 = vmatprep.subr.mxu0 0.0
  %1681 = vmatpush1.msra.mxu0 0.0
  %1682 = vmatprep.subr.mxu0 0.0
  %1683 = vmatpush1.msra.mxu0 0.0
  %1684 = vmatprep.subr.mxu0 0.0
  %1685 = vmatpush1.msra.mxu0 0.0
  %1686 = vmatprep.subr.mxu0 0.0
  %1687 = vmatpush1.msra.mxu0 0.0
  %1688 = vmatprep.subr.mxu0 0.0
  %1689 = vmatpush1.msra.mxu0 0.0
  %1690 = vmatprep.subr.mxu0 0.0
  %1691 = vmatpush1.msra.mxu0 0.0
  %1692 = vmatprep.subr.mxu0 0.0
  %1693 = vmatpush1.msra.mxu0 0.0
  %1694 = vmatprep.subr.mxu0 0.0
  %1695 = vmatpush1.msra.mxu0 0.0
  %1696 = vmatprep.subr.mxu0 0.0
  %1697 = vmatpush1.msra.mxu0 0.0
  %1698 = vmatprep.subr.mxu0 0.0
  %1699 = vmatpush1.msra.mxu0 0.0
  %1700 = vmatprep.subr.mxu0 0.0
  %1701 = vmatpush1.msra.mxu0 0.0
  %1702 = vmatprep.mubr.f32.mxu0 0.0
  %1703 = vmatmul.mubr.f32.gmra.mrb[0].mxu0 %v1565
  %v1704 = vpop.f32.mrb[0].mxu0
  %v1705 = vadd.f32 0.0, %v1704
  %v1706 = vpop.f32.mrb[0].mxu0
  %v1707 = vadd.f32 0.0, %v1706
  %1708 = vdwg.mxu0
  %v1709 = vadd.f32 %v1559, %v1634
  %v1710 = vadd.f32 %v1560, %v1636
  %v1711 = vadd.f32 %v1561, %v1705
  %v1712 = vadd.f32 %v1562, %v1707
  %v1713 = vxor.u32 %v1709, 2147483648
  %v1714 = vxor.u32 %v1710, 2147483648
  %v1715 = vmul.f32 %v1713, 1.442695
  %v1716 = vpow.pop %v1715
  %v1717 = vmul.f32 %v1714, 1.442695
  %v1718 = vpow.pop %v1717
  %v1719 = vadd.f32 %v1716, 1.0
  %v1720 = vadd.f32 %v1718, 1.0
  %v1721 = vrcp.pop %v1719
  %v1722 = vmul.f32 1.0, %v1721
  %v1723 = vrcp.pop %v1720
  %v1724 = vmul.f32 1.0, %v1723
  %v1725 = vxor.u32 %v1712, 2147483648
  %v1726 = vmul.f32 %v1725, 1.442695
  %v1727 = vpow.pop %v1726
  %v1728 = vadd.f32 %v1727, 1.0
  %v1729 = vrcp.pop %v1728
  %v1730 = vmul.f32 1.0, %v1729
  %v1731 = vtanh.pop %v1711
  %v1732 = vmul.f32 %v1724, %v1414
  %v1733 = vmul.f32 %v1722, %v1731
  %v1734 = vadd.f32 %v1732, %v1733
  %v1735 = vtanh.pop %v1734
  %v1736 = vmul.f32 %v1730, %v1735
  %1737 = vmatprep.subr.mxu0 %v48
  %1738 = vmatpush1.msra.mxu0 %v47
  %1739 = vmatprep.subr.mxu0 %v52
  %1740 = vmatpush1.msra.mxu0 %v51
  %1741 = vmatprep.subr.mxu0 %v56
  %1742 = vmatpush1.msra.mxu0 %v55
  %1743 = vmatprep.subr.mxu0 %v60
  %1744 = vmatpush1.msra.mxu0 %v59
  %1745 = vmatprep.subr.mxu0 %v64
  %1746 = vmatpush1.msra.mxu0 %v63
  %1747 = vmatprep.subr.mxu0 %v68
  %1748 = vmatpush1.msra.mxu0 %v67
  %1749 = vmatprep.subr.mxu0 %v72
  %1750 = vmatpush1.msra.mxu0 %v71
  %1751 = vmatprep.subr.mxu0 %v76
  %1752 = vmatpush1.msra.mxu0 %v75
  %1753 = vmatprep.subr.mxu0 %v80
  %1754 = vmatpush1.msra.mxu0 %v79
  %1755 = vmatprep.subr.mxu0 %v84
  %1756 = vmatpush1.msra.mxu0 %v83
  %1757 = vmatprep.subr.mxu0 %v88
  %1758 = vmatpush1.msra.mxu0 %v87
  %1759 = vmatprep.subr.mxu0 %v92
  %1760 = vmatpush1.msra.mxu0 %v91
  %1761 = vmatprep.subr.mxu0 %v96
  %1762 = vmatpush1.msra.mxu0 %v95
  %1763 = vmatprep.subr.mxu0 %v100
  %1764 = vmatpush1.msra.mxu0 %v99
  %1765 = vmatprep.subr.mxu0 %v104
  %1766 = vmatpush1.msra.mxu0 %v103
  %1767 = vmatprep.subr.mxu0 %v108
  %1768 = vmatpush1.msra.mxu0 %v107
  %1769 = vmatprep.subr.mxu0 0.0
  %1770 = vmatpush1.msra.mxu0 0.0
  %1771 = vmatprep.subr.mxu0 0.0
  %1772 = vmatpush1.msra.mxu0 0.0
  %1773 = vmatprep.subr.mxu0 0.0
  %1774 = vmatpush1.msra.mxu0 0.0
  %1775 = vmatprep.subr.mxu0 0.0
  %1776 = vmatpush1.msra.mxu0 0.0
  %1777 = vmatprep.subr.mxu0 0.0
  %1778 = vmatpush1.msra.mxu0 0.0
  %1779 = vmatprep.subr.mxu0 0.0
  %1780 = vmatpush1.msra.mxu0 0.0
  %1781 = vmatprep.subr.mxu0 0.0
  %1782 = vmatpush1.msra.mxu0 0.0
  %1783 = vmatprep.subr.mxu0 0.0
  %1784 = vmatpush1.msra.mxu0 0.0
  %1785 = vmatprep.subr.mxu0 0.0
  %1786 = vmatpush1.msra.mxu0 0.0
  %1787 = vmatprep.subr.mxu0 0.0
  %1788 = vmatpush1.msra.mxu0 0.0
  %1789 = vmatprep.subr.mxu0 0.0
  %1790 = vmatpush1.msra.mxu0 0.0
  %1791 = vmatprep.subr.mxu0 0.0
  %1792 = vmatpush1.msra.mxu0 0.0
  %1793 = vmatprep.subr.mxu0 0.0
  %1794 = vmatpush1.msra.mxu0 0.0
  %1795 = vmatprep.subr.mxu0 0.0
  %1796 = vmatpush1.msra.mxu0 0.0
  %1797 = vmatprep.subr.mxu0 0.0
  %1798 = vmatpush1.msra.mxu0 0.0
  %1799 = vmatprep.subr.mxu0 0.0
  %1800 = vmatpush1.msra.mxu0 0.0
  %1801 = vmatprep.mubr.f32.mxu0 0.0
  %1802 = vmatmul.mubr.f32.gmra.mrb[0].mxu0 %v1736
  %v1803 = vpop.f32.mrb[0].mxu0
  %v1804 = vadd.f32 0.0, %v1803
  %v1805 = vpop.f32.mrb[0].mxu0
  %v1806 = vadd.f32 0.0, %v1805
  %1807 = vdwg.mxu0
  %1808 = vmatprep.subr.mxu0 %v50
  %1809 = vmatpush1.msra.mxu0 %v49
  %1810 = vmatprep.subr.mxu0 %v54
  %1811 = vmatpush1.msra.mxu0 %v53
  %1812 = vmatprep.subr.mxu0 %v58
  %1813 = vmatpush1.msra.mxu0 %v57
  %1814 = vmatprep.subr.mxu0 %v62
  %1815 = vmatpush1.msra.mxu0 %v61
  %1816 = vmatprep.subr.mxu0 %v66
  %1817 = vmatpush1.msra.mxu0 %v65
  %1818 = vmatprep.subr.mxu0 %v70
  %1819 = vmatpush1.msra.mxu0 %v69
  %1820 = vmatprep.subr.mxu0 %v74
  %1821 = vmatpush1.msra.mxu0 %v73
  %1822 = vmatprep.subr.mxu0 %v78
  %1823 = vmatpush1.msra.mxu0 %v77
  %1824 = vmatprep.subr.mxu0 %v82
  %1825 = vmatpush1.msra.mxu0 %v81
  %1826 = vmatprep.subr.mxu0 %v86
  %1827 = vmatpush1.msra.mxu0 %v85
  %1828 = vmatprep.subr.mxu0 %v90
  %1829 = vmatpush1.msra.mxu0 %v89
  %1830 = vmatprep.subr.mxu0 %v94
  %1831 = vmatpush1.msra.mxu0 %v93
  %1832 = vmatprep.subr.mxu0 %v98
  %1833 = vmatpush1.msra.mxu0 %v97
  %1834 = vmatprep.subr.mxu0 %v102
  %1835 = vmatpush1.msra.mxu0 %v101
  %1836 = vmatprep.subr.mxu0 %v106
  %1837 = vmatpush1.msra.mxu0 %v105
  %1838 = vmatprep.subr.mxu0 %v110
  %1839 = vmatpush1.msra.mxu0 %v109
  %1840 = vmatprep.subr.mxu0 0.0
  %1841 = vmatpush1.msra.mxu0 0.0
  %1842 = vmatprep.subr.mxu0 0.0
  %1843 = vmatpush1.msra.mxu0 0.0
  %1844 = vmatprep.subr.mxu0 0.0
  %1845 = vmatpush1.msra.mxu0 0.0
  %1846 = vmatprep.subr.mxu0 0.0
  %1847 = vmatpush1.msra.mxu0 0.0
  %1848 = vmatprep.subr.mxu0 0.0
  %1849 = vmatpush1.msra.mxu0 0.0
  %1850 = vmatprep.subr.mxu0 0.0
  %1851 = vmatpush1.msra.mxu0 0.0
  %1852 = vmatprep.subr.mxu0 0.0
  %1853 = vmatpush1.msra.mxu0 0.0
  %1854 = vmatprep.subr.mxu0 0.0
  %1855 = vmatpush1.msra.mxu0 0.0
  %1856 = vmatprep.subr.mxu0 0.0
  %1857 = vmatpush1.msra.mxu0 0.0
  %1858 = vmatprep.subr.mxu0 0.0
  %1859 = vmatpush1.msra.mxu0 0.0
  %1860 = vmatprep.subr.mxu0 0.0
  %1861 = vmatpush1.msra.mxu0 0.0
  %1862 = vmatprep.subr.mxu0 0.0
  %1863 = vmatpush1.msra.mxu0 0.0
  %1864 = vmatprep.subr.mxu0 0.0
  %1865 = vmatpush1.msra.mxu0 0.0
  %1866 = vmatprep.subr.mxu0 0.0
  %1867 = vmatpush1.msra.mxu0 0.0
  %1868 = vmatprep.subr.mxu0 0.0
  %1869 = vmatpush1.msra.mxu0 0.0
  %1870 = vmatprep.subr.mxu0 0.0
  %1871 = vmatpush1.msra.mxu0 0.0
  %1872 = vmatprep.mubr.f32.mxu0 0.0
  %1873 = vmatmul.mubr.f32.gmra.mrb[0].mxu0 %v1736
  %v1874 = vpop.f32.mrb[0].mxu0
  %v1875 = vadd.f32 0.0, %v1874
  %v1876 = vpop.f32.mrb[0].mxu0
  %v1877 = vadd.f32 0.0, %v1876
  %1878 = vdwg.mxu0
  %v1879 = vadd.f32 %v28, %v1804
  %v1880 = vadd.f32 %v32, %v1806
  %v1881 = vadd.f32 %v36, %v1875
  %v1882 = vadd.f32 %v40, %v1877
  %v1883 = vld [vmem:[%s0 + $0x28] sm:$0xff]
  %v1885 = vsel %vm274, %v1883, 0
  %1887 = vmatprep.subr.mxu0 %v259
  %1888 = vmatpush1.msra.mxu0 %v258
  %1889 = vmatprep.subr.mxu0 %v263
  %1890 = vmatpush1.msra.mxu0 %v262
  %1891 = vmatprep.subr.mxu0 %v267
  %1892 = vmatpush1.msra.mxu0 %v266
  %1893 = vmatprep.subr.mxu0 %v271
  %1894 = vmatpush1.msra.mxu0 %v270
  %1895 = vmatprep.subr.mxu0 0.0
  %1896 = vmatpush1.msra.mxu0 0.0
  %1897 = vmatprep.subr.mxu0 0.0
  %1898 = vmatpush1.msra.mxu0 0.0
  %1899 = vmatprep.subr.mxu0 0.0
  %1900 = vmatpush1.msra.mxu0 0.0
  %1901 = vmatprep.subr.mxu0 0.0
  %1902 = vmatpush1.msra.mxu0 0.0
  %1903 = vmatprep.subr.mxu0 0.0
  %1904 = vmatpush1.msra.mxu0 0.0
  %1905 = vmatprep.subr.mxu0 0.0
  %1906 = vmatpush1.msra.mxu0 0.0
  %1907 = vmatprep.subr.mxu0 0.0
  %1908 = vmatpush1.msra.mxu0 0.0
  %1909 = vmatprep.subr.mxu0 0.0
  %1910 = vmatpush1.msra.mxu0 0.0
  %1911 = vmatprep.subr.mxu0 0.0
  %1912 = vmatpush1.msra.mxu0 0.0
  %1913 = vmatprep.subr.mxu0 0.0
  %1914 = vmatpush1.msra.mxu0 0.0
  %1915 = vmatprep.subr.mxu0 0.0
  %1916 = vmatpush1.msra.mxu0 0.0
  %1917 = vmatprep.subr.mxu0 0.0
  %1918 = vmatpush1.msra.mxu0 0.0
  %1919 = vmatprep.subr.mxu0 0.0
  %1920 = vmatpush1.msra.mxu0 0.0
  %1921 = vmatprep.subr.mxu0 0.0
  %1922 = vmatpush1.msra.mxu0 0.0
  %1923 = vmatprep.subr.mxu0 0.0
  %1924 = vmatpush1.msra.mxu0 0.0
  %1925 = vmatprep.subr.mxu0 0.0
  %1926 = vmatpush1.msra.mxu0 0.0
  %1927 = vmatprep.subr.mxu0 0.0
  %1928 = vmatpush1.msra.mxu0 0.0
  %1929 = vmatprep.subr.mxu0 0.0
  %1930 = vmatpush1.msra.mxu0 0.0
  %1931 = vmatprep.subr.mxu0 0.0
  %1932 = vmatpush1.msra.mxu0 0.0
  %1933 = vmatprep.subr.mxu0 0.0
  %1934 = vmatpush1.msra.mxu0 0.0
  %1935 = vmatprep.subr.mxu0 0.0
  %1936 = vmatpush1.msra.mxu0 0.0
  %1937 = vmatprep.subr.mxu0 0.0
  %1938 = vmatpush1.msra.mxu0 0.0
  %1939 = vmatprep.subr.mxu0 0.0
  %1940 = vmatpush1.msra.mxu0 0.0
  %1941 = vmatprep.subr.mxu0 0.0
  %1942 = vmatpush1.msra.mxu0 0.0
  %1943 = vmatprep.subr.mxu0 0.0
  %1944 = vmatpush1.msra.mxu0 0.0
  %1945 = vmatprep.subr.mxu0 0.0
  %1946 = vmatpush1.msra.mxu0 0.0
  %1947 = vmatprep.subr.mxu0 0.0
  %1948 = vmatpush1.msra.mxu0 0.0
  %1949 = vmatprep.subr.mxu0 0.0
  %1950 = vmatpush1.msra.mxu0 0.0
  %1951 = vmatprep.mubr.f32.mxu0 0.0
  %1952 = vmatmul.mubr.f32.gmra.mrb[0].mxu0 %v1885
  %v1953 = vpop.f32.mrb[0].mxu0
  %v1954 = vadd.f32 0.0, %v1953
  %v1955 = vpop.f32.mrb[0].mxu0
  %v1956 = vadd.f32 0.0, %v1955
  %1957 = vdwg.mxu0
  %1958 = vmatprep.subr.mxu0 %v261
  %1959 = vmatpush1.msra.mxu0 %v260
  %1960 = vmatprep.subr.mxu0 %v265
  %1961 = vmatpush1.msra.mxu0 %v264
  %1962 = vmatprep.subr.mxu0 %v269
  %1963 = vmatpush1.msra.mxu0 %v268
  %1964 = vmatprep.subr.mxu0 %v273
  %1965 = vmatpush1.msra.mxu0 %v272
  %1966 = vmatprep.subr.mxu0 0.0
  %1967 = vmatpush1.msra.mxu0 0.0
  %1968 = vmatprep.subr.mxu0 0.0
  %1969 = vmatpush1.msra.mxu0 0.0
  %1970 = vmatprep.subr.mxu0 0.0
  %1971 = vmatpush1.msra.mxu0 0.0
  %1972 = vmatprep.subr.mxu0 0.0
  %1973 = vmatpush1.msra.mxu0 0.0
  %1974 = vmatprep.subr.mxu0 0.0
  %1975 = vmatpush1.msra.mxu0 0.0
  %1976 = vmatprep.subr.mxu0 0.0
  %1977 = vmatpush1.msra.mxu0 0.0
  %1978 = vmatprep.subr.mxu0 0.0
  %1979 = vmatpush1.msra.mxu0 0.0
  %1980 = vmatprep.subr.mxu0 0.0
  %1981 = vmatpush1.msra.mxu0 0.0
  %1982 = vmatprep.subr.mxu0 0.0
  %1983 = vmatpush1.msra.mxu0 0.0
  %1984 = vmatprep.subr.mxu0 0.0
  %1985 = vmatpush1.msra.mxu0 0.0
  %1986 = vmatprep.subr.mxu0 0.0
  %1987 = vmatpush1.msra.mxu0 0.0
  %1988 = vmatprep.subr.mxu0 0.0
  %1989 = vmatpush1.msra.mxu0 0.0
  %1990 = vmatprep.subr.mxu0 0.0
  %1991 = vmatpush1.msra.mxu0 0.0
  %1992 = vmatprep.subr.mxu0 0.0
  %1993 = vmatpush1.msra.mxu0 0.0
  %1994 = vmatprep.subr.mxu0 0.0
  %1995 = vmatpush1.msra.mxu0 0.0
  %1996 = vmatprep.subr.mxu0 0.0
  %1997 = vmatpush1.msra.mxu0 0.0
  %1998 = vmatprep.subr.mxu0 0.0
  %1999 = vmatpush1.msra.mxu0 0.0
  %2000 = vmatprep.subr.mxu0 0.0
  %2001 = vmatpush1.msra.mxu0 0.0
  %2002 = vmatprep.subr.mxu0 0.0
  %2003 = vmatpush1.msra.mxu0 0.0
  %2004 = vmatprep.subr.mxu0 0.0
  %2005 = vmatpush1.msra.mxu0 0.0
  %2006 = vmatprep.subr.mxu0 0.0
  %2007 = vmatpush1.msra.mxu0 0.0
  %2008 = vmatprep.subr.mxu0 0.0
  %2009 = vmatpush1.msra.mxu0 0.0
  %2010 = vmatprep.subr.mxu0 0.0
  %2011 = vmatpush1.msra.mxu0 0.0
  %2012 = vmatprep.subr.mxu0 0.0
  %2013 = vmatpush1.msra.mxu0 0.0
  %2014 = vmatprep.subr.mxu0 0.0
  %2015 = vmatpush1.msra.mxu0 0.0
  %2016 = vmatprep.subr.mxu0 0.0
  %2017 = vmatpush1.msra.mxu0 0.0
  %2018 = vmatprep.subr.mxu0 0.0
  %2019 = vmatpush1.msra.mxu0 0.0
  %2020 = vmatprep.subr.mxu0 0.0
  %2021 = vmatpush1.msra.mxu0 0.0
  %2022 = vmatprep.mubr.f32.mxu0 0.0
  %2023 = vmatmul.mubr.f32.gmra.mrb[0].mxu0 %v1885
  %v2024 = vpop.f32.mrb[0].mxu0
  %v2025 = vadd.f32 0.0, %v2024
  %v2026 = vpop.f32.mrb[0].mxu0
  %v2027 = vadd.f32 0.0, %v2026
  %2028 = vdwg.mxu0
  %v2029 = vadd.f32 %v1879, %v1954
  %v2030 = vadd.f32 %v1880, %v1956
  %v2031 = vadd.f32 %v1881, %v2025
  %v2032 = vadd.f32 %v1882, %v2027
  %v2033 = vxor.u32 %v2029, 2147483648
  %v2034 = vxor.u32 %v2030, 2147483648
  %v2035 = vmul.f32 %v2033, 1.442695
  %v2036 = vpow.pop %v2035
  %v2037 = vmul.f32 %v2034, 1.442695
  %v2038 = vpow.pop %v2037
  %v2039 = vadd.f32 %v2036, 1.0
  %v2040 = vadd.f32 %v2038, 1.0
  %v2041 = vrcp.pop %v2039
  %v2042 = vmul.f32 1.0, %v2041
  %v2043 = vrcp.pop %v2040
  %v2044 = vmul.f32 1.0, %v2043
  %v2045 = vxor.u32 %v2032, 2147483648
  %v2046 = vmul.f32 %v2045, 1.442695
  %v2047 = vpow.pop %v2046
  %v2048 = vadd.f32 %v2047, 1.0
  %v2049 = vrcp.pop %v2048
  %v2050 = vmul.f32 1.0, %v2049
  %v2051 = vtanh.pop %v2031
  %v2052 = vmul.f32 %v2044, %v1734
  %v2053 = vmul.f32 %v2042, %v2051
  %v2054 = vadd.f32 %v2052, %v2053
  %v2055 = vtanh.pop %v2054
  %v2056 = vmul.f32 %v2050, %v2055
  %2057 = vmatprep.subr.mxu0 %v48
  %2058 = vmatpush1.msra.mxu0 %v47
  %2059 = vmatprep.subr.mxu0 %v52
  %2060 = vmatpush1.msra.mxu0 %v51
  %2061 = vmatprep.subr.mxu0 %v56
  %2062 = vmatpush1.msra.mxu0 %v55
  %2063 = vmatprep.subr.mxu0 %v60
  %2064 = vmatpush1.msra.mxu0 %v59
  %2065 = vmatprep.subr.mxu0 %v64
  %2066 = vmatpush1.msra.mxu0 %v63
  %2067 = vmatprep.subr.mxu0 %v68
  %2068 = vmatpush1.msra.mxu0 %v67
  %2069 = vmatprep.subr.mxu0 %v72
  %2070 = vmatpush1.msra.mxu0 %v71
  %2071 = vmatprep.subr.mxu0 %v76
  %2072 = vmatpush1.msra.mxu0 %v75
  %2073 = vmatprep.subr.mxu0 %v80
  %2074 = vmatpush1.msra.mxu0 %v79
  %2075 = vmatprep.subr.mxu0 %v84
  %2076 = vmatpush1.msra.mxu0 %v83
  %2077 = vmatprep.subr.mxu0 %v88
  %2078 = vmatpush1.msra.mxu0 %v87
  %2079 = vmatprep.subr.mxu0 %v92
  %2080 = vmatpush1.msra.mxu0 %v91
  %2081 = vmatprep.subr.mxu0 %v96
  %2082 = vmatpush1.msra.mxu0 %v95
  %2083 = vmatprep.subr.mxu0 %v100
  %2084 = vmatpush1.msra.mxu0 %v99
  %2085 = vmatprep.subr.mxu0 %v104
  %2086 = vmatpush1.msra.mxu0 %v103
  %2087 = vmatprep.subr.mxu0 %v108
  %2088 = vmatpush1.msra.mxu0 %v107
  %2089 = vmatprep.subr.mxu0 0.0
  %2090 = vmatpush1.msra.mxu0 0.0
  %2091 = vmatprep.subr.mxu0 0.0
  %2092 = vmatpush1.msra.mxu0 0.0
  %2093 = vmatprep.subr.mxu0 0.0
  %2094 = vmatpush1.msra.mxu0 0.0
  %2095 = vmatprep.subr.mxu0 0.0
  %2096 = vmatpush1.msra.mxu0 0.0
  %2097 = vmatprep.subr.mxu0 0.0
  %2098 = vmatpush1.msra.mxu0 0.0
  %2099 = vmatprep.subr.mxu0 0.0
  %2100 = vmatpush1.msra.mxu0 0.0
  %2101 = vmatprep.subr.mxu0 0.0
  %2102 = vmatpush1.msra.mxu0 0.0
  %2103 = vmatprep.subr.mxu0 0.0
  %2104 = vmatpush1.msra.mxu0 0.0
  %2105 = vmatprep.subr.mxu0 0.0
  %2106 = vmatpush1.msra.mxu0 0.0
  %2107 = vmatprep.subr.mxu0 0.0
  %2108 = vmatpush1.msra.mxu0 0.0
  %2109 = vmatprep.subr.mxu0 0.0
  %2110 = vmatpush1.msra.mxu0 0.0
  %2111 = vmatprep.subr.mxu0 0.0
  %2112 = vmatpush1.msra.mxu0 0.0
  %2113 = vmatprep.subr.mxu0 0.0
  %2114 = vmatpush1.msra.mxu0 0.0
  %2115 = vmatprep.subr.mxu0 0.0
  %2116 = vmatpush1.msra.mxu0 0.0
  %2117 = vmatprep.subr.mxu0 0.0
  %2118 = vmatpush1.msra.mxu0 0.0
  %2119 = vmatprep.subr.mxu0 0.0
  %2120 = vmatpush1.msra.mxu0 0.0
  %2121 = vmatprep.mubr.f32.mxu0 0.0
  %2122 = vmatmul.mubr.f32.gmra.mrb[0].mxu0 %v2056
  %v2123 = vpop.f32.mrb[0].mxu0
  %v2124 = vadd.f32 0.0, %v2123
  %v2125 = vpop.f32.mrb[0].mxu0
  %v2126 = vadd.f32 0.0, %v2125
  %2127 = vdwg.mxu0
  %2128 = vmatprep.subr.mxu0 %v50
  %2129 = vmatpush1.msra.mxu0 %v49
  %2130 = vmatprep.subr.mxu0 %v54
  %2131 = vmatpush1.msra.mxu0 %v53
  %2132 = vmatprep.subr.mxu0 %v58
  %2133 = vmatpush1.msra.mxu0 %v57
  %2134 = vmatprep.subr.mxu0 %v62
  %2135 = vmatpush1.msra.mxu0 %v61
  %2136 = vmatprep.subr.mxu0 %v66
  %2137 = vmatpush1.msra.mxu0 %v65
  %2138 = vmatprep.subr.mxu0 %v70
  %2139 = vmatpush1.msra.mxu0 %v69
  %2140 = vmatprep.subr.mxu0 %v74
  %2141 = vmatpush1.msra.mxu0 %v73
  %2142 = vmatprep.subr.mxu0 %v78
  %2143 = vmatpush1.msra.mxu0 %v77
  %2144 = vmatprep.subr.mxu0 %v82
  %2145 = vmatpush1.msra.mxu0 %v81
  %2146 = vmatprep.subr.mxu0 %v86
  %2147 = vmatpush1.msra.mxu0 %v85
  %2148 = vmatprep.subr.mxu0 %v90
  %2149 = vmatpush1.msra.mxu0 %v89
  %2150 = vmatprep.subr.mxu0 %v94
  %2151 = vmatpush1.msra.mxu0 %v93
  %2152 = vmatprep.subr.mxu0 %v98
  %2153 = vmatpush1.msra.mxu0 %v97
  %2154 = vmatprep.subr.mxu0 %v102
  %2155 = vmatpush1.msra.mxu0 %v101
  %2156 = vmatprep.subr.mxu0 %v106
  %2157 = vmatpush1.msra.mxu0 %v105
  %2158 = vmatprep.subr.mxu0 %v110
  %2159 = vmatpush1.msra.mxu0 %v109
  %2160 = vmatprep.subr.mxu0 0.0
  %2161 = vmatpush1.msra.mxu0 0.0
  %2162 = vmatprep.subr.mxu0 0.0
  %2163 = vmatpush1.msra.mxu0 0.0
  %2164 = vmatprep.subr.mxu0 0.0
  %2165 = vmatpush1.msra.mxu0 0.0
  %2166 = vmatprep.subr.mxu0 0.0
  %2167 = vmatpush1.msra.mxu0 0.0
  %2168 = vmatprep.subr.mxu0 0.0
  %2169 = vmatpush1.msra.mxu0 0.0
  %2170 = vmatprep.subr.mxu0 0.0
  %2171 = vmatpush1.msra.mxu0 0.0
  %2172 = vmatprep.subr.mxu0 0.0
  %2173 = vmatpush1.msra.mxu0 0.0
  %2174 = vmatprep.subr.mxu0 0.0
  %2175 = vmatpush1.msra.mxu0 0.0
  %2176 = vmatprep.subr.mxu0 0.0
  %2177 = vmatpush1.msra.mxu0 0.0
  %2178 = vmatprep.subr.mxu0 0.0
  %2179 = vmatpush1.msra.mxu0 0.0
  %2180 = vmatprep.subr.mxu0 0.0
  %2181 = vmatpush1.msra.mxu0 0.0
  %2182 = vmatprep.subr.mxu0 0.0
  %2183 = vmatpush1.msra.mxu0 0.0
  %2184 = vmatprep.subr.mxu0 0.0
  %2185 = vmatpush1.msra.mxu0 0.0
  %2186 = vmatprep.subr.mxu0 0.0
  %2187 = vmatpush1.msra.mxu0 0.0
  %2188 = vmatprep.subr.mxu0 0.0
  %2189 = vmatpush1.msra.mxu0 0.0
  %2190 = vmatprep.subr.mxu0 0.0
  %2191 = vmatpush1.msra.mxu0 0.0
  %2192 = vmatprep.mubr.f32.mxu0 0.0
  %2193 = vmatmul.mubr.f32.gmra.mrb[0].mxu0 %v2056
  %v2194 = vpop.f32.mrb[0].mxu0
  %v2195 = vadd.f32 0.0, %v2194
  %v2196 = vpop.f32.mrb[0].mxu0
  %v2197 = vadd.f32 0.0, %v2196
  %2198 = vdwg.mxu0
  %v2199 = vadd.f32 %v28, %v2124
  %v2200 = vadd.f32 %v32, %v2126
  %v2201 = vadd.f32 %v36, %v2195
  %v2202 = vadd.f32 %v40, %v2197
  %v2203 = vld [vmem:[%s0 + $0x30] sm:$0xff]
  %v2205 = vsel %vm274, %v2203, 0
  %2207 = vmatprep.subr.mxu0 %v259
  %2208 = vmatpush1.msra.mxu0 %v258
  %2209 = vmatprep.subr.mxu0 %v263
  %2210 = vmatpush1.msra.mxu0 %v262
  %2211 = vmatprep.subr.mxu0 %v267
  %2212 = vmatpush1.msra.mxu0 %v266
  %2213 = vmatprep.subr.mxu0 %v271
  %2214 = vmatpush1.msra.mxu0 %v270
  %2215 = vmatprep.subr.mxu0 0.0
  %2216 = vmatpush1.msra.mxu0 0.0
  %2217 = vmatprep.subr.mxu0 0.0
  %2218 = vmatpush1.msra.mxu0 0.0
  %2219 = vmatprep.subr.mxu0 0.0
  %2220 = vmatpush1.msra.mxu0 0.0
  %2221 = vmatprep.subr.mxu0 0.0
  %2222 = vmatpush1.msra.mxu0 0.0
  %2223 = vmatprep.subr.mxu0 0.0
  %2224 = vmatpush1.msra.mxu0 0.0
  %2225 = vmatprep.subr.mxu0 0.0
  %2226 = vmatpush1.msra.mxu0 0.0
  %2227 = vmatprep.subr.mxu0 0.0
  %2228 = vmatpush1.msra.mxu0 0.0
  %2229 = vmatprep.subr.mxu0 0.0
  %2230 = vmatpush1.msra.mxu0 0.0
  %2231 = vmatprep.subr.mxu0 0.0
  %2232 = vmatpush1.msra.mxu0 0.0
  %2233 = vmatprep.subr.mxu0 0.0
  %2234 = vmatpush1.msra.mxu0 0.0
  %2235 = vmatprep.subr.mxu0 0.0
  %2236 = vmatpush1.msra.mxu0 0.0
  %2237 = vmatprep.subr.mxu0 0.0
  %2238 = vmatpush1.msra.mxu0 0.0
  %2239 = vmatprep.subr.mxu0 0.0
  %2240 = vmatpush1.msra.mxu0 0.0
  %2241 = vmatprep.subr.mxu0 0.0
  %2242 = vmatpush1.msra.mxu0 0.0
  %2243 = vmatprep.subr.mxu0 0.0
  %2244 = vmatpush1.msra.mxu0 0.0
  %2245 = vmatprep.subr.mxu0 0.0
  %2246 = vmatpush1.msra.mxu0 0.0
  %2247 = vmatprep.subr.mxu0 0.0
  %2248 = vmatpush1.msra.mxu0 0.0
  %2249 = vmatprep.subr.mxu0 0.0
  %2250 = vmatpush1.msra.mxu0 0.0
  %2251 = vmatprep.subr.mxu0 0.0
  %2252 = vmatpush1.msra.mxu0 0.0
  %2253 = vmatprep.subr.mxu0 0.0
  %2254 = vmatpush1.msra.mxu0 0.0
  %2255 = vmatprep.subr.mxu0 0.0
  %2256 = vmatpush1.msra.mxu0 0.0
  %2257 = vmatprep.subr.mxu0 0.0
  %2258 = vmatpush1.msra.mxu0 0.0
  %2259 = vmatprep.subr.mxu0 0.0
  %2260 = vmatpush1.msra.mxu0 0.0
  %2261 = vmatprep.subr.mxu0 0.0
  %2262 = vmatpush1.msra.mxu0 0.0
  %2263 = vmatprep.subr.mxu0 0.0
  %2264 = vmatpush1.msra.mxu0 0.0
  %2265 = vmatprep.subr.mxu0 0.0
  %2266 = vmatpush1.msra.mxu0 0.0
  %2267 = vmatprep.subr.mxu0 0.0
  %2268 = vmatpush1.msra.mxu0 0.0
  %2269 = vmatprep.subr.mxu0 0.0
  %2270 = vmatpush1.msra.mxu0 0.0
  %2271 = vmatprep.mubr.f32.mxu0 0.0
  %2272 = vmatmul.mubr.f32.gmra.mrb[0].mxu0 %v2205
  %v2273 = vpop.f32.mrb[0].mxu0
  %v2274 = vadd.f32 0.0, %v2273
  %v2275 = vpop.f32.mrb[0].mxu0
  %v2276 = vadd.f32 0.0, %v2275
  %2277 = vdwg.mxu0
  %2278 = vmatprep.subr.mxu0 %v261
  %2279 = vmatpush1.msra.mxu0 %v260
  %2280 = vmatprep.subr.mxu0 %v265
  %2281 = vmatpush1.msra.mxu0 %v264
  %2282 = vmatprep.subr.mxu0 %v269
  %2283 = vmatpush1.msra.mxu0 %v268
  %2284 = vmatprep.subr.mxu0 %v273
  %2285 = vmatpush1.msra.mxu0 %v272
  %2286 = vmatprep.subr.mxu0 0.0
  %2287 = vmatpush1.msra.mxu0 0.0
  %2288 = vmatprep.subr.mxu0 0.0
  %2289 = vmatpush1.msra.mxu0 0.0
  %2290 = vmatprep.subr.mxu0 0.0
  %2291 = vmatpush1.msra.mxu0 0.0
  %2292 = vmatprep.subr.mxu0 0.0
  %2293 = vmatpush1.msra.mxu0 0.0
  %2294 = vmatprep.subr.mxu0 0.0
  %2295 = vmatpush1.msra.mxu0 0.0
  %2296 = vmatprep.subr.mxu0 0.0
  %2297 = vmatpush1.msra.mxu0 0.0
  %2298 = vmatprep.subr.mxu0 0.0
  %2299 = vmatpush1.msra.mxu0 0.0
  %2300 = vmatprep.subr.mxu0 0.0
  %2301 = vmatpush1.msra.mxu0 0.0
  %2302 = vmatprep.subr.mxu0 0.0
  %2303 = vmatpush1.msra.mxu0 0.0
  %2304 = vmatprep.subr.mxu0 0.0
  %2305 = vmatpush1.msra.mxu0 0.0
  %2306 = vmatprep.subr.mxu0 0.0
  %2307 = vmatpush1.msra.mxu0 0.0
  %2308 = vmatprep.subr.mxu0 0.0
  %2309 = vmatpush1.msra.mxu0 0.0
  %2310 = vmatprep.subr.mxu0 0.0
  %2311 = vmatpush1.msra.mxu0 0.0
  %2312 = vmatprep.subr.mxu0 0.0
  %2313 = vmatpush1.msra.mxu0 0.0
  %2314 = vmatprep.subr.mxu0 0.0
  %2315 = vmatpush1.msra.mxu0 0.0
  %2316 = vmatprep.subr.mxu0 0.0
  %2317 = vmatpush1.msra.mxu0 0.0
  %2318 = vmatprep.subr.mxu0 0.0
  %2319 = vmatpush1.msra.mxu0 0.0
  %2320 = vmatprep.subr.mxu0 0.0
  %2321 = vmatpush1.msra.mxu0 0.0
  %2322 = vmatprep.subr.mxu0 0.0
  %2323 = vmatpush1.msra.mxu0 0.0
  %2324 = vmatprep.subr.mxu0 0.0
  %2325 = vmatpush1.msra.mxu0 0.0
  %2326 = vmatprep.subr.mxu0 0.0
  %2327 = vmatpush1.msra.mxu0 0.0
  %2328 = vmatprep.subr.mxu0 0.0
  %2329 = vmatpush1.msra.mxu0 0.0
  %2330 = vmatprep.subr.mxu0 0.0
  %2331 = vmatpush1.msra.mxu0 0.0
  %2332 = vmatprep.subr.mxu0 0.0
  %2333 = vmatpush1.msra.mxu0 0.0
  %2334 = vmatprep.subr.mxu0 0.0
  %2335 = vmatpush1.msra.mxu0 0.0
  %2336 = vmatprep.subr.mxu0 0.0
  %2337 = vmatpush1.msra.mxu0 0.0
  %2338 = vmatprep.subr.mxu0 0.0
  %2339 = vmatpush1.msra.mxu0 0.0
  %2340 = vmatprep.subr.mxu0 0.0
  %2341 = vmatpush1.msra.mxu0 0.0
  %2342 = vmatprep.mubr.f32.mxu0 0.0
  %2343 = vmatmul.mubr.f32.gmra.mrb[0].mxu0 %v2205
  %v2344 = vpop.f32.mrb[0].mxu0
  %v2345 = vadd.f32 0.0, %v2344
  %v2346 = vpop.f32.mrb[0].mxu0
  %v2347 = vadd.f32 0.0, %v2346
  %2348 = vdwg.mxu0
  %v2349 = vadd.f32 %v2199, %v2274
  %v2350 = vadd.f32 %v2200, %v2276
  %v2351 = vadd.f32 %v2201, %v2345
  %v2352 = vadd.f32 %v2202, %v2347
  %v2353 = vxor.u32 %v2349, 2147483648
  %v2354 = vxor.u32 %v2350, 2147483648
  %v2355 = vmul.f32 %v2353, 1.442695
  %v2356 = vpow.pop %v2355
  %v2357 = vmul.f32 %v2354, 1.442695
  %v2358 = vpow.pop %v2357
  %v2359 = vadd.f32 %v2356, 1.0
  %v2360 = vadd.f32 %v2358, 1.0
  %v2361 = vrcp.pop %v2359
  %v2362 = vmul.f32 1.0, %v2361
  %v2363 = vrcp.pop %v2360
  %v2364 = vmul.f32 1.0, %v2363
  %v2365 = vxor.u32 %v2352, 2147483648
  %v2366 = vmul.f32 %v2365, 1.442695
  %v2367 = vpow.pop %v2366
  %v2368 = vadd.f32 %v2367, 1.0
  %v2369 = vrcp.pop %v2368
  %v2370 = vmul.f32 1.0, %v2369
  %v2371 = vtanh.pop %v2351
  %v2372 = vmul.f32 %v2364, %v2054
  %v2373 = vmul.f32 %v2362, %v2371
  %v2374 = vadd.f32 %v2372, %v2373
  %v2375 = vtanh.pop %v2374
  %v2376 = vmul.f32 %v2370, %v2375
  %2377 = vmatprep.subr.mxu0 %v48
  %2378 = vmatpush1.msra.mxu0 %v47
  %2379 = vmatprep.subr.mxu0 %v52
  %2380 = vmatpush1.msra.mxu0 %v51
  %2381 = vmatprep.subr.mxu0 %v56
  %2382 = vmatpush1.msra.mxu0 %v55
  %2383 = vmatprep.subr.mxu0 %v60
  %2384 = vmatpush1.msra.mxu0 %v59
  %2385 = vmatprep.subr.mxu0 %v64
  %2386 = vmatpush1.msra.mxu0 %v63
  %2387 = vmatprep.subr.mxu0 %v68
  %2388 = vmatpush1.msra.mxu0 %v67
  %2389 = vmatprep.subr.mxu0 %v72
  %2390 = vmatpush1.msra.mxu0 %v71
  %2391 = vmatprep.subr.mxu0 %v76
  %2392 = vmatpush1.msra.mxu0 %v75
  %2393 = vmatprep.subr.mxu0 %v80
  %2394 = vmatpush1.msra.mxu0 %v79
  %2395 = vmatprep.subr.mxu0 %v84
  %2396 = vmatpush1.msra.mxu0 %v83
  %2397 = vmatprep.subr.mxu0 %v88
  %2398 = vmatpush1.msra.mxu0 %v87
  %2399 = vmatprep.subr.mxu0 %v92
  %2400 = vmatpush1.msra.mxu0 %v91
  %2401 = vmatprep.subr.mxu0 %v96
  %2402 = vmatpush1.msra.mxu0 %v95
  %2403 = vmatprep.subr.mxu0 %v100
  %2404 = vmatpush1.msra.mxu0 %v99
  %2405 = vmatprep.subr.mxu0 %v104
  %2406 = vmatpush1.msra.mxu0 %v103
  %2407 = vmatprep.subr.mxu0 %v108
  %2408 = vmatpush1.msra.mxu0 %v107
  %2409 = vmatprep.subr.mxu0 0.0
  %2410 = vmatpush1.msra.mxu0 0.0
  %2411 = vmatprep.subr.mxu0 0.0
  %2412 = vmatpush1.msra.mxu0 0.0
  %2413 = vmatprep.subr.mxu0 0.0
  %2414 = vmatpush1.msra.mxu0 0.0
  %2415 = vmatprep.subr.mxu0 0.0
  %2416 = vmatpush1.msra.mxu0 0.0
  %2417 = vmatprep.subr.mxu0 0.0
  %2418 = vmatpush1.msra.mxu0 0.0
  %2419 = vmatprep.subr.mxu0 0.0
  %2420 = vmatpush1.msra.mxu0 0.0
  %2421 = vmatprep.subr.mxu0 0.0
  %2422 = vmatpush1.msra.mxu0 0.0
  %2423 = vmatprep.subr.mxu0 0.0
  %2424 = vmatpush1.msra.mxu0 0.0
  %2425 = vmatprep.subr.mxu0 0.0
  %2426 = vmatpush1.msra.mxu0 0.0
  %2427 = vmatprep.subr.mxu0 0.0
  %2428 = vmatpush1.msra.mxu0 0.0
  %2429 = vmatprep.subr.mxu0 0.0
  %2430 = vmatpush1.msra.mxu0 0.0
  %2431 = vmatprep.subr.mxu0 0.0
  %2432 = vmatpush1.msra.mxu0 0.0
  %2433 = vmatprep.subr.mxu0 0.0
  %2434 = vmatpush1.msra.mxu0 0.0
  %2435 = vmatprep.subr.mxu0 0.0
  %2436 = vmatpush1.msra.mxu0 0.0
  %2437 = vmatprep.subr.mxu0 0.0
  %2438 = vmatpush1.msra.mxu0 0.0
  %2439 = vmatprep.subr.mxu0 0.0
  %2440 = vmatpush1.msra.mxu0 0.0
  %2441 = vmatprep.mubr.f32.mxu0 0.0
  %2442 = vmatmul.mubr.f32.gmra.mrb[0].mxu0 %v2376
  %v2443 = vpop.f32.mrb[0].mxu0
  %v2444 = vadd.f32 0.0, %v2443
  %v2445 = vpop.f32.mrb[0].mxu0
  %v2446 = vadd.f32 0.0, %v2445
  %2447 = vdwg.mxu0
  %2448 = vmatprep.subr.mxu0 %v50
  %2449 = vmatpush1.msra.mxu0 %v49
  %2450 = vmatprep.subr.mxu0 %v54
  %2451 = vmatpush1.msra.mxu0 %v53
  %2452 = vmatprep.subr.mxu0 %v58
  %2453 = vmatpush1.msra.mxu0 %v57
  %2454 = vmatprep.subr.mxu0 %v62
  %2455 = vmatpush1.msra.mxu0 %v61
  %2456 = vmatprep.subr.mxu0 %v66
  %2457 = vmatpush1.msra.mxu0 %v65
  %2458 = vmatprep.subr.mxu0 %v70
  %2459 = vmatpush1.msra.mxu0 %v69
  %2460 = vmatprep.subr.mxu0 %v74
  %2461 = vmatpush1.msra.mxu0 %v73
  %2462 = vmatprep.subr.mxu0 %v78
  %2463 = vmatpush1.msra.mxu0 %v77
  %2464 = vmatprep.subr.mxu0 %v82
  %2465 = vmatpush1.msra.mxu0 %v81
  %2466 = vmatprep.subr.mxu0 %v86
  %2467 = vmatpush1.msra.mxu0 %v85
  %2468 = vmatprep.subr.mxu0 %v90
  %2469 = vmatpush1.msra.mxu0 %v89
  %2470 = vmatprep.subr.mxu0 %v94
  %2471 = vmatpush1.msra.mxu0 %v93
  %2472 = vmatprep.subr.mxu0 %v98
  %2473 = vmatpush1.msra.mxu0 %v97
  %2474 = vmatprep.subr.mxu0 %v102
  %2475 = vmatpush1.msra.mxu0 %v101
  %2476 = vmatprep.subr.mxu0 %v106
  %2477 = vmatpush1.msra.mxu0 %v105
  %2478 = vmatprep.subr.mxu0 %v110
  %2479 = vmatpush1.msra.mxu0 %v109
  %2480 = vmatprep.subr.mxu0 0.0
  %2481 = vmatpush1.msra.mxu0 0.0
  %2482 = vmatprep.subr.mxu0 0.0
  %2483 = vmatpush1.msra.mxu0 0.0
  %2484 = vmatprep.subr.mxu0 0.0
  %2485 = vmatpush1.msra.mxu0 0.0
  %2486 = vmatprep.subr.mxu0 0.0
  %2487 = vmatpush1.msra.mxu0 0.0
  %2488 = vmatprep.subr.mxu0 0.0
  %2489 = vmatpush1.msra.mxu0 0.0
  %2490 = vmatprep.subr.mxu0 0.0
  %2491 = vmatpush1.msra.mxu0 0.0
  %2492 = vmatprep.subr.mxu0 0.0
  %2493 = vmatpush1.msra.mxu0 0.0
  %2494 = vmatprep.subr.mxu0 0.0
  %2495 = vmatpush1.msra.mxu0 0.0
  %2496 = vmatprep.subr.mxu0 0.0
  %2497 = vmatpush1.msra.mxu0 0.0
  %2498 = vmatprep.subr.mxu0 0.0
  %2499 = vmatpush1.msra.mxu0 0.0
  %2500 = vmatprep.subr.mxu0 0.0
  %2501 = vmatpush1.msra.mxu0 0.0
  %2502 = vmatprep.subr.mxu0 0.0
  %2503 = vmatpush1.msra.mxu0 0.0
  %2504 = vmatprep.subr.mxu0 0.0
  %2505 = vmatpush1.msra.mxu0 0.0
  %2506 = vmatprep.subr.mxu0 0.0
  %2507 = vmatpush1.msra.mxu0 0.0
  %2508 = vmatprep.subr.mxu0 0.0
  %2509 = vmatpush1.msra.mxu0 0.0
  %2510 = vmatprep.subr.mxu0 0.0
  %2511 = vmatpush1.msra.mxu0 0.0
  %2512 = vmatprep.mubr.f32.mxu0 0.0
  %2513 = vmatmul.mubr.f32.gmra.mrb[0].mxu0 %v2376
  %v2514 = vpop.f32.mrb[0].mxu0
  %v2515 = vadd.f32 0.0, %v2514
  %v2516 = vpop.f32.mrb[0].mxu0
  %v2517 = vadd.f32 0.0, %v2516
  %2518 = vdwg.mxu0
  %v2519 = vadd.f32 %v28, %v2444
  %v2520 = vadd.f32 %v32, %v2446
  %v2521 = vadd.f32 %v36, %v2515
  %v2522 = vadd.f32 %v40, %v2517
  %v2523 = vld [vmem:[%s0 + $0x38] sm:$0xff]
  %v2525 = vsel %vm274, %v2523, 0
  %2527 = vmatprep.subr.mxu0 %v259
  %2528 = vmatpush1.msra.mxu0 %v258
  %2529 = vmatprep.subr.mxu0 %v263
  %2530 = vmatpush1.msra.mxu0 %v262
  %2531 = vmatprep.subr.mxu0 %v267
  %2532 = vmatpush1.msra.mxu0 %v266
  %2533 = vmatprep.subr.mxu0 %v271
  %2534 = vmatpush1.msra.mxu0 %v270
  %2535 = vmatprep.subr.mxu0 0.0
  %2536 = vmatpush1.msra.mxu0 0.0
  %2537 = vmatprep.subr.mxu0 0.0
  %2538 = vmatpush1.msra.mxu0 0.0
  %2539 = vmatprep.subr.mxu0 0.0
  %2540 = vmatpush1.msra.mxu0 0.0
  %2541 = vmatprep.subr.mxu0 0.0
  %2542 = vmatpush1.msra.mxu0 0.0
  %2543 = vmatprep.subr.mxu0 0.0
  %2544 = vmatpush1.msra.mxu0 0.0
  %2545 = vmatprep.subr.mxu0 0.0
  %2546 = vmatpush1.msra.mxu0 0.0
  %2547 = vmatprep.subr.mxu0 0.0
  %2548 = vmatpush1.msra.mxu0 0.0
  %2549 = vmatprep.subr.mxu0 0.0
  %2550 = vmatpush1.msra.mxu0 0.0
  %2551 = vmatprep.subr.mxu0 0.0
  %2552 = vmatpush1.msra.mxu0 0.0
  %2553 = vmatprep.subr.mxu0 0.0
  %2554 = vmatpush1.msra.mxu0 0.0
  %2555 = vmatprep.subr.mxu0 0.0
  %2556 = vmatpush1.msra.mxu0 0.0
  %2557 = vmatprep.subr.mxu0 0.0
  %2558 = vmatpush1.msra.mxu0 0.0
  %2559 = vmatprep.subr.mxu0 0.0
  %2560 = vmatpush1.msra.mxu0 0.0
  %2561 = vmatprep.subr.mxu0 0.0
  %2562 = vmatpush1.msra.mxu0 0.0
  %2563 = vmatprep.subr.mxu0 0.0
  %2564 = vmatpush1.msra.mxu0 0.0
  %2565 = vmatprep.subr.mxu0 0.0
  %2566 = vmatpush1.msra.mxu0 0.0
  %2567 = vmatprep.subr.mxu0 0.0
  %2568 = vmatpush1.msra.mxu0 0.0
  %2569 = vmatprep.subr.mxu0 0.0
  %2570 = vmatpush1.msra.mxu0 0.0
  %2571 = vmatprep.subr.mxu0 0.0
  %2572 = vmatpush1.msra.mxu0 0.0
  %2573 = vmatprep.subr.mxu0 0.0
  %2574 = vmatpush1.msra.mxu0 0.0
  %2575 = vmatprep.subr.mxu0 0.0
  %2576 = vmatpush1.msra.mxu0 0.0
  %2577 = vmatprep.subr.mxu0 0.0
  %2578 = vmatpush1.msra.mxu0 0.0
  %2579 = vmatprep.subr.mxu0 0.0
  %2580 = vmatpush1.msra.mxu0 0.0
  %2581 = vmatprep.subr.mxu0 0.0
  %2582 = vmatpush1.msra.mxu0 0.0
  %2583 = vmatprep.subr.mxu0 0.0
  %2584 = vmatpush1.msra.mxu0 0.0
  %2585 = vmatprep.subr.mxu0 0.0
  %2586 = vmatpush1.msra.mxu0 0.0
  %2587 = vmatprep.subr.mxu0 0.0
  %2588 = vmatpush1.msra.mxu0 0.0
  %2589 = vmatprep.subr.mxu0 0.0
  %2590 = vmatpush1.msra.mxu0 0.0
  %2591 = vmatprep.mubr.f32.mxu0 0.0
  %2592 = vmatmul.mubr.f32.gmra.mrb[0].mxu0 %v2525
  %v2593 = vpop.f32.mrb[0].mxu0
  %v2594 = vadd.f32 0.0, %v2593
  %v2595 = vpop.f32.mrb[0].mxu0
  %v2596 = vadd.f32 0.0, %v2595
  %2597 = vdwg.mxu0
  %2598 = vmatprep.subr.mxu0 %v261
  %2599 = vmatpush1.msra.mxu0 %v260
  %2600 = vmatprep.subr.mxu0 %v265
  %2601 = vmatpush1.msra.mxu0 %v264
  %2602 = vmatprep.subr.mxu0 %v269
  %2603 = vmatpush1.msra.mxu0 %v268
  %2604 = vmatprep.subr.mxu0 %v273
  %2605 = vmatpush1.msra.mxu0 %v272
  %2606 = vmatprep.subr.mxu0 0.0
  %2607 = vmatpush1.msra.mxu0 0.0
  %2608 = vmatprep.subr.mxu0 0.0
  %2609 = vmatpush1.msra.mxu0 0.0
  %2610 = vmatprep.subr.mxu0 0.0
  %2611 = vmatpush1.msra.mxu0 0.0
  %2612 = vmatprep.subr.mxu0 0.0
  %2613 = vmatpush1.msra.mxu0 0.0
  %2614 = vmatprep.subr.mxu0 0.0
  %2615 = vmatpush1.msra.mxu0 0.0
  %2616 = vmatprep.subr.mxu0 0.0
  %2617 = vmatpush1.msra.mxu0 0.0
  %2618 = vmatprep.subr.mxu0 0.0
  %2619 = vmatpush1.msra.mxu0 0.0
  %2620 = vmatprep.subr.mxu0 0.0
  %2621 = vmatpush1.msra.mxu0 0.0
  %2622 = vmatprep.subr.mxu0 0.0
  %2623 = vmatpush1.msra.mxu0 0.0
  %2624 = vmatprep.subr.mxu0 0.0
  %2625 = vmatpush1.msra.mxu0 0.0
  %2626 = vmatprep.subr.mxu0 0.0
  %2627 = vmatpush1.msra.mxu0 0.0
  %2628 = vmatprep.subr.mxu0 0.0
  %2629 = vmatpush1.msra.mxu0 0.0
  %2630 = vmatprep.subr.mxu0 0.0
  %2631 = vmatpush1.msra.mxu0 0.0
  %2632 = vmatprep.subr.mxu0 0.0
  %2633 = vmatpush1.msra.mxu0 0.0
  %2634 = vmatprep.subr.mxu0 0.0
  %2635 = vmatpush1.msra.mxu0 0.0
  %2636 = vmatprep.subr.mxu0 0.0
  %2637 = vmatpush1.msra.mxu0 0.0
  %2638 = vmatprep.subr.mxu0 0.0
  %2639 = vmatpush1.msra.mxu0 0.0
  %2640 = vmatprep.subr.mxu0 0.0
  %2641 = vmatpush1.msra.mxu0 0.0
  %2642 = vmatprep.subr.mxu0 0.0
  %2643 = vmatpush1.msra.mxu0 0.0
  %2644 = vmatprep.subr.mxu0 0.0
  %2645 = vmatpush1.msra.mxu0 0.0
  %2646 = vmatprep.subr.mxu0 0.0
  %2647 = vmatpush1.msra.mxu0 0.0
  %2648 = vmatprep.subr.mxu0 0.0
  %2649 = vmatpush1.msra.mxu0 0.0
  %2650 = vmatprep.subr.mxu0 0.0
  %2651 = vmatpush1.msra.mxu0 0.0
  %2652 = vmatprep.subr.mxu0 0.0
  %2653 = vmatpush1.msra.mxu0 0.0
  %2654 = vmatprep.subr.mxu0 0.0
  %2655 = vmatpush1.msra.mxu0 0.0
  %2656 = vmatprep.subr.mxu0 0.0
  %2657 = vmatpush1.msra.mxu0 0.0
  %2658 = vmatprep.subr.mxu0 0.0
  %2659 = vmatpush1.msra.mxu0 0.0
  %2660 = vmatprep.subr.mxu0 0.0
  %2661 = vmatpush1.msra.mxu0 0.0
  %2662 = vmatprep.mubr.f32.mxu0 0.0
  %2663 = vmatmul.mubr.f32.gmra.mrb[0].mxu0 %v2525
  %v2664 = vpop.f32.mrb[0].mxu0
  %v2665 = vadd.f32 0.0, %v2664
  %v2666 = vpop.f32.mrb[0].mxu0
  %v2667 = vadd.f32 0.0, %v2666
  %2668 = vdwg.mxu0
  %v2669 = vadd.f32 %v2519, %v2594
  %v2670 = vadd.f32 %v2520, %v2596
  %v2671 = vadd.f32 %v2521, %v2665
  %v2672 = vadd.f32 %v2522, %v2667
  %v2673 = vxor.u32 %v2669, 2147483648
  %v2674 = vxor.u32 %v2670, 2147483648
  %v2675 = vmul.f32 %v2673, 1.442695
  %v2676 = vpow.pop %v2675
  %v2677 = vmul.f32 %v2674, 1.442695
  %v2678 = vpow.pop %v2677
  %v2679 = vadd.f32 %v2676, 1.0
  %v2680 = vadd.f32 %v2678, 1.0
  %v2681 = vrcp.pop %v2679
  %v2682 = vmul.f32 1.0, %v2681
  %v2683 = vrcp.pop %v2680
  %v2684 = vmul.f32 1.0, %v2683
  %v2685 = vxor.u32 %v2672, 2147483648
  %v2686 = vmul.f32 %v2685, 1.442695
  %v2687 = vpow.pop %v2686
  %v2688 = vadd.f32 %v2687, 1.0
  %v2689 = vrcp.pop %v2688
  %v2690 = vmul.f32 1.0, %v2689
  %v2691 = vtanh.pop %v2671
  %v2692 = vmul.f32 %v2684, %v2374
  %v2693 = vmul.f32 %v2682, %v2691
  %v2694 = vadd.f32 %v2692, %v2693
  %v2695 = vtanh.pop %v2694
  %v2696 = vmul.f32 %v2690, %v2695
  %2697 = vmatprep.subr.mxu0 %v48
  %2698 = vmatpush1.msra.mxu0 %v47
  %2699 = vmatprep.subr.mxu0 %v52
  %2700 = vmatpush1.msra.mxu0 %v51
  %2701 = vmatprep.subr.mxu0 %v56
  %2702 = vmatpush1.msra.mxu0 %v55
  %2703 = vmatprep.subr.mxu0 %v60
  %2704 = vmatpush1.msra.mxu0 %v59
  %2705 = vmatprep.subr.mxu0 %v64
  %2706 = vmatpush1.msra.mxu0 %v63
  %2707 = vmatprep.subr.mxu0 %v68
  %2708 = vmatpush1.msra.mxu0 %v67
  %2709 = vmatprep.subr.mxu0 %v72
  %2710 = vmatpush1.msra.mxu0 %v71
  %2711 = vmatprep.subr.mxu0 %v76
  %2712 = vmatpush1.msra.mxu0 %v75
  %2713 = vmatprep.subr.mxu0 %v80
  %2714 = vmatpush1.msra.mxu0 %v79
  %2715 = vmatprep.subr.mxu0 %v84
  %2716 = vmatpush1.msra.mxu0 %v83
  %2717 = vmatprep.subr.mxu0 %v88
  %2718 = vmatpush1.msra.mxu0 %v87
  %2719 = vmatprep.subr.mxu0 %v92
  %2720 = vmatpush1.msra.mxu0 %v91
  %2721 = vmatprep.subr.mxu0 %v96
  %2722 = vmatpush1.msra.mxu0 %v95
  %2723 = vmatprep.subr.mxu0 %v100
  %2724 = vmatpush1.msra.mxu0 %v99
  %2725 = vmatprep.subr.mxu0 %v104
  %2726 = vmatpush1.msra.mxu0 %v103
  %2727 = vmatprep.subr.mxu0 %v108
  %2728 = vmatpush1.msra.mxu0 %v107
  %2729 = vmatprep.subr.mxu0 0.0
  %2730 = vmatpush1.msra.mxu0 0.0
  %2731 = vmatprep.subr.mxu0 0.0
  %2732 = vmatpush1.msra.mxu0 0.0
  %2733 = vmatprep.subr.mxu0 0.0
  %2734 = vmatpush1.msra.mxu0 0.0
  %2735 = vmatprep.subr.mxu0 0.0
  %2736 = vmatpush1.msra.mxu0 0.0
  %2737 = vmatprep.subr.mxu0 0.0
  %2738 = vmatpush1.msra.mxu0 0.0
  %2739 = vmatprep.subr.mxu0 0.0
  %2740 = vmatpush1.msra.mxu0 0.0
  %2741 = vmatprep.subr.mxu0 0.0
  %2742 = vmatpush1.msra.mxu0 0.0
  %2743 = vmatprep.subr.mxu0 0.0
  %2744 = vmatpush1.msra.mxu0 0.0
  %2745 = vmatprep.subr.mxu0 0.0
  %2746 = vmatpush1.msra.mxu0 0.0
  %2747 = vmatprep.subr.mxu0 0.0
  %2748 = vmatpush1.msra.mxu0 0.0
  %2749 = vmatprep.subr.mxu0 0.0
  %2750 = vmatpush1.msra.mxu0 0.0
  %2751 = vmatprep.subr.mxu0 0.0
  %2752 = vmatpush1.msra.mxu0 0.0
  %2753 = vmatprep.subr.mxu0 0.0
  %2754 = vmatpush1.msra.mxu0 0.0
  %2755 = vmatprep.subr.mxu0 0.0
  %2756 = vmatpush1.msra.mxu0 0.0
  %2757 = vmatprep.subr.mxu0 0.0
  %2758 = vmatpush1.msra.mxu0 0.0
  %2759 = vmatprep.subr.mxu0 0.0
  %2760 = vmatpush1.msra.mxu0 0.0
  %2761 = vmatprep.mubr.f32.mxu0 0.0
  %2762 = vmatmul.mubr.f32.gmra.mrb[0].mxu0 %v2696
  %v2763 = vpop.f32.mrb[0].mxu0
  %v2764 = vadd.f32 0.0, %v2763
  %v2765 = vpop.f32.mrb[0].mxu0
  %v2766 = vadd.f32 0.0, %v2765
  %2767 = vdwg.mxu0
  %2768 = vmatprep.subr.mxu0 %v50
  %2769 = vmatpush1.msra.mxu0 %v49
  %2770 = vmatprep.subr.mxu0 %v54
  %2771 = vmatpush1.msra.mxu0 %v53
  %2772 = vmatprep.subr.mxu0 %v58
  %2773 = vmatpush1.msra.mxu0 %v57
  %2774 = vmatprep.subr.mxu0 %v62
  %2775 = vmatpush1.msra.mxu0 %v61
  %2776 = vmatprep.subr.mxu0 %v66
  %2777 = vmatpush1.msra.mxu0 %v65
  %2778 = vmatprep.subr.mxu0 %v70
  %2779 = vmatpush1.msra.mxu0 %v69
  %2780 = vmatprep.subr.mxu0 %v74
  %2781 = vmatpush1.msra.mxu0 %v73
  %2782 = vmatprep.subr.mxu0 %v78
  %2783 = vmatpush1.msra.mxu0 %v77
  %2784 = vmatprep.subr.mxu0 %v82
  %2785 = vmatpush1.msra.mxu0 %v81
  %2786 = vmatprep.subr.mxu0 %v86
  %2787 = vmatpush1.msra.mxu0 %v85
  %2788 = vmatprep.subr.mxu0 %v90
  %2789 = vmatpush1.msra.mxu0 %v89
  %2790 = vmatprep.subr.mxu0 %v94
  %2791 = vmatpush1.msra.mxu0 %v93
  %2792 = vmatprep.subr.mxu0 %v98
  %2793 = vmatpush1.msra.mxu0 %v97
  %2794 = vmatprep.subr.mxu0 %v102
  %2795 = vmatpush1.msra.mxu0 %v101
  %2796 = vmatprep.subr.mxu0 %v106
  %2797 = vmatpush1.msra.mxu0 %v105
  %2798 = vmatprep.subr.mxu0 %v110
  %2799 = vmatpush1.msra.mxu0 %v109
  %2800 = vmatprep.subr.mxu0 0.0
  %2801 = vmatpush1.msra.mxu0 0.0
  %2802 = vmatprep.subr.mxu0 0.0
  %2803 = vmatpush1.msra.mxu0 0.0
  %2804 = vmatprep.subr.mxu0 0.0
  %2805 = vmatpush1.msra.mxu0 0.0
  %2806 = vmatprep.subr.mxu0 0.0
  %2807 = vmatpush1.msra.mxu0 0.0
  %2808 = vmatprep.subr.mxu0 0.0
  %2809 = vmatpush1.msra.mxu0 0.0
  %2810 = vmatprep.subr.mxu0 0.0
  %2811 = vmatpush1.msra.mxu0 0.0
  %2812 = vmatprep.subr.mxu0 0.0
  %2813 = vmatpush1.msra.mxu0 0.0
  %2814 = vmatprep.subr.mxu0 0.0
  %2815 = vmatpush1.msra.mxu0 0.0
  %2816 = vmatprep.subr.mxu0 0.0
  %2817 = vmatpush1.msra.mxu0 0.0
  %2818 = vmatprep.subr.mxu0 0.0
  %2819 = vmatpush1.msra.mxu0 0.0
  %2820 = vmatprep.subr.mxu0 0.0
  %2821 = vmatpush1.msra.mxu0 0.0
  %2822 = vmatprep.subr.mxu0 0.0
  %2823 = vmatpush1.msra.mxu0 0.0
  %2824 = vmatprep.subr.mxu0 0.0
  %2825 = vmatpush1.msra.mxu0 0.0
  %2826 = vmatprep.subr.mxu0 0.0
  %2827 = vmatpush1.msra.mxu0 0.0
  %2828 = vmatprep.subr.mxu0 0.0
  %2829 = vmatpush1.msra.mxu0 0.0
  %2830 = vmatprep.subr.mxu0 0.0
  %2831 = vmatpush1.msra.mxu0 0.0
  %2832 = vmatprep.mubr.f32.mxu0 0.0
  %2833 = vmatmul.mubr.f32.gmra.mrb[0].mxu0 %v2696
  %v2834 = vpop.f32.mrb[0].mxu0
  %v2835 = vadd.f32 0.0, %v2834
  %v2836 = vpop.f32.mrb[0].mxu0
  %v2837 = vadd.f32 0.0, %v2836
  %2838 = vdwg.mxu0
  %v2839 = vadd.f32 %v28, %v2764
  %v2840 = vadd.f32 %v32, %v2766
  %v2841 = vadd.f32 %v36, %v2835
  %v2842 = vadd.f32 %v40, %v2837
  %v2843 = vxor.u32 %v2839, 2147483648
  %v2844 = vxor.u32 %v2840, 2147483648
  %v2845 = vmul.f32 %v2843, 1.442695
  %v2846 = vpow.pop %v2845
  %v2847 = vmul.f32 %v2844, 1.442695
  %v2848 = vpow.pop %v2847
  %v2849 = vadd.f32 %v2846, 1.0
  %v2850 = vadd.f32 %v2848, 1.0
  %v2851 = vrcp.pop %v2849
  %v2852 = vmul.f32 1.0, %v2851
  %v2853 = vrcp.pop %v2850
  %v2854 = vmul.f32 1.0, %v2853
  %v2855 = vxor.u32 %v2842, 2147483648
  %v2856 = vmul.f32 %v2855, 1.442695
  %v2857 = vpow.pop %v2856
  %v2858 = vadd.f32 %v2857, 1.0
  %v2859 = vrcp.pop %v2858
  %v2860 = vmul.f32 1.0, %v2859
  %v2861 = vtanh.pop %v2841
  %v2862 = vmul.f32 %v2854, %v2694
  %v2863 = vmul.f32 %v2852, %v2861
  %v2864 = vadd.f32 %v2862, %v2863
  %v2865 = vtanh.pop %v2864
  %v2866 = vmul.f32 %v2860, %v2865
  %vm2867 = vcmp.ge.s32.totalorder %v46, 32
  %v2868 = vsel %vm2867, %v2864, %v2694
  %v2869 = vsel %vm2867, %v2866, %v2696
  %2870 = vmatprep.subr.mxu0 %v48
  %2871 = vmatpush1.msra.mxu0 %v47
  %2872 = vmatprep.subr.mxu0 %v52
  %2873 = vmatpush1.msra.mxu0 %v51
  %2874 = vmatprep.subr.mxu0 %v56
  %2875 = vmatpush1.msra.mxu0 %v55
  %2876 = vmatprep.subr.mxu0 %v60
  %2877 = vmatpush1.msra.mxu0 %v59
  %2878 = vmatprep.subr.mxu0 %v64
  %2879 = vmatpush1.msra.mxu0 %v63
  %2880 = vmatprep.subr.mxu0 %v68
  %2881 = vmatpush1.msra.mxu0 %v67
  %2882 = vmatprep.subr.mxu0 %v72
  %2883 = vmatpush1.msra.mxu0 %v71
  %2884 = vmatprep.subr.mxu0 %v76
  %2885 = vmatpush1.msra.mxu0 %v75
  %2886 = vmatprep.subr.mxu0 %v80
  %2887 = vmatpush1.msra.mxu0 %v79
  %2888 = vmatprep.subr.mxu0 %v84
  %2889 = vmatpush1.msra.mxu0 %v83
  %2890 = vmatprep.subr.mxu0 %v88
  %2891 = vmatpush1.msra.mxu0 %v87
  %2892 = vmatprep.subr.mxu0 %v92
  %2893 = vmatpush1.msra.mxu0 %v91
  %2894 = vmatprep.subr.mxu0 %v96
  %2895 = vmatpush1.msra.mxu0 %v95
  %2896 = vmatprep.subr.mxu0 %v100
  %2897 = vmatpush1.msra.mxu0 %v99
  %2898 = vmatprep.subr.mxu0 %v104
  %2899 = vmatpush1.msra.mxu0 %v103
  %2900 = vmatprep.subr.mxu0 %v108
  %2901 = vmatpush1.msra.mxu0 %v107
  %2902 = vmatprep.subr.mxu0 0.0
  %2903 = vmatpush1.msra.mxu0 0.0
  %2904 = vmatprep.subr.mxu0 0.0
  %2905 = vmatpush1.msra.mxu0 0.0
  %2906 = vmatprep.subr.mxu0 0.0
  %2907 = vmatpush1.msra.mxu0 0.0
  %2908 = vmatprep.subr.mxu0 0.0
  %2909 = vmatpush1.msra.mxu0 0.0
  %2910 = vmatprep.subr.mxu0 0.0
  %2911 = vmatpush1.msra.mxu0 0.0
  %2912 = vmatprep.subr.mxu0 0.0
  %2913 = vmatpush1.msra.mxu0 0.0
  %2914 = vmatprep.subr.mxu0 0.0
  %2915 = vmatpush1.msra.mxu0 0.0
  %2916 = vmatprep.subr.mxu0 0.0
  %2917 = vmatpush1.msra.mxu0 0.0
  %2918 = vmatprep.subr.mxu0 0.0
  %2919 = vmatpush1.msra.mxu0 0.0
  %2920 = vmatprep.subr.mxu0 0.0
  %2921 = vmatpush1.msra.mxu0 0.0
  %2922 = vmatprep.subr.mxu0 0.0
  %2923 = vmatpush1.msra.mxu0 0.0
  %2924 = vmatprep.subr.mxu0 0.0
  %2925 = vmatpush1.msra.mxu0 0.0
  %2926 = vmatprep.subr.mxu0 0.0
  %2927 = vmatpush1.msra.mxu0 0.0
  %2928 = vmatprep.subr.mxu0 0.0
  %2929 = vmatpush1.msra.mxu0 0.0
  %2930 = vmatprep.subr.mxu0 0.0
  %2931 = vmatpush1.msra.mxu0 0.0
  %2932 = vmatprep.subr.mxu0 0.0
  %2933 = vmatpush1.msra.mxu0 0.0
  %2934 = vmatprep.mubr.f32.mxu0 0.0
  %2935 = vmatmul.mubr.f32.gmra.mrb[0].mxu0 %v2869
  %v2936 = vpop.f32.mrb[0].mxu0
  %v2937 = vadd.f32 0.0, %v2936
  %v2938 = vpop.f32.mrb[0].mxu0
  %v2939 = vadd.f32 0.0, %v2938
  %2940 = vdwg.mxu0
  %2941 = vmatprep.subr.mxu0 %v50
  %2942 = vmatpush1.msra.mxu0 %v49
  %2943 = vmatprep.subr.mxu0 %v54
  %2944 = vmatpush1.msra.mxu0 %v53
  %2945 = vmatprep.subr.mxu0 %v58
  %2946 = vmatpush1.msra.mxu0 %v57
  %2947 = vmatprep.subr.mxu0 %v62
  %2948 = vmatpush1.msra.mxu0 %v61
  %2949 = vmatprep.subr.mxu0 %v66
  %2950 = vmatpush1.msra.mxu0 %v65
  %2951 = vmatprep.subr.mxu0 %v70
  %2952 = vmatpush1.msra.mxu0 %v69
  %2953 = vmatprep.subr.mxu0 %v74
  %2954 = vmatpush1.msra.mxu0 %v73
  %2955 = vmatprep.subr.mxu0 %v78
  %2956 = vmatpush1.msra.mxu0 %v77
  %2957 = vmatprep.subr.mxu0 %v82
  %2958 = vmatpush1.msra.mxu0 %v81
  %2959 = vmatprep.subr.mxu0 %v86
  %2960 = vmatpush1.msra.mxu0 %v85
  %2961 = vmatprep.subr.mxu0 %v90
  %2962 = vmatpush1.msra.mxu0 %v89
  %2963 = vmatprep.subr.mxu0 %v94
  %2964 = vmatpush1.msra.mxu0 %v93
  %2965 = vmatprep.subr.mxu0 %v98
  %2966 = vmatpush1.msra.mxu0 %v97
  %2967 = vmatprep.subr.mxu0 %v102
  %2968 = vmatpush1.msra.mxu0 %v101
  %2969 = vmatprep.subr.mxu0 %v106
  %2970 = vmatpush1.msra.mxu0 %v105
  %2971 = vmatprep.subr.mxu0 %v110
  %2972 = vmatpush1.msra.mxu0 %v109
  %2973 = vmatprep.subr.mxu0 0.0
  %2974 = vmatpush1.msra.mxu0 0.0
  %2975 = vmatprep.subr.mxu0 0.0
  %2976 = vmatpush1.msra.mxu0 0.0
  %2977 = vmatprep.subr.mxu0 0.0
  %2978 = vmatpush1.msra.mxu0 0.0
  %2979 = vmatprep.subr.mxu0 0.0
  %2980 = vmatpush1.msra.mxu0 0.0
  %2981 = vmatprep.subr.mxu0 0.0
  %2982 = vmatpush1.msra.mxu0 0.0
  %2983 = vmatprep.subr.mxu0 0.0
  %2984 = vmatpush1.msra.mxu0 0.0
  %2985 = vmatprep.subr.mxu0 0.0
  %2986 = vmatpush1.msra.mxu0 0.0
  %2987 = vmatprep.subr.mxu0 0.0
  %2988 = vmatpush1.msra.mxu0 0.0
  %2989 = vmatprep.subr.mxu0 0.0
  %2990 = vmatpush1.msra.mxu0 0.0
  %2991 = vmatprep.subr.mxu0 0.0
  %2992 = vmatpush1.msra.mxu0 0.0
  %2993 = vmatprep.subr.mxu0 0.0
  %2994 = vmatpush1.msra.mxu0 0.0
  %2995 = vmatprep.subr.mxu0 0.0
  %2996 = vmatpush1.msra.mxu0 0.0
  %2997 = vmatprep.subr.mxu0 0.0
  %2998 = vmatpush1.msra.mxu0 0.0
  %2999 = vmatprep.subr.mxu0 0.0
  %3000 = vmatpush1.msra.mxu0 0.0
  %3001 = vmatprep.subr.mxu0 0.0
  %3002 = vmatpush1.msra.mxu0 0.0
  %3003 = vmatprep.subr.mxu0 0.0
  %3004 = vmatpush1.msra.mxu0 0.0
  %3005 = vmatprep.mubr.f32.mxu0 0.0
  %3006 = vmatmul.mubr.f32.gmra.mrb[0].mxu0 %v2869
  %v3007 = vpop.f32.mrb[0].mxu0
  %v3008 = vadd.f32 0.0, %v3007
  %v3009 = vpop.f32.mrb[0].mxu0
  %v3010 = vadd.f32 0.0, %v3009
  %3011 = vdwg.mxu0
  %v3012 = vadd.f32 %v28, %v2937
  %v3013 = vadd.f32 %v32, %v2939
  %v3014 = vadd.f32 %v36, %v3008
  %v3015 = vadd.f32 %v40, %v3010
  %v3016 = vxor.u32 %v3012, 2147483648
  %v3017 = vxor.u32 %v3013, 2147483648
  %v3018 = vmul.f32 %v3016, 1.442695
  %v3019 = vpow.pop %v3018
  %v3020 = vmul.f32 %v3017, 1.442695
  %v3021 = vpow.pop %v3020
  %v3022 = vadd.f32 %v3019, 1.0
  %v3023 = vadd.f32 %v3021, 1.0
  %v3024 = vrcp.pop %v3022
  %v3025 = vmul.f32 1.0, %v3024
  %v3026 = vrcp.pop %v3023
  %v3027 = vmul.f32 1.0, %v3026
  %v3028 = vxor.u32 %v3015, 2147483648
  %v3029 = vmul.f32 %v3028, 1.442695
  %v3030 = vpow.pop %v3029
  %v3031 = vadd.f32 %v3030, 1.0
  %v3032 = vrcp.pop %v3031
  %v3033 = vmul.f32 1.0, %v3032
  %v3034 = vtanh.pop %v3014
  %v3035 = vmul.f32 %v3027, %v2868
  %v3036 = vmul.f32 %v3025, %v3034
  %v3037 = vadd.f32 %v3035, %v3036
  %v3038 = vtanh.pop %v3037
  %v3039 = vmul.f32 %v3033, %v3038
  %vm3040 = vcmp.ge.s32.totalorder %v46, 64
  %v3041 = vsel %vm3040, %v3037, %v2868
  %v3042 = vsel %vm3040, %v3039, %v2869
  %3043 = vmatprep.subr.mxu0 %v48
  %3044 = vmatpush1.msra.mxu0 %v47
  %3045 = vmatprep.subr.mxu0 %v52
  %3046 = vmatpush1.msra.mxu0 %v51
  %3047 = vmatprep.subr.mxu0 %v56
  %3048 = vmatpush1.msra.mxu0 %v55
  %3049 = vmatprep.subr.mxu0 %v60
  %3050 = vmatpush1.msra.mxu0 %v59
  %3051 = vmatprep.subr.mxu0 %v64
  %3052 = vmatpush1.msra.mxu0 %v63
  %3053 = vmatprep.subr.mxu0 %v68
  %3054 = vmatpush1.msra.mxu0 %v67
  %3055 = vmatprep.subr.mxu0 %v72
  %3056 = vmatpush1.msra.mxu0 %v71
  %3057 = vmatprep.subr.mxu0 %v76
  %3058 = vmatpush1.msra.mxu0 %v75
  %3059 = vmatprep.subr.mxu0 %v80
  %3060 = vmatpush1.msra.mxu0 %v79
  %3061 = vmatprep.subr.mxu0 %v84
  %3062 = vmatpush1.msra.mxu0 %v83
  %3063 = vmatprep.subr.mxu0 %v88
  %3064 = vmatpush1.msra.mxu0 %v87
  %3065 = vmatprep.subr.mxu0 %v92
  %3066 = vmatpush1.msra.mxu0 %v91
  %3067 = vmatprep.subr.mxu0 %v96
  %3068 = vmatpush1.msra.mxu0 %v95
  %3069 = vmatprep.subr.mxu0 %v100
  %3070 = vmatpush1.msra.mxu0 %v99
  %3071 = vmatprep.subr.mxu0 %v104
  %3072 = vmatpush1.msra.mxu0 %v103
  %3073 = vmatprep.subr.mxu0 %v108
  %3074 = vmatpush1.msra.mxu0 %v107
  %3075 = vmatprep.subr.mxu0 0.0
  %3076 = vmatpush1.msra.mxu0 0.0
  %3077 = vmatprep.subr.mxu0 0.0
  %3078 = vmatpush1.msra.mxu0 0.0
  %3079 = vmatprep.subr.mxu0 0.0
  %3080 = vmatpush1.msra.mxu0 0.0
  %3081 = vmatprep.subr.mxu0 0.0
  %3082 = vmatpush1.msra.mxu0 0.0
  %3083 = vmatprep.subr.mxu0 0.0
  %3084 = vmatpush1.msra.mxu0 0.0
  %3085 = vmatprep.subr.mxu0 0.0
  %3086 = vmatpush1.msra.mxu0 0.0
  %3087 = vmatprep.subr.mxu0 0.0
  %3088 = vmatpush1.msra.mxu0 0.0
  %3089 = vmatprep.subr.mxu0 0.0
  %3090 = vmatpush1.msra.mxu0 0.0
  %3091 = vmatprep.subr.mxu0 0.0
  %3092 = vmatpush1.msra.mxu0 0.0
  %3093 = vmatprep.subr.mxu0 0.0
  %3094 = vmatpush1.msra.mxu0 0.0
  %3095 = vmatprep.subr.mxu0 0.0
  %3096 = vmatpush1.msra.mxu0 0.0
  %3097 = vmatprep.subr.mxu0 0.0
  %3098 = vmatpush1.msra.mxu0 0.0
  %3099 = vmatprep.subr.mxu0 0.0
  %3100 = vmatpush1.msra.mxu0 0.0
  %3101 = vmatprep.subr.mxu0 0.0
  %3102 = vmatpush1.msra.mxu0 0.0
  %3103 = vmatprep.subr.mxu0 0.0
  %3104 = vmatpush1.msra.mxu0 0.0
  %3105 = vmatprep.subr.mxu0 0.0
  %3106 = vmatpush1.msra.mxu0 0.0
  %3107 = vmatprep.mubr.f32.mxu0 0.0
  %3108 = vmatmul.mubr.f32.gmra.mrb[0].mxu0 %v3042
  %v3109 = vpop.f32.mrb[0].mxu0
  %v3110 = vadd.f32 0.0, %v3109
  %v3111 = vpop.f32.mrb[0].mxu0
  %v3112 = vadd.f32 0.0, %v3111
  %3113 = vdwg.mxu0
  %3114 = vmatprep.subr.mxu0 %v50
  %3115 = vmatpush1.msra.mxu0 %v49
  %3116 = vmatprep.subr.mxu0 %v54
  %3117 = vmatpush1.msra.mxu0 %v53
  %3118 = vmatprep.subr.mxu0 %v58
  %3119 = vmatpush1.msra.mxu0 %v57
  %3120 = vmatprep.subr.mxu0 %v62
  %3121 = vmatpush1.msra.mxu0 %v61
  %3122 = vmatprep.subr.mxu0 %v66
  %3123 = vmatpush1.msra.mxu0 %v65
  %3124 = vmatprep.subr.mxu0 %v70
  %3125 = vmatpush1.msra.mxu0 %v69
  %3126 = vmatprep.subr.mxu0 %v74
  %3127 = vmatpush1.msra.mxu0 %v73
  %3128 = vmatprep.subr.mxu0 %v78
  %3129 = vmatpush1.msra.mxu0 %v77
  %3130 = vmatprep.subr.mxu0 %v82
  %3131 = vmatpush1.msra.mxu0 %v81
  %3132 = vmatprep.subr.mxu0 %v86
  %3133 = vmatpush1.msra.mxu0 %v85
  %3134 = vmatprep.subr.mxu0 %v90
  %3135 = vmatpush1.msra.mxu0 %v89
  %3136 = vmatprep.subr.mxu0 %v94
  %3137 = vmatpush1.msra.mxu0 %v93
  %3138 = vmatprep.subr.mxu0 %v98
  %3139 = vmatpush1.msra.mxu0 %v97
  %3140 = vmatprep.subr.mxu0 %v102
  %3141 = vmatpush1.msra.mxu0 %v101
  %3142 = vmatprep.subr.mxu0 %v106
  %3143 = vmatpush1.msra.mxu0 %v105
  %3144 = vmatprep.subr.mxu0 %v110
  %3145 = vmatpush1.msra.mxu0 %v109
  %3146 = vmatprep.subr.mxu0 0.0
  %3147 = vmatpush1.msra.mxu0 0.0
  %3148 = vmatprep.subr.mxu0 0.0
  %3149 = vmatpush1.msra.mxu0 0.0
  %3150 = vmatprep.subr.mxu0 0.0
  %3151 = vmatpush1.msra.mxu0 0.0
  %3152 = vmatprep.subr.mxu0 0.0
  %3153 = vmatpush1.msra.mxu0 0.0
  %3154 = vmatprep.subr.mxu0 0.0
  %3155 = vmatpush1.msra.mxu0 0.0
  %3156 = vmatprep.subr.mxu0 0.0
  %3157 = vmatpush1.msra.mxu0 0.0
  %3158 = vmatprep.subr.mxu0 0.0
  %3159 = vmatpush1.msra.mxu0 0.0
  %3160 = vmatprep.subr.mxu0 0.0
  %3161 = vmatpush1.msra.mxu0 0.0
  %3162 = vmatprep.subr.mxu0 0.0
  %3163 = vmatpush1.msra.mxu0 0.0
  %3164 = vmatprep.subr.mxu0 0.0
  %3165 = vmatpush1.msra.mxu0 0.0
  %3166 = vmatprep.subr.mxu0 0.0
  %3167 = vmatpush1.msra.mxu0 0.0
  %3168 = vmatprep.subr.mxu0 0.0
  %3169 = vmatpush1.msra.mxu0 0.0
  %3170 = vmatprep.subr.mxu0 0.0
  %3171 = vmatpush1.msra.mxu0 0.0
  %3172 = vmatprep.subr.mxu0 0.0
  %3173 = vmatpush1.msra.mxu0 0.0
  %3174 = vmatprep.subr.mxu0 0.0
  %3175 = vmatpush1.msra.mxu0 0.0
  %3176 = vmatprep.subr.mxu0 0.0
  %3177 = vmatpush1.msra.mxu0 0.0
  %3178 = vmatprep.mubr.f32.mxu0 0.0
  %3179 = vmatmul.mubr.f32.gmra.mrb[0].mxu0 %v3042
  %v3180 = vpop.f32.mrb[0].mxu0
  %v3181 = vadd.f32 0.0, %v3180
  %v3182 = vpop.f32.mrb[0].mxu0
  %v3183 = vadd.f32 0.0, %v3182
  %3184 = vdwg.mxu0
  %v3185 = vadd.f32 %v28, %v3110
  %v3186 = vadd.f32 %v32, %v3112
  %v3187 = vadd.f32 %v36, %v3181
  %v3188 = vadd.f32 %v40, %v3183
  %v3189 = vxor.u32 %v3185, 2147483648
  %v3190 = vxor.u32 %v3186, 2147483648
  %v3191 = vmul.f32 %v3189, 1.442695
  %v3192 = vpow.pop %v3191
  %v3193 = vmul.f32 %v3190, 1.442695
  %v3194 = vpow.pop %v3193
  %v3195 = vadd.f32 %v3192, 1.0
  %v3196 = vadd.f32 %v3194, 1.0
  %v3197 = vrcp.pop %v3195
  %v3198 = vmul.f32 1.0, %v3197
  %v3199 = vrcp.pop %v3196
  %v3200 = vmul.f32 1.0, %v3199
  %v3201 = vxor.u32 %v3188, 2147483648
  %v3202 = vmul.f32 %v3201, 1.442695
  %v3203 = vpow.pop %v3202
  %v3204 = vadd.f32 %v3203, 1.0
  %v3205 = vrcp.pop %v3204
  %v3206 = vmul.f32 1.0, %v3205
  %v3207 = vtanh.pop %v3187
  %v3208 = vmul.f32 %v3200, %v3041
  %v3209 = vmul.f32 %v3198, %v3207
  %v3210 = vadd.f32 %v3208, %v3209
  %v3211 = vtanh.pop %v3210
  %v3212 = vmul.f32 %v3206, %v3211
  %vm3213 = vcmp.ge.s32.totalorder %v46, 96
  %v3214 = vsel %vm3213, %v3212, %v3042
  %v3215 = vld [vmem:[%s4] sm:$0xff]
  %v3216 = vld [vmem:[%s4 + $0x8] sm:$0xff]
  %v3217 = vld [vmem:[%s4 + $0x10] sm:$0xff]
  %v3218 = vld [vmem:[%s4 + $0x18] sm:$0xff]
  %v3219 = vld [vmem:[%s4 + $0x20] sm:$0xff]
  %v3220 = vld [vmem:[%s4 + $0x28] sm:$0xff]
  %v3221 = vld [vmem:[%s4 + $0x30] sm:$0xff]
  %v3222 = vld [vmem:[%s4 + $0x38] sm:$0xff]
  %v3223 = vld [vmem:[%s4 + $0x40] sm:$0xff]
  %v3224 = vld [vmem:[%s4 + $0x48] sm:$0xff]
  %v3225 = vld [vmem:[%s4 + $0x50] sm:$0xff]
  %v3226 = vld [vmem:[%s4 + $0x58] sm:$0xff]
  %v3227 = vld [vmem:[%s4 + $0x60] sm:$0xff]
  %v3228 = vld [vmem:[%s4 + $0x68] sm:$0xff]
  %v3229 = vld [vmem:[%s4 + $0x70] sm:$0xff]
  %v3230 = vld [vmem:[%s4 + $0x78] sm:$0xff]
  %v3231 = vld [vmem:[%s5] sm:$0x1]
  %v3233 = vlaneseq
  %v3234 = vshrl.u32 %v3233, 7
  %v3235 = vsub.s32 0, %v3234
  %v3236 = vrot.slane %v3231, %v3235
  %3238 = vmatprep.subr.mxu0 0.0
  %3239 = vmatpush1.msra.mxu0 %v3215
  %3240 = vmatprep.subr.mxu0 0.0
  %3241 = vmatpush1.msra.mxu0 %v3216
  %3242 = vmatprep.subr.mxu0 0.0
  %3243 = vmatpush1.msra.mxu0 %v3217
  %3244 = vmatprep.subr.mxu0 0.0
  %3245 = vmatpush1.msra.mxu0 %v3218
  %3246 = vmatprep.subr.mxu0 0.0
  %3247 = vmatpush1.msra.mxu0 %v3219
  %3248 = vmatprep.subr.mxu0 0.0
  %3249 = vmatpush1.msra.mxu0 %v3220
  %3250 = vmatprep.subr.mxu0 0.0
  %3251 = vmatpush1.msra.mxu0 %v3221
  %3252 = vmatprep.subr.mxu0 0.0
  %3253 = vmatpush1.msra.mxu0 %v3222
  %3254 = vmatprep.subr.mxu0 0.0
  %3255 = vmatpush1.msra.mxu0 %v3223
  %3256 = vmatprep.subr.mxu0 0.0
  %3257 = vmatpush1.msra.mxu0 %v3224
  %3258 = vmatprep.subr.mxu0 0.0
  %3259 = vmatpush1.msra.mxu0 %v3225
  %3260 = vmatprep.subr.mxu0 0.0
  %3261 = vmatpush1.msra.mxu0 %v3226
  %3262 = vmatprep.subr.mxu0 0.0
  %3263 = vmatpush1.msra.mxu0 %v3227
  %3264 = vmatprep.subr.mxu0 0.0
  %3265 = vmatpush1.msra.mxu0 %v3228
  %3266 = vmatprep.subr.mxu0 0.0
  %3267 = vmatpush1.msra.mxu0 %v3229
  %3268 = vmatprep.subr.mxu0 0.0
  %3269 = vmatpush1.msra.mxu0 %v3230
  %3270 = vmatprep.subr.mxu0 0.0
  %3271 = vmatpush1.msra.mxu0 0.0
  %3272 = vmatprep.subr.mxu0 0.0
  %3273 = vmatpush1.msra.mxu0 0.0
  %3274 = vmatprep.subr.mxu0 0.0
  %3275 = vmatpush1.msra.mxu0 0.0
  %3276 = vmatprep.subr.mxu0 0.0
  %3277 = vmatpush1.msra.mxu0 0.0
  %3278 = vmatprep.subr.mxu0 0.0
  %3279 = vmatpush1.msra.mxu0 0.0
  %3280 = vmatprep.subr.mxu0 0.0
  %3281 = vmatpush1.msra.mxu0 0.0
  %3282 = vmatprep.subr.mxu0 0.0
  %3283 = vmatpush1.msra.mxu0 0.0
  %3284 = vmatprep.subr.mxu0 0.0
  %3285 = vmatpush1.msra.mxu0 0.0
  %3286 = vmatprep.subr.mxu0 0.0
  %3287 = vmatpush1.msra.mxu0 0.0
  %3288 = vmatprep.subr.mxu0 0.0
  %3289 = vmatpush1.msra.mxu0 0.0
  %3290 = vmatprep.subr.mxu0 0.0
  %3291 = vmatpush1.msra.mxu0 0.0
  %3292 = vmatprep.subr.mxu0 0.0
  %3293 = vmatpush1.msra.mxu0 0.0
  %3294 = vmatprep.subr.mxu0 0.0
  %3295 = vmatpush1.msra.mxu0 0.0
  %3296 = vmatprep.subr.mxu0 0.0
  %3297 = vmatpush1.msra.mxu0 0.0
  %3298 = vmatprep.subr.mxu0 0.0
  %3299 = vmatpush1.msra.mxu0 0.0
  %3300 = vmatprep.subr.mxu0 0.0
  %3301 = vmatpush1.msra.mxu0 0.0
  %3302 = vmatprep.mubr.f32.mxu0 0.0
  %3303 = vmatmul.mubr.f32.gmra.mrb[0].mxu0 %v1416
  %v3304 = vpop.f32.mrb[0].mxu0
  %v3305 = vadd.f32 %v3236, %v3304
  %v3306 = vpop.f32.mrb[0].mxu0
  %3307 = vmatprep.mubr.f32.mxu0 0.0
  %3308 = vmatmul.mubr.f32.gmra.mrb[0].mxu0 %v1736
  %v3309 = vpop.f32.mrb[0].mxu0
  %v3310 = vadd.f32 %v3236, %v3309
  %v3311 = vpop.f32.mrb[0].mxu0
  %3312 = vmatprep.mubr.f32.mxu0 0.0
  %3313 = vmatmul.mubr.f32.gmra.mrb[0].mxu0 %v2056
  %v3314 = vpop.f32.mrb[0].mxu0
  %v3315 = vadd.f32 %v3236, %v3314
  %v3316 = vpop.f32.mrb[0].mxu0
  %3317 = vmatprep.mubr.f32.mxu0 0.0
  %3318 = vmatmul.mubr.f32.gmra.mrb[0].mxu0 %v2376
  %v3319 = vpop.f32.mrb[0].mxu0
  %v3320 = vadd.f32 %v3236, %v3319
  %v3321 = vpop.f32.mrb[0].mxu0
  %3322 = vmatprep.mubr.f32.mxu0 0.0
  %3323 = vmatmul.mubr.f32.gmra.mrb[0].mxu0 %v2696
  %v3324 = vpop.f32.mrb[0].mxu0
  %v3325 = vadd.f32 %v3236, %v3324
  %v3326 = vpop.f32.mrb[0].mxu0
  %3327 = vmatprep.mubr.f32.mxu0 0.0
  %3328 = vmatmul.mubr.f32.gmra.mrb[0].mxu0 %v2869
  %v3329 = vpop.f32.mrb[0].mxu0
  %v3330 = vadd.f32 %v3236, %v3329
  %v3331 = vpop.f32.mrb[0].mxu0
  %3332 = vmatprep.mubr.f32.mxu0 0.0
  %3333 = vmatmul.mubr.f32.gmra.mrb[0].mxu0 %v3042
  %v3334 = vpop.f32.mrb[0].mxu0
  %v3335 = vadd.f32 %v3236, %v3334
  %v3336 = vpop.f32.mrb[0].mxu0
  %3337 = vmatprep.mubr.f32.mxu0 0.0
  %3338 = vmatmul.mubr.f32.gmra.mrb[0].mxu0 %v3214
  %v3339 = vpop.f32.mrb[0].mxu0
  %v3340 = vadd.f32 %v3236, %v3339
  %v3341 = vpop.f32.mrb[0].mxu0
  %3342 = vdwg.mxu0
  %3343 = vst [vmem:[%s6] sm:$0xff] %v3305
  %3344 = vst [vmem:[%s6 + $0x8] sm:$0xff] %v3310
  %3345 = vst [vmem:[%s6 + $0x10] sm:$0xff] %v3315
  %3346 = vst [vmem:[%s6 + $0x18] sm:$0xff] %v3320
  %3347 = vst [vmem:[%s6 + $0x20] sm:$0xff] %v3325
  %3348 = vst [vmem:[%s6 + $0x28] sm:$0xff] %v3330
  %3349 = vst [vmem:[%s6 + $0x30] sm:$0xff] %v3335
  %3350 = vst [vmem:[%s6 + $0x38] sm:$0xff] %v3340
  // Predicated region
  $region26: #{model_lm_forward.1} parent=0 // pred_check
    _
  $region27: #{model_lm_forward.1} parent=0 // pred_check_branch
    %3352 = sbr.rel (0) target = $region29
  $region28: #{model_lm_forward.1} parent=0 // pred_region
    _
  $region29: #{model_lm_forward.1} parent=0 // pred_fallthru
    _
  // Predicated region
  $region30: #{model_lm_forward.1} parent=0 // pred_check
    _
  $region31: #{model_lm_forward.1} parent=0 // pred_check_branch
    %3354 = sbr.rel (0) target = $region33
  $region32: #{model_lm_forward.1} parent=0 // pred_region
    _
  $region33: #{model_lm_forward.1} parent=0 // pred_fallthru
    _

</llo_original>
